<compile_context>
chip_gen: v5e
topology: v5e:2x2
jax: 0.10.0
libtpu: 0.0.40
codegen_flags: <defaults>
</compile_context>

<pallas_src>
import functools

import jax
import jax.numpy as jnp
from jax.experimental import pallas as pl
from jax.experimental.pallas import tpu as pltpu  # noqa: F401

LSTM_DIM = 32      # consts.LSTM_DIM  (CNNLSTM feature_dim == hidden_dim for Actor)
AC_EMBED_DIM = 16  # consts.AC_EMBED_DIM


# ------------------------------------------------------------------
# Kernel A: conv1 (+ bias + ReLU + 2x2 maxpool), one MXU pass
# ------------------------------------------------------------------
def _conv1_kernel(a_ref, w_ref, b_ref, o_ref, *, mq):
    # a_ref: (4*mq, K) -- four pool-quadrant im2col matrices stacked on rows.
    y = jnp.dot(a_ref[...], w_ref[...], preferred_element_type=jnp.float32)
    z = jnp.maximum(jnp.maximum(y[0:mq], y[mq:2 * mq]),
                    jnp.maximum(y[2 * mq:3 * mq], y[3 * mq:4 * mq]))
    # max_q(relu(y_q + b)) == relu(max_q(y_q) + b)  (bias identical across quadrants)
    o_ref[...] = jnp.maximum(z + b_ref[...], 0.0)


# ------------------------------------------------------------------
# Kernel B: conv2 + conv3 + fc + LayerNorm + LSTM + actor head (fused)
# ------------------------------------------------------------------
def _tail_kernel(a2_ref, w2_ref, w3e_ref, wfc_ref, vec_ref, lstmw_ref, headw_ref,
                 h0_ref, c0_ref, out_ref, *, B, T, H, NE, eps):
    n_img = B * T
    m2 = 9 * n_img
    C = 32  # conv2 / conv3 channel width

    # ---- conv2: single MXU pass over the 4 stacked quadrants, row-block max ----
    y2 = jnp.dot(a2_ref[...], w2_ref[...], preferred_element_type=jnp.float32)
    z2 = jnp.maximum(jnp.maximum(y2[0:m2], y2[m2:2 * m2]),
                     jnp.maximum(y2[2 * m2:3 * m2], y2[3 * m2:4 * m2]))
    act2 = jnp.maximum(z2 + vec_ref[0:1, :], 0.0)           # (9*n_img, 32), rows = (i, j, n)

    # ---- conv3 (+ReLU+pool), fully VMEM-resident: flatten each image's 3x3x32
    # input via static row slices + one lane concat, one matmul against the
    # init-time scattered weight (4 output-position blocks on lanes), lane max.
    x3 = jnp.concatenate([act2[s * n_img:(s + 1) * n_img, :] for s in range(9)],
                         axis=-1)                           # (n_img, 288)
    y3 = jnp.dot(x3, w3e_ref[...], preferred_element_type=jnp.float32)   # (n_img, 128)
    z3 = jnp.maximum(jnp.maximum(y3[:, 0:C], y3[:, C:2 * C]),
                     jnp.maximum(y3[:, 2 * C:3 * C], y3[:, 3 * C:4 * C]))
    feat = jnp.maximum(z3 + vec_ref[1:2, :], 0.0)           # (n_img, 32), rows = t*B + b

    # ---- fc + LayerNorm ----
    feat = jnp.dot(feat, wfc_ref[...], preferred_element_type=jnp.float32) + vec_ref[2:3, :]
    mu = jnp.mean(feat, axis=-1, keepdims=True)
    xc = feat - mu
    var = jnp.mean(xc * xc, axis=-1, keepdims=True)
    feat = xc * jax.lax.rsqrt(var + eps) * vec_ref[3:4, :] + vec_ref[4:5, :]

    # ---- LSTM: all-timestep input projection in one matmul, unrolled recurrence ----
    xg = (jnp.dot(feat, lstmw_ref[0:H, :], preferred_element_type=jnp.float32)
          + lstmw_ref[2 * H:2 * H + 1, :])                  # (n_img, 4H), bias = b_ih + b_hh
    whh = lstmw_ref[H:2 * H, :]
    h = h0_ref[...]
    c = c0_ref[...]
    for t in range(T):   # small static T; switch to lax.fori_loop if T grows beyond ~16
        gates = xg[t * B:(t + 1) * B, :] + jnp.dot(h, whh, preferred_element_type=jnp.float32)
        sg = jax.nn.sigmoid(gates)                          # one EUP pass over all 4H lanes
        i_t = sg[:, 0:H]
        f_t = sg[:, H:2 * H]
        o_t = sg[:, 3 * H:4 * H]
        g_t = jnp.tanh(gates[:, 2 * H:3 * H])
        c = f_t * c + i_t * g_t
        h = o_t * jnp.tanh(c)

    # ---- actor head + single lane-dense packed output ----
    out = (jnp.dot(h, headw_ref[0:H, :], preferred_element_type=jnp.float32)
           + headw_ref[H:H + 1, :])                         # (B, 20)
    emb = out[:, 0:NE]
    mean = out[:, NE:NE + 2]
    hi = jnp.where(jax.lax.broadcasted_iota(jnp.int32, (B, 2), 1) == 0, 0.25, 1.0)
    std = jnp.exp(jnp.clip(out[:, NE + 2:NE + 4], -2.0, hi))
    pad = jnp.zeros((B, 128 - (NE + 4 + 2 * H)), jnp.float32)
    out_ref[...] = jnp.concatenate([emb, mean, std, h, c, pad], axis=-1)


# ------------------------------------------------------------------
# Glue: strided patch gather (stays in XLA between the two launches)
# ------------------------------------------------------------------
# TODO(synk): the 3x3/stride-2 patch gather is a multi-dim strided gather with no
# clean in-kernel Pallas equivalent at these layouts; it stays as thin XLA glue.
def _im2col_pool_quadrants(x):
    """3x3/stride-2/pad-1 conv patches, split by 2x2-maxpool quadrant.

    x: (N, H, W, C) NHWC -> (4, N, Ho//2, Wo//2, 9*C), tap-major lanes.
    """
    N, H, W, C = x.shape
    k, s, p = 3, 2, 1
    Ho = (H + 2 * p - k) // s + 1
    Wo = (W + 2 * p - k) // s + 1
    assert Ho % 2 == 0 and Wo % 2 == 0, "conv output must be even for pool fusion"
    xp = jnp.pad(x, ((0, 0), (p, p), (p, p), (0, 0)))
    cols = [xp[:, dy:dy + s * (Ho - 1) + 1:s, dx:dx + s * (Wo - 1) + 1:s, :]
            for dy in range(k) for dx in range(k)]
    patches = jnp.concatenate(cols, axis=-1)                # (N, Ho, Wo, 9C)
    return jnp.stack([patches[:, 0::2, 0::2], patches[:, 0::2, 1::2],
                      patches[:, 1::2, 0::2], patches[:, 1::2, 1::2]], axis=0)


# ------------------------------------------------------------------
# Wrappers
# ------------------------------------------------------------------
def conv1_pallas(x, w1p, b1):
    """x: (N, 48, 48, 3) NHWC -> pooled conv1 activation (N, 12, 12, 16)."""
    N = x.shape[0]
    quads = _im2col_pool_quadrants(x)                       # (4, N, 12, 12, 27)
    hp, wp = quads.shape[2], quads.shape[3]
    mq = N * hp * wp
    a = quads.reshape(4 * mq, quads.shape[-1])
    a = jnp.pad(a, ((0, 0), (0, w1p.shape[0] - a.shape[1])))   # K 27 -> 32 (weight padded at init)
    out = pl.pallas_call(
        functools.partial(_conv1_kernel, mq=mq),
        out_shape=jax.ShapeDtypeStruct((mq, w1p.shape[1]), jnp.float32),
    )(a, w1p, b1)
    return out.reshape(N, hp, wp, w1p.shape[1])


def tail_pallas(act1, pk, h0, c0, B, T):
    """act1: (T*B, 12, 12, 16) pooled conv1 output, image index time-major (t*B+b)."""
    n_img = act1.shape[0]
    assert act1.shape[1:3] == (12, 12), "fused conv3 path assumes a 3x3 pooled conv2 output"
    quads = _im2col_pool_quadrants(act1)                    # (4, n_img, 3, 3, 144)
    # rows (q; i, j, n) so per-spatial image blocks are contiguous inside the kernel
    a2 = quads.transpose(0, 2, 3, 1, 4).reshape(4 * 9 * n_img, quads.shape[-1])
    packed = pl.pallas_call(
        functools.partial(_tail_kernel, B=B, T=T, H=LSTM_DIM, NE=AC_EMBED_DIM, eps=1e-5),
        out_shape=jax.ShapeDtypeStruct((B, 128), jnp.float32),
    )(a2, pk["w2"], pk["w3e"], pk["wfc"], pk["vecs"], pk["lstmw"], pk["headw"], h0, c0)
    ne, H = AC_EMBED_DIM, LSTM_DIM
    emb = packed[:, :ne]
    mean = packed[:, ne:ne + 2]
    std = packed[:, ne + 2:ne + 4]
    hT = packed[:, ne + 4:ne + 4 + H]
    cT = packed[:, ne + 4 + H:ne + 4 + 2 * H]
    return emb, mean, std, hT, cT


def actor_forward(pk, seq, hidden=None):
    """seq: (B, T, C, H, W) float32 (PyTorch NCHW convention at the boundary)."""
    B, T, C, Hi, Wi = seq.shape
    # One input transpose establishes time-major image order AND NHWC layout,
    # so no feature-level transpose is needed in front of the LSTM.
    x = seq.transpose(1, 0, 3, 4, 2).reshape(T * B, Hi, Wi, C)
    act1 = conv1_pallas(x, pk["w1p"], pk["b1"])
    if hidden is None:
        h0 = jnp.zeros((B, LSTM_DIM), jnp.float32)
        c0 = jnp.zeros((B, LSTM_DIM), jnp.float32)
    else:
        h0, c0 = hidden[0][0], hidden[1][0]
    emb, mean, std, hT, cT = tail_pallas(act1, pk, h0, c0, B, T)
    return emb, (mean, std), (hT[None], cT[None])


# ------------------------------------------------------------------
# Deterministic parameter init (synthetic; PyTorch-default-style uniform)
# ------------------------------------------------------------------
def init_params(key):
    ks = iter(jax.random.split(key, 24))

    def u(shape, fan_in):
        bound = 1.0 / float(fan_in) ** 0.5
        return jax.random.uniform(next(ks), shape, jnp.float32, -bound, bound)

    H = LSTM_DIM
    ne = AC_EMBED_DIM
    p = {}
    p["w1"], p["b1"] = u((3 * 3 * 3, 16), 27), u((16,), 27)
    p["w2"], p["b2"] = u((3 * 3 * 16, 32), 144), u((32,), 144)
    p["w3"], p["b3"] = u((3 * 3 * 32, 32), 288), u((32,), 288)
    flat_dim = 32                                # 32 x 1 x 1 for 48x48 inputs
    p["wfc"], p["bfc"] = u((flat_dim, H), flat_dim), u((H,), flat_dim)
    p["ln_g"] = jnp.ones((H,), jnp.float32)
    p["ln_b"] = jnp.zeros((H,), jnp.float32)
    p["w_ih"], p["b_ih"] = u((H, 4 * H), H), u((4 * H,), H)      # gate order (i, f, g, o)
    p["w_hh"], p["b_hh"] = u((H, 4 * H), H), u((4 * H,), H)
    # fused head: [ac_embed | mean_x | mean_y | logstd_x | logstd_y]
    p["w_head"] = jnp.concatenate(
        [u((H, ne), H), u((H, 1), H), u((H, 1), H), u((H, 1), H), u((H, 1), H)], axis=1)
    p["b_head"] = jnp.concatenate(
        [u((ne,), H), u((1,), H), u((1,), H), u((1,), H), u((1,), H)], axis=0)
    return p


def pack_params(p):
    """Fold / pad / scatter everything that does not depend on the inputs (once, at init)."""
    H = LSTM_DIM
    w1p = jnp.pad(p["w1"], ((0, 32 - p["w1"].shape[0]), (0, 0)))     # K 27 -> 32
    b1 = p["b1"].reshape(1, -1)
    # conv3 scattered weight: rows index the flattened 3x3x32 conv3 input,
    # (h*3+w)*32+ci; cols index the 4 conv3 output positions stacked on lanes,
    # (oh*2+ow)*32+co.  Output (oh,ow) reads padded input (2oh+dy, 2ow+dx), i.e.
    # unpadded (h, w) = (2oh+dy-1, 2ow+dx-1).
    w3 = p["w3"].reshape(3, 3, 32, 32)                               # (dy, dx, ci, co)
    w3e = jnp.zeros((3, 3, 32, 2, 2, 32), jnp.float32)
    for oh in range(2):
        for ow in range(2):
            for h in range(3):
                for w in range(3):
                    dy, dx = h - 2 * oh + 1, w - 2 * ow + 1
                    if 0 <= dy < 3 and 0 <= dx < 3:
                        w3e = w3e.at[h, w, :, oh, ow, :].set(w3[dy, dx])
    w3e = w3e.reshape(9 * 32, 4 * 32)
    vecs = jnp.zeros((8, H), jnp.float32)
    for i, v in enumerate([p["b2"], p["b3"], p["bfc"], p["ln_g"], p["ln_b"]]):
        vecs = vecs.at[i].set(v)
    lstmw = jnp.concatenate(
        [p["w_ih"], p["w_hh"], (p["b_ih"] + p["b_hh"]).reshape(1, -1)], axis=0)   # (2H+1, 4H)
    headw = jnp.concatenate([p["w_head"], p["b_head"].reshape(1, -1)], axis=0)    # (H+1, 20)
    return {"w1p": w1p, "b1": b1, "w2": p["w2"], "w3e": w3e, "wfc": p["wfc"],
            "vecs": vecs, "lstmw": lstmw, "headw": headw}


# ------------------------------------------------------------------
# Pure-JAX reference (independent path: lax conv + reshape-maxpool + scan LSTM)
# ------------------------------------------------------------------
def ref_forward(params, seq):
    B, T, C, H, W = seq.shape
    hi = jax.lax.Precision.HIGHEST
    x = seq.reshape(B * T, C, H, W).transpose(0, 2, 3, 1)

    def conv_block(x, w, b):
        Cin = x.shape[-1]
        wr = w.reshape(3, 3, Cin, -1)                            # HWIO
        y = jax.lax.conv_general_dilated(
            x, wr, window_strides=(2, 2), padding=((1, 1), (1, 1)),
            dimension_numbers=("NHWC", "HWIO", "NHWC"), precision=hi)
        y = jnp.maximum(y + b, 0.0)
        N, Hh, Ww, Co = y.shape
        return y.reshape(N, Hh // 2, 2, Ww // 2, 2, Co).max(axis=(2, 4))

    x = conv_block(x, params["w1"], params["b1"])
    x = conv_block(x, params["w2"], params["b2"])
    x = conv_block(x, params["w3"], params["b3"])
    feat = jnp.dot(x.reshape(B * T, -1), params["wfc"], precision=hi) + params["bfc"]
    mu = feat.mean(-1, keepdims=True)
    var = ((feat - mu) ** 2).mean(-1, keepdims=True)
    feat = (feat - mu) / jnp.sqrt(var + 1e-5) * params["ln_g"] + params["ln_b"]
    feat = feat.reshape(B, T, -1)

    Hd = LSTM_DIM

    def step(carry, xt):
        h, c = carry
        gates = (jnp.dot(xt, params["w_ih"], precision=hi) + params["b_ih"]
                 + jnp.dot(h, params["w_hh"], precision=hi) + params["b_hh"])
        i = jax.nn.sigmoid(gates[:, :Hd])
        f = jax.nn.sigmoid(gates[:, Hd:2 * Hd])
        g = jnp.tanh(gates[:, 2 * Hd:3 * Hd])
        o = jax.nn.sigmoid(gates[:, 3 * Hd:])
        c = f * c + i * g
        h = o * jnp.tanh(c)
        return (h, c), h

    (hT, cT), outs = jax.lax.scan(step, (jnp.zeros((B, Hd)), jnp.zeros((B, Hd))),
                                  feat.transpose(1, 0, 2))
    last = outs[-1]
    out = jnp.dot(last, params["w_head"], precision=hi) + params["b_head"]
    ne = AC_EMBED_DIM
    emb = out[:, :ne]
    mean = out[:, ne:ne + 2]
    std = jnp.concatenate([jnp.exp(jnp.clip(out[:, ne + 2:ne + 3], -2.0, 0.25)),
                           jnp.exp(jnp.clip(out[:, ne + 3:ne + 4], -2.0, 1.0))], -1)
    return emb, (mean, std), (hT[None], cT[None])


# ------------------------------------------------------------------
if __name__ == "__main__":
    key = jax.random.PRNGKey(0)
    pkey, xkey = jax.random.split(key)
    params = init_params(pkey)
    packed_params = pack_params(params)          # fixed folding / padding, done once

    B, T = 2, 4
    seq = jax.random.normal(xkey, (B, T, 3, 48, 48), jnp.float32)

    fwd = jax.jit(actor_forward)
    emb, (mean, std), (h_n, c_n) = jax.block_until_ready(fwd(packed_params, seq))

    r_emb, (r_mean, r_std), (r_h, r_c) = ref_forward(params, seq)
    assert emb.shape == (B, AC_EMBED_DIM) and mean.shape == (B, 2) and std.shape == (B, 2)
    assert h_n.shape == (1, B, LSTM_DIM) and c_n.shape == (1, B, LSTM_DIM)
    for a, b in [(emb, r_emb), (mean, r_mean), (std, r_std), (h_n, r_h), (c_n, r_c)]:
        assert jnp.allclose(a, b, atol=2e-3, rtol=2e-3), "mismatch vs reference"

    print("KERNEL_OK")
</pallas_src>

<mosaic_0001>
module attributes {stable_mosaic.version = 11 : i64} {
  func.func @_conv1_kernel(%arg0: memref<4608x32xf32, #tpu.memory_space<vmem>>, %arg1: memref<32x16xf32, #tpu.memory_space<vmem>>, %arg2: memref<1x16xf32, #tpu.memory_space<vmem>>, %arg3: memref<1152x16xf32, #tpu.memory_space<vmem>>) attributes {dimension_semantics = [], scalar_prefetch = 0 : i64, scratch_operands = 0 : i64, tpu.core_type = #tpu.core_type<tc>} {
    %c0 = arith.constant 0 : index
    %c0_0 = arith.constant 0 : index
    %0 = vector.load %arg0[%c0, %c0_0] : memref<4608x32xf32, #tpu.memory_space<vmem>>, vector<4608x32xf32>
    %c0_1 = arith.constant 0 : index
    %c0_2 = arith.constant 0 : index
    %1 = vector.load %arg1[%c0_1, %c0_2] : memref<32x16xf32, #tpu.memory_space<vmem>>, vector<32x16xf32>
    %cst = arith.constant dense<0.000000e+00> : vector<4608x16xf32>
    %2 = tpu.matmul %0, %1, %cst {dimension_numbers = #tpu.dot_dimension_numbers<[1], [0], [0], [1], [0, 0, 1, 1], [], []>} : vector<4608x32xf32>, vector<32x16xf32>, vector<4608x16xf32> -> vector<4608x16xf32>
    %3 = vector.extract_strided_slice %2 {offsets = [0, 0], sizes = [1152, 16], strides = [1, 1]} : vector<4608x16xf32> to vector<1152x16xf32>
    %4 = vector.extract_strided_slice %2 {offsets = [1152, 0], sizes = [1152, 16], strides = [1, 1]} : vector<4608x16xf32> to vector<1152x16xf32>
    %5 = arith.maximumf %3, %4 : vector<1152x16xf32>
    %6 = vector.extract_strided_slice %2 {offsets = [2304, 0], sizes = [1152, 16], strides = [1, 1]} : vector<4608x16xf32> to vector<1152x16xf32>
    %7 = vector.extract_strided_slice %2 {offsets = [3456, 0], sizes = [1152, 16], strides = [1, 1]} : vector<4608x16xf32> to vector<1152x16xf32>
    %8 = arith.maximumf %6, %7 : vector<1152x16xf32>
    %9 = arith.maximumf %5, %8 : vector<1152x16xf32>
    %c0_3 = arith.constant 0 : index
    %c0_4 = arith.constant 0 : index
    %10 = vector.load %arg2[%c0_3, %c0_4] : memref<1x16xf32, #tpu.memory_space<vmem>>, vector<1x16xf32>
    %11 = vector.broadcast %10 : vector<1x16xf32> to vector<1152x16xf32>
    %12 = arith.addf %9, %11 : vector<1152x16xf32>
    %cst_5 = arith.constant 0.000000e+00 : f32
    %13 = vector.broadcast %cst_5 : f32 to vector<1152x16xf32>
    %14 = arith.maximumf %12, %13 : vector<1152x16xf32>
    %c0_6 = arith.constant 0 : index
    %c0_7 = arith.constant 0 : index
    %15 = vector.load %arg3[%c0_6, %c0_7] : memref<1152x16xf32, #tpu.memory_space<vmem>>, vector<1152x16xf32>
    tpu.vector_store %arg3[%c0_6, %c0_7], %14 {strides = array<i32>} : memref<1152x16xf32, #tpu.memory_space<vmem>>, vector<1152x16xf32>,
    return
  }
}

module attributes {stable_mosaic.version = 11 : i64} {
  func.func @_tail_kernel(%arg0: memref<288x144xf32, #tpu.memory_space<vmem>>, %arg1: memref<144x32xf32, #tpu.memory_space<vmem>>, %arg2: memref<288x128xf32, #tpu.memory_space<vmem>>, %arg3: memref<32x32xf32, #tpu.memory_space<vmem>>, %arg4: memref<8x32xf32, #tpu.memory_space<vmem>>, %arg5: memref<65x128xf32, #tpu.memory_space<vmem>>, %arg6: memref<33x20xf32, #tpu.memory_space<vmem>>, %arg7: memref<2x32xf32, #tpu.memory_space<vmem>>, %arg8: memref<2x32xf32, #tpu.memory_space<vmem>>, %arg9: memref<2x128xf32, #tpu.memory_space<vmem>>) attributes {dimension_semantics = [], scalar_prefetch = 0 : i64, scratch_operands = 0 : i64, tpu.core_type = #tpu.core_type<tc>} {
    %c0 = arith.constant 0 : index
    %c0_0 = arith.constant 0 : index
    %0 = vector.load %arg0[%c0, %c0_0] : memref<288x144xf32, #tpu.memory_space<vmem>>, vector<288x144xf32>
    %c0_1 = arith.constant 0 : index
    %c0_2 = arith.constant 0 : index
    %1 = vector.load %arg1[%c0_1, %c0_2] : memref<144x32xf32, #tpu.memory_space<vmem>>, vector<144x32xf32>
    %cst = arith.constant dense<0.000000e+00> : vector<288x32xf32>
    %2 = tpu.matmul %0, %1, %cst {dimension_numbers = #tpu.dot_dimension_numbers<[1], [0], [0], [1], [0, 0, 1, 1], [], []>} : vector<288x144xf32>, vector<144x32xf32>, vector<288x32xf32> -> vector<288x32xf32>
    %3 = vector.extract_strided_slice %2 {offsets = [0, 0], sizes = [72, 32], strides = [1, 1]} : vector<288x32xf32> to vector<72x32xf32>
    %4 = vector.extract_strided_slice %2 {offsets = [72, 0], sizes = [72, 32], strides = [1, 1]} : vector<288x32xf32> to vector<72x32xf32>
    %5 = arith.maximumf %3, %4 : vector<72x32xf32>
    %6 = vector.extract_strided_slice %2 {offsets = [144, 0], sizes = [72, 32], strides = [1, 1]} : vector<288x32xf32> to vector<72x32xf32>
    %7 = vector.extract_strided_slice %2 {offsets = [216, 0], sizes = [72, 32], strides = [1, 1]} : vector<288x32xf32> to vector<72x32xf32>
    %8 = arith.maximumf %6, %7 : vector<72x32xf32>
    %9 = arith.maximumf %5, %8 : vector<72x32xf32>
    %c0_3 = arith.constant 0 : index
    %c0_4 = arith.constant 0 : index
    %10 = vector.load %arg4[%c0_3, %c0_4] : memref<8x32xf32, #tpu.memory_space<vmem>>, vector<1x32xf32>
    %11 = vector.broadcast %10 : vector<1x32xf32> to vector<72x32xf32>
    %12 = arith.addf %9, %11 : vector<72x32xf32>
    %cst_5 = arith.constant 0.000000e+00 : f32
    %13 = vector.broadcast %cst_5 : f32 to vector<72x32xf32>
    %14 = arith.maximumf %12, %13 : vector<72x32xf32>
    %15 = vector.extract_strided_slice %14 {offsets = [0, 0], sizes = [8, 32], strides = [1, 1]} : vector<72x32xf32> to vector<8x32xf32>
    %16 = vector.extract_strided_slice %14 {offsets = [8, 0], sizes = [8, 32], strides = [1, 1]} : vector<72x32xf32> to vector<8x32xf32>
    %17 = vector.extract_strided_slice %14 {offsets = [16, 0], sizes = [8, 32], strides = [1, 1]} : vector<72x32xf32> to vector<8x32xf32>
    %18 = vector.extract_strided_slice %14 {offsets = [24, 0], sizes = [8, 32], strides = [1, 1]} : vector<72x32xf32> to vector<8x32xf32>
    %19 = vector.extract_strided_slice %14 {offsets = [32, 0], sizes = [8, 32], strides = [1, 1]} : vector<72x32xf32> to vector<8x32xf32>
    %20 = vector.extract_strided_slice %14 {offsets = [40, 0], sizes = [8, 32], strides = [1, 1]} : vector<72x32xf32> to vector<8x32xf32>
    %21 = vector.extract_strided_slice %14 {offsets = [48, 0], sizes = [8, 32], strides = [1, 1]} : vector<72x32xf32> to vector<8x32xf32>
    %22 = vector.extract_strided_slice %14 {offsets = [56, 0], sizes = [8, 32], strides = [1, 1]} : vector<72x32xf32> to vector<8x32xf32>
    %23 = vector.extract_strided_slice %14 {offsets = [64, 0], sizes = [8, 32], strides = [1, 1]} : vector<72x32xf32> to vector<8x32xf32>
    %24 = tpu.concatenate %15, %16, %17, %18, %19, %20, %21, %22, %23 in 1 : vector<8x32xf32>, vector<8x32xf32>, vector<8x32xf32>, vector<8x32xf32>, vector<8x32xf32>, vector<8x32xf32>, vector<8x32xf32>, vector<8x32xf32>, vector<8x32xf32> -> vector<8x288xf32>
    %c0_6 = arith.constant 0 : index
    %c0_7 = arith.constant 0 : index
    %25 = vector.load %arg2[%c0_6, %c0_7] : memref<288x128xf32, #tpu.memory_space<vmem>>, vector<288x128xf32>
    %cst_8 = arith.constant dense<0.000000e+00> : vector<8x128xf32>
    %26 = tpu.matmul %24, %25, %cst_8 {dimension_numbers = #tpu.dot_dimension_numbers<[1], [0], [0], [1], [0, 0, 1, 1], [], []>} : vector<8x288xf32>, vector<288x128xf32>, vector<8x128xf32> -> vector<8x128xf32>
    %27 = vector.extract_strided_slice %26 {offsets = [0, 0], sizes = [8, 32], strides = [1, 1]} : vector<8x128xf32> to vector<8x32xf32>
    %28 = vector.extract_strided_slice %26 {offsets = [0, 32], sizes = [8, 32], strides = [1, 1]} : vector<8x128xf32> to vector<8x32xf32>
    %29 = arith.maximumf %27, %28 : vector<8x32xf32>
    %30 = vector.extract_strided_slice %26 {offsets = [0, 64], sizes = [8, 32], strides = [1, 1]} : vector<8x128xf32> to vector<8x32xf32>
    %31 = vector.extract_strided_slice %26 {offsets = [0, 96], sizes = [8, 32], strides = [1, 1]} : vector<8x128xf32> to vector<8x32xf32>
    %32 = arith.maximumf %30, %31 : vector<8x32xf32>
    %33 = arith.maximumf %29, %32 : vector<8x32xf32>
    %c1 = arith.constant 1 : index
    %c0_9 = arith.constant 0 : index
    %34 = vector.load %arg4[%c1, %c0_9] : memref<8x32xf32, #tpu.memory_space<vmem>>, vector<1x32xf32>
    %35 = vector.broadcast %34 : vector<1x32xf32> to vector<8x32xf32>
    %36 = arith.addf %33, %35 : vector<8x32xf32>
    %cst_10 = arith.constant 0.000000e+00 : f32
    %37 = vector.broadcast %cst_10 : f32 to vector<8x32xf32>
    %38 = arith.maximumf %36, %37 : vector<8x32xf32>
    %c0_11 = arith.constant 0 : index
    %c0_12 = arith.constant 0 : index
    %39 = vector.load %arg3[%c0_11, %c0_12] : memref<32x32xf32, #tpu.memory_space<vmem>>, vector<32x32xf32>
    %cst_13 = arith.constant dense<0.000000e+00> : vector<8x32xf32>
    %40 = tpu.matmul %38, %39, %cst_13 {dimension_numbers = #tpu.dot_dimension_numbers<[1], [0], [0], [1], [0, 0, 1, 1], [], []>} : vector<8x32xf32>, vector<32x32xf32>, vector<8x32xf32> -> vector<8x32xf32>
    %c2 = arith.constant 2 : index
    %c0_14 = arith.constant 0 : index
    %41 = vector.load %arg4[%c2, %c0_14] : memref<8x32xf32, #tpu.memory_space<vmem>>, vector<1x32xf32>
    %42 = vector.broadcast %41 : vector<1x32xf32> to vector<8x32xf32>
    %43 = arith.addf %40, %42 : vector<8x32xf32>
    %cst_15 = arith.constant dense<0.000000e+00> : vector<8xf32>
    %44 = vector.multi_reduction <add>, %43, %cst_15 [1] : vector<8x32xf32> to vector<8xf32>
    %45 = vector.shape_cast %44 : vector<8xf32> to vector<8x1xf32>
    %cst_16 = arith.constant 3.200000e+01 : f32
    %46 = vector.broadcast %cst_16 : f32 to vector<8x1xf32>
    %47 = arith.divf %45, %46 : vector<8x1xf32>
    %48 = vector.broadcast %47 : vector<8x1xf32> to vector<8x32xf32>
    %49 = arith.subf %43, %48 : vector<8x32xf32>
    %50 = arith.mulf %49, %49 : vector<8x32xf32>
    %cst_17 = arith.constant dense<0.000000e+00> : vector<8xf32>
    %51 = vector.multi_reduction <add>, %50, %cst_17 [1] : vector<8x32xf32> to vector<8xf32>
    %52 = vector.shape_cast %51 : vector<8xf32> to vector<8x1xf32>
    %cst_18 = arith.constant 3.200000e+01 : f32
    %53 = vector.broadcast %cst_18 : f32 to vector<8x1xf32>
    %54 = arith.divf %52, %53 : vector<8x1xf32>
    %cst_19 = arith.constant 9.99999974E-6 : f32
    %55 = vector.broadcast %cst_19 : f32 to vector<8x1xf32>
    %56 = arith.addf %54, %55 : vector<8x1xf32>
    %57 = math.rsqrt %56 : vector<8x1xf32>
    %58 = vector.broadcast %57 : vector<8x1xf32> to vector<8x32xf32>
    %59 = arith.mulf %49, %58 : vector<8x32xf32>
    %c3 = arith.constant 3 : index
    %c0_20 = arith.constant 0 : index
    %60 = vector.load %arg4[%c3, %c0_20] : memref<8x32xf32, #tpu.memory_space<vmem>>, vector<1x32xf32>
    %61 = vector.broadcast %60 : vector<1x32xf32> to vector<8x32xf32>
    %62 = arith.mulf %59, %61 : vector<8x32xf32>
    %c4 = arith.constant 4 : index
    %c0_21 = arith.constant 0 : index
    %63 = vector.load %arg4[%c4, %c0_21] : memref<8x32xf32, #tpu.memory_space<vmem>>, vector<1x32xf32>
    %64 = vector.broadcast %63 : vector<1x32xf32> to vector<8x32xf32>
    %65 = arith.addf %62, %64 : vector<8x32xf32>
    %c0_22 = arith.constant 0 : index
    %c0_23 = arith.constant 0 : index
    %66 = vector.load %arg5[%c0_22, %c0_23] : memref<65x128xf32, #tpu.memory_space<vmem>>, vector<32x128xf32>
    %cst_24 = arith.constant dense<0.000000e+00> : vector<8x128xf32>
    %67 = tpu.matmul %65, %66, %cst_24 {dimension_numbers = #tpu.dot_dimension_numbers<[1], [0], [0], [1], [0, 0, 1, 1], [], []>} : vector<8x32xf32>, vector<32x128xf32>, vector<8x128xf32> -> vector<8x128xf32>
    %c64 = arith.constant 64 : index
    %c0_25 = arith.constant 0 : index
    %68 = vector.load %arg5[%c64, %c0_25] : memref<65x128xf32, #tpu.memory_space<vmem>>, vector<1x128xf32>
    %69 = vector.broadcast %68 : vector<1x128xf32> to vector<8x128xf32>
    %70 = arith.addf %67, %69 : vector<8x128xf32>
    %c32 = arith.constant 32 : index
    %c0_26 = arith.constant 0 : index
    %71 = vector.load %arg5[%c32, %c0_26] : memref<65x128xf32, #tpu.memory_space<vmem>>, vector<32x128xf32>
    %c0_27 = arith.constant 0 : index
    %c0_28 = arith.constant 0 : index
    %72 = vector.load %arg7[%c0_27, %c0_28] : memref<2x32xf32, #tpu.memory_space<vmem>>, vector<2x32xf32>
    %c0_29 = arith.constant 0 : index
    %c0_30 = arith.constant 0 : index
    %73 = vector.load %arg8[%c0_29, %c0_30] : memref<2x32xf32, #tpu.memory_space<vmem>>, vector<2x32xf32>
    %74 = vector.extract_strided_slice %70 {offsets = [0, 0], sizes = [2, 128], strides = [1, 1]} : vector<8x128xf32> to vector<2x128xf32>
    %cst_31 = arith.constant dense<0.000000e+00> : vector<2x128xf32>
    %75 = tpu.matmul %72, %71, %cst_31 {dimension_numbers = #tpu.dot_dimension_numbers<[1], [0], [0], [1], [0, 0, 1, 1], [], []>} : vector<2x32xf32>, vector<32x128xf32>, vector<2x128xf32> -> vector<2x128xf32>
    %76 = arith.addf %74, %75 : vector<2x128xf32>
    %77 = arith.negf %76 : vector<2x128xf32>
    %78 = math.exp %77 : vector<2x128xf32>
    %cst_32 = arith.constant 1.000000e+00 : f32
    %79 = vector.broadcast %cst_32 : f32 to vector<2x128xf32>
    %80 = arith.addf %79, %78 : vector<2x128xf32>
    %81 = arith.divf %79, %80 : vector<2x128xf32>
    %82 = vector.extract_strided_slice %81 {offsets = [0, 0], sizes = [2, 32], strides = [1, 1]} : vector<2x128xf32> to vector<2x32xf32>
    %83 = vector.extract_strided_slice %81 {offsets = [0, 32], sizes = [2, 32], strides = [1, 1]} : vector<2x128xf32> to vector<2x32xf32>
    %84 = vector.extract_strided_slice %81 {offsets = [0, 96], sizes = [2, 32], strides = [1, 1]} : vector<2x128xf32> to vector<2x32xf32>
    %85 = vector.extract_strided_slice %76 {offsets = [0, 64], sizes = [2, 32], strides = [1, 1]} : vector<2x128xf32> to vector<2x32xf32>
    %86 = math.tanh %85 : vector<2x32xf32>
    %87 = arith.mulf %83, %73 : vector<2x32xf32>
    %88 = arith.mulf %82, %86 : vector<2x32xf32>
    %89 = arith.addf %87, %88 : vector<2x32xf32>
    %90 = math.tanh %89 : vector<2x32xf32>
    %91 = arith.mulf %84, %90 : vector<2x32xf32>
    %92 = vector.extract_strided_slice %70 {offsets = [2, 0], sizes = [2, 128], strides = [1, 1]} : vector<8x128xf32> to vector<2x128xf32>
    %cst_33 = arith.constant dense<0.000000e+00> : vector<2x128xf32>
    %93 = tpu.matmul %91, %71, %cst_33 {dimension_numbers = #tpu.dot_dimension_numbers<[1], [0], [0], [1], [0, 0, 1, 1], [], []>} : vector<2x32xf32>, vector<32x128xf32>, vector<2x128xf32> -> vector<2x128xf32>
    %94 = arith.addf %92, %93 : vector<2x128xf32>
    %95 = arith.negf %94 : vector<2x128xf32>
    %96 = math.exp %95 : vector<2x128xf32>
    %cst_34 = arith.constant 1.000000e+00 : f32
    %97 = vector.broadcast %cst_34 : f32 to vector<2x128xf32>
    %98 = arith.addf %97, %96 : vector<2x128xf32>
    %99 = arith.divf %97, %98 : vector<2x128xf32>
    %100 = vector.extract_strided_slice %99 {offsets = [0, 0], sizes = [2, 32], strides = [1, 1]} : vector<2x128xf32> to vector<2x32xf32>
    %101 = vector.extract_strided_slice %99 {offsets = [0, 32], sizes = [2, 32], strides = [1, 1]} : vector<2x128xf32> to vector<2x32xf32>
    %102 = vector.extract_strided_slice %99 {offsets = [0, 96], sizes = [2, 32], strides = [1, 1]} : vector<2x128xf32> to vector<2x32xf32>
    %103 = vector.extract_strided_slice %94 {offsets = [0, 64], sizes = [2, 32], strides = [1, 1]} : vector<2x128xf32> to vector<2x32xf32>
    %104 = math.tanh %103 : vector<2x32xf32>
    %105 = arith.mulf %101, %89 : vector<2x32xf32>
    %106 = arith.mulf %100, %104 : vector<2x32xf32>
    %107 = arith.addf %105, %106 : vector<2x32xf32>
    %108 = math.tanh %107 : vector<2x32xf32>
    %109 = arith.mulf %102, %108 : vector<2x32xf32>
    %110 = vector.extract_strided_slice %70 {offsets = [4, 0], sizes = [2, 128], strides = [1, 1]} : vector<8x128xf32> to vector<2x128xf32>
    %cst_35 = arith.constant dense<0.000000e+00> : vector<2x128xf32>
    %111 = tpu.matmul %109, %71, %cst_35 {dimension_numbers = #tpu.dot_dimension_numbers<[1], [0], [0], [1], [0, 0, 1, 1], [], []>} : vector<2x32xf32>, vector<32x128xf32>, vector<2x128xf32> -> vector<2x128xf32>
    %112 = arith.addf %110, %111 : vector<2x128xf32>
    %113 = arith.negf %112 : vector<2x128xf32>
    %114 = math.exp %113 : vector<2x128xf32>
    %cst_36 = arith.constant 1.000000e+00 : f32
    %115 = vector.broadcast %cst_36 : f32 to vector<2x128xf32>
    %116 = arith.addf %115, %114 : vector<2x128xf32>
    %117 = arith.divf %115, %116 : vector<2x128xf32>
    %118 = vector.extract_strided_slice %117 {offsets = [0, 0], sizes = [2, 32], strides = [1, 1]} : vector<2x128xf32> to vector<2x32xf32>
    %119 = vector.extract_strided_slice %117 {offsets = [0, 32], sizes = [2, 32], strides = [1, 1]} : vector<2x128xf32> to vector<2x32xf32>
    %120 = vector.extract_strided_slice %117 {offsets = [0, 96], sizes = [2, 32], strides = [1, 1]} : vector<2x128xf32> to vector<2x32xf32>
    %121 = vector.extract_strided_slice %112 {offsets = [0, 64], sizes = [2, 32], strides = [1, 1]} : vector<2x128xf32> to vector<2x32xf32>
    %122 = math.tanh %121 : vector<2x32xf32>
    %123 = arith.mulf %119, %107 : vector<2x32xf32>
    %124 = arith.mulf %118, %122 : vector<2x32xf32>
    %125 = arith.addf %123, %124 : vector<2x32xf32>
    %126 = math.tanh %125 : vector<2x32xf32>
    %127 = arith.mulf %120, %126 : vector<2x32xf32>
    %128 = vector.extract_strided_slice %70 {offsets = [6, 0], sizes = [2, 128], strides = [1, 1]} : vector<8x128xf32> to vector<2x128xf32>
    %cst_37 = arith.constant dense<0.000000e+00> : vector<2x128xf32>
    %129 = tpu.matmul %127, %71, %cst_37 {dimension_numbers = #tpu.dot_dimension_numbers<[1], [0], [0], [1], [0, 0, 1, 1], [], []>} : vector<2x32xf32>, vector<32x128xf32>, vector<2x128xf32> -> vector<2x128xf32>
    %130 = arith.addf %128, %129 : vector<2x128xf32>
    %131 = arith.negf %130 : vector<2x128xf32>
    %132 = math.exp %131 : vector<2x128xf32>
    %cst_38 = arith.constant 1.000000e+00 : f32
    %133 = vector.broadcast %cst_38 : f32 to vector<2x128xf32>
    %134 = arith.addf %133, %132 : vector<2x128xf32>
    %135 = arith.divf %133, %134 : vector<2x128xf32>
    %136 = vector.extract_strided_slice %135 {offsets = [0, 0], sizes = [2, 32], strides = [1, 1]} : vector<2x128xf32> to vector<2x32xf32>
    %137 = vector.extract_strided_slice %135 {offsets = [0, 32], sizes = [2, 32], strides = [1, 1]} : vector<2x128xf32> to vector<2x32xf32>
    %138 = vector.extract_strided_slice %135 {offsets = [0, 96], sizes = [2, 32], strides = [1, 1]} : vector<2x128xf32> to vector<2x32xf32>
    %139 = vector.extract_strided_slice %130 {offsets = [0, 64], sizes = [2, 32], strides = [1, 1]} : vector<2x128xf32> to vector<2x32xf32>
    %140 = math.tanh %139 : vector<2x32xf32>
    %141 = arith.mulf %137, %125 : vector<2x32xf32>
    %142 = arith.mulf %136, %140 : vector<2x32xf32>
    %143 = arith.addf %141, %142 : vector<2x32xf32>
    %144 = math.tanh %143 : vector<2x32xf32>
    %145 = arith.mulf %138, %144 : vector<2x32xf32>
    %c0_39 = arith.constant 0 : index
    %c0_40 = arith.constant 0 : index
    %146 = vector.load %arg6[%c0_39, %c0_40] : memref<33x20xf32, #tpu.memory_space<vmem>>, vector<32x20xf32>
    %cst_41 = arith.constant dense<0.000000e+00> : vector<2x20xf32>
    %147 = tpu.matmul %145, %146, %cst_41 {dimension_numbers = #tpu.dot_dimension_numbers<[1], [0], [0], [1], [0, 0, 1, 1], [], []>} : vector<2x32xf32>, vector<32x20xf32>, vector<2x20xf32> -> vector<2x20xf32>
    %c32_42 = arith.constant 32 : index
    %c0_43 = arith.constant 0 : index
    %148 = vector.load %arg6[%c32_42, %c0_43] : memref<33x20xf32, #tpu.memory_space<vmem>>, vector<1x20xf32>
    %149 = vector.broadcast %148 : vector<1x20xf32> to vector<2x20xf32>
    %150 = arith.addf %147, %149 : vector<2x20xf32>
    %151 = vector.extract_strided_slice %150 {offsets = [0, 0], sizes = [2, 16], strides = [1, 1]} : vector<2x20xf32> to vector<2x16xf32>
    %152 = vector.extract_strided_slice %150 {offsets = [0, 16], sizes = [2, 2], strides = [1, 1]} : vector<2x20xf32> to vector<2x2xf32>
    %153 = tpu.iota {dimensions = array<i32: 1>} : vector<2x2xi32>
    %c0_i32 = arith.constant 0 : i32
    %154 = vector.broadcast %c0_i32 : i32 to vector<2x2xi32>
    %155 = arith.cmpi eq, %153, %154 : vector<2x2xi32>
    %cst_44 = arith.constant 2.500000e-01 : f32
    %cst_45 = arith.constant 1.000000e+00 : f32
    %156 = vector.broadcast %cst_44 : f32 to vector<2x2xf32>
    %157 = vector.broadcast %cst_45 : f32 to vector<2x2xf32>
    %158 = arith.select %155, %156, %157 : vector<2x2xi1>, vector<2x2xf32>
    %159 = vector.extract_strided_slice %150 {offsets = [0, 18], sizes = [2, 2], strides = [1, 1]} : vector<2x20xf32> to vector<2x2xf32>
    %cst_46 = arith.constant -2.000000e+00 : f32
    %160 = vector.broadcast %cst_46 : f32 to vector<2x2xf32>
    %161 = arith.maximumf %160, %159 : vector<2x2xf32>
    %162 = arith.minimumf %158, %161 : vector<2x2xf32>
    %163 = math.exp %162 : vector<2x2xf32>
    %cst_47 = arith.constant 0.000000e+00 : f32
    %164 = vector.broadcast %cst_47 : f32 to vector<2x44xf32>
    %165 = tpu.concatenate %151, %152, %163, %145, %143, %164 in 1 : vector<2x16xf32>, vector<2x2xf32>, vector<2x2xf32>, vector<2x32xf32>, vector<2x32xf32>, vector<2x44xf32> -> vector<2x128xf32>
    %c0_48 = arith.constant 0 : index
    %c0_49 = arith.constant 0 : index
    %166 = vector.load %arg9[%c0_48, %c0_49] : memref<2x128xf32, #tpu.memory_space<vmem>>, vector<2x128xf32>
    tpu.vector_store %arg9[%c0_48, %c0_49], %165 {strides = array<i32>} : memref<2x128xf32, #tpu.memory_space<vmem>>, vector<2x128xf32>,
    return
  }
}

</mosaic_0001>

<llo_original>
// kernel: actor_forward.2
$region0: #{actor_forward.2}
  #allocation0 [shape = 'u32[]', space=smem, size = 0x4, offset = 0x4, fixed_abs, tag = 'smem constant byte address 0x4 - core index']
  #allocation1 [shape = 'u32[72,128]{1,0:T(1,128)}', space=vmem, size = 0x9000, scoped, tag = 'internal scratch']
  %s0 = inlined_call_operand.vmem [shape: f32[4608,32], index: 0, kind: input, shape index: {}]
  %s1 = inlined_call_operand.vmem [shape: f32[32,16], index: 1, kind: input, shape index: {}]
  %s2 = inlined_call_operand.vmem [shape: f32[1,16], index: 2, kind: input, shape index: {}]
  %s3 = inlined_call_operand.vmem [shape: f32[1152,16], index: 3, kind: output, shape index: {}]
  %s4 = sld [smem:[#allocation0]]
  $region22: #{actor_forward.2} parent=0
    _
  %s6 = ssub.s32 1, %s4
  %s7 = scalar_select 0, %s6, %s4
  // Predicated region
  $region2: #{actor_forward.2} parent=0 // pred_check
    _
  $region3: #{actor_forward.2} parent=0 // pred_check_branch
    %9 = sbr.rel (0) target = $region5
  $region4: #{actor_forward.2} parent=0 // pred_region
    _
  $region5: #{actor_forward.2} parent=0 // pred_fallthru
    _
  // Predicated region
  $region6: #{actor_forward.2} parent=0 // pred_check
    _
  $region7: #{actor_forward.2} parent=0 // pred_check_branch
    %11 = sbr.rel (0) target = $region9
  $region8: #{actor_forward.2} parent=0 // pred_region
    _
  $region9: #{actor_forward.2} parent=0 // pred_fallthru
    _
  // Predicated region
  $region10: #{actor_forward.2} parent=0 // pred_check
    _
  $region11: #{actor_forward.2} parent=0 // pred_check_branch
    %13 = sbr.rel (0) target = $region13
  $region12: #{actor_forward.2} parent=0 // pred_region
    _
  $region13: #{actor_forward.2} parent=0 // pred_fallthru
    _
  %v14 = vld [vmem:[%s0] sm:$0xff]
  %v15 = vld [vmem:[%s0 + $0x8] sm:$0xff]
  %v16 = vld [vmem:[%s0 + $0x10] sm:$0xff]
  %v17 = vld [vmem:[%s0 + $0x18] sm:$0xff]
  %v18 = vld [vmem:[%s0 + $0x20] sm:$0xff]
  %v19 = vld [vmem:[%s0 + $0x28] sm:$0xff]
  %v20 = vld [vmem:[%s0 + $0x30] sm:$0xff]
  %v21 = vld [vmem:[%s0 + $0x38] sm:$0xff]
  %v22 = vld [vmem:[%s0 + $0x40] sm:$0xff]
  %v23 = vld [vmem:[%s0 + $0x48] sm:$0xff]
  %v24 = vld [vmem:[%s0 + $0x50] sm:$0xff]
  %v25 = vld [vmem:[%s0 + $0x58] sm:$0xff]
  %v26 = vld [vmem:[%s0 + $0x60] sm:$0xff]
  %v27 = vld [vmem:[%s0 + $0x68] sm:$0xff]
  %v28 = vld [vmem:[%s0 + $0x70] sm:$0xff]
  %v29 = vld [vmem:[%s0 + $0x78] sm:$0xff]
  %v30 = vld [vmem:[%s0 + $0x80] sm:$0xff]
  %v31 = vld [vmem:[%s0 + $0x88] sm:$0xff]
  %v32 = vld [vmem:[%s0 + $0x90] sm:$0xff]
  %v33 = vld [vmem:[%s0 + $0x98] sm:$0xff]
  %v34 = vld [vmem:[%s0 + $0xa0] sm:$0xff]
  %v35 = vld [vmem:[%s0 + $0xa8] sm:$0xff]
  %v36 = vld [vmem:[%s0 + $0xb0] sm:$0xff]
  %v37 = vld [vmem:[%s0 + $0xb8] sm:$0xff]
  %v38 = vld [vmem:[%s0 + $0xc0] sm:$0xff]
  %v39 = vld [vmem:[%s0 + $0xc8] sm:$0xff]
  %v40 = vld [vmem:[%s0 + $0xd0] sm:$0xff]
  %v41 = vld [vmem:[%s0 + $0xd8] sm:$0xff]
  %v42 = vld [vmem:[%s0 + $0xe0] sm:$0xff]
  %v43 = vld [vmem:[%s0 + $0xe8] sm:$0xff]
  %v44 = vld [vmem:[%s0 + $0xf0] sm:$0xff]
  %v45 = vld [vmem:[%s0 + $0xf8] sm:$0xff]
  %v46 = vld [vmem:[%s0 + $0x100] sm:$0xff]
  %v47 = vld [vmem:[%s0 + $0x108] sm:$0xff]
  %v48 = vld [vmem:[%s0 + $0x110] sm:$0xff]
  %v49 = vld [vmem:[%s0 + $0x118] sm:$0xff]
  %v50 = vld [vmem:[%s0 + $0x120] sm:$0xff]
  %v51 = vld [vmem:[%s0 + $0x128] sm:$0xff]
  %v52 = vld [vmem:[%s0 + $0x130] sm:$0xff]
  %v53 = vld [vmem:[%s0 + $0x138] sm:$0xff]
  %v54 = vld [vmem:[%s0 + $0x140] sm:$0xff]
  %v55 = vld [vmem:[%s0 + $0x148] sm:$0xff]
  %v56 = vld [vmem:[%s0 + $0x150] sm:$0xff]
  %v57 = vld [vmem:[%s0 + $0x158] sm:$0xff]
  %v58 = vld [vmem:[%s0 + $0x160] sm:$0xff]
  %v59 = vld [vmem:[%s0 + $0x168] sm:$0xff]
  %v60 = vld [vmem:[%s0 + $0x170] sm:$0xff]
  %v61 = vld [vmem:[%s0 + $0x178] sm:$0xff]
  %v62 = vld [vmem:[%s0 + $0x180] sm:$0xff]
  %v63 = vld [vmem:[%s0 + $0x188] sm:$0xff]
  %v64 = vld [vmem:[%s0 + $0x190] sm:$0xff]
  %v65 = vld [vmem:[%s0 + $0x198] sm:$0xff]
  %v66 = vld [vmem:[%s0 + $0x1a0] sm:$0xff]
  %v67 = vld [vmem:[%s0 + $0x1a8] sm:$0xff]
  %v68 = vld [vmem:[%s0 + $0x1b0] sm:$0xff]
  %v69 = vld [vmem:[%s0 + $0x1b8] sm:$0xff]
  %v70 = vld [vmem:[%s0 + $0x1c0] sm:$0xff]
  %v71 = vld [vmem:[%s0 + $0x1c8] sm:$0xff]
  %v72 = vld [vmem:[%s0 + $0x1d0] sm:$0xff]
  %v73 = vld [vmem:[%s0 + $0x1d8] sm:$0xff]
  %v74 = vld [vmem:[%s0 + $0x1e0] sm:$0xff]
  %v75 = vld [vmem:[%s0 + $0x1e8] sm:$0xff]
  %v76 = vld [vmem:[%s0 + $0x1f0] sm:$0xff]
  %v77 = vld [vmem:[%s0 + $0x1f8] sm:$0xff]
  %v78 = vld [vmem:[%s0 + $0x200] sm:$0xff]
  %v79 = vld [vmem:[%s0 + $0x208] sm:$0xff]
  %v80 = vld [vmem:[%s0 + $0x210] sm:$0xff]
  %v81 = vld [vmem:[%s0 + $0x218] sm:$0xff]
  %v82 = vld [vmem:[%s0 + $0x220] sm:$0xff]
  %v83 = vld [vmem:[%s0 + $0x228] sm:$0xff]
  %v84 = vld [vmem:[%s0 + $0x230] sm:$0xff]
  %v85 = vld [vmem:[%s0 + $0x238] sm:$0xff]
  %v86 = vld [vmem:[%s0 + $0x240] sm:$0xff]
  %v87 = vld [vmem:[%s0 + $0x248] sm:$0xff]
  %v88 = vld [vmem:[%s0 + $0x250] sm:$0xff]
  %v89 = vld [vmem:[%s0 + $0x258] sm:$0xff]
  %v90 = vld [vmem:[%s0 + $0x260] sm:$0xff]
  %v91 = vld [vmem:[%s0 + $0x268] sm:$0xff]
  %v92 = vld [vmem:[%s0 + $0x270] sm:$0xff]
  %v93 = vld [vmem:[%s0 + $0x278] sm:$0xff]
  %v94 = vld [vmem:[%s0 + $0x280] sm:$0xff]
  %v95 = vld [vmem:[%s0 + $0x288] sm:$0xff]
  %v96 = vld [vmem:[%s0 + $0x290] sm:$0xff]
  %v97 = vld [vmem:[%s0 + $0x298] sm:$0xff]
  %v98 = vld [vmem:[%s0 + $0x2a0] sm:$0xff]
  %v99 = vld [vmem:[%s0 + $0x2a8] sm:$0xff]
  %v100 = vld [vmem:[%s0 + $0x2b0] sm:$0xff]
  %v101 = vld [vmem:[%s0 + $0x2b8] sm:$0xff]
  %v102 = vld [vmem:[%s0 + $0x2c0] sm:$0xff]
  %v103 = vld [vmem:[%s0 + $0x2c8] sm:$0xff]
  %v104 = vld [vmem:[%s0 + $0x2d0] sm:$0xff]
  %v105 = vld [vmem:[%s0 + $0x2d8] sm:$0xff]
  %v106 = vld [vmem:[%s0 + $0x2e0] sm:$0xff]
  %v107 = vld [vmem:[%s0 + $0x2e8] sm:$0xff]
  %v108 = vld [vmem:[%s0 + $0x2f0] sm:$0xff]
  %v109 = vld [vmem:[%s0 + $0x2f8] sm:$0xff]
  %v110 = vld [vmem:[%s0 + $0x300] sm:$0xff]
  %v111 = vld [vmem:[%s0 + $0x308] sm:$0xff]
  %v112 = vld [vmem:[%s0 + $0x310] sm:$0xff]
  %v113 = vld [vmem:[%s0 + $0x318] sm:$0xff]
  %v114 = vld [vmem:[%s0 + $0x320] sm:$0xff]
  %v115 = vld [vmem:[%s0 + $0x328] sm:$0xff]
  %v116 = vld [vmem:[%s0 + $0x330] sm:$0xff]
  %v117 = vld [vmem:[%s0 + $0x338] sm:$0xff]
  %v118 = vld [vmem:[%s0 + $0x340] sm:$0xff]
  %v119 = vld [vmem:[%s0 + $0x348] sm:$0xff]
  %v120 = vld [vmem:[%s0 + $0x350] sm:$0xff]
  %v121 = vld [vmem:[%s0 + $0x358] sm:$0xff]
  %v122 = vld [vmem:[%s0 + $0x360] sm:$0xff]
  %v123 = vld [vmem:[%s0 + $0x368] sm:$0xff]
  %v124 = vld [vmem:[%s0 + $0x370] sm:$0xff]
  %v125 = vld [vmem:[%s0 + $0x378] sm:$0xff]
  %v126 = vld [vmem:[%s0 + $0x380] sm:$0xff]
  %v127 = vld [vmem:[%s0 + $0x388] sm:$0xff]
  %v128 = vld [vmem:[%s0 + $0x390] sm:$0xff]
  %v129 = vld [vmem:[%s0 + $0x398] sm:$0xff]
  %v130 = vld [vmem:[%s0 + $0x3a0] sm:$0xff]
  %v131 = vld [vmem:[%s0 + $0x3a8] sm:$0xff]
  %v132 = vld [vmem:[%s0 + $0x3b0] sm:$0xff]
  %v133 = vld [vmem:[%s0 + $0x3b8] sm:$0xff]
  %v134 = vld [vmem:[%s0 + $0x3c0] sm:$0xff]
  %v135 = vld [vmem:[%s0 + $0x3c8] sm:$0xff]
  %v136 = vld [vmem:[%s0 + $0x3d0] sm:$0xff]
  %v137 = vld [vmem:[%s0 + $0x3d8] sm:$0xff]
  %v138 = vld [vmem:[%s0 + $0x3e0] sm:$0xff]
  %v139 = vld [vmem:[%s0 + $0x3e8] sm:$0xff]
  %v140 = vld [vmem:[%s0 + $0x3f0] sm:$0xff]
  %v141 = vld [vmem:[%s0 + $0x3f8] sm:$0xff]
  %v142 = vld [vmem:[%s0 + $0x400] sm:$0xff]
  %v143 = vld [vmem:[%s0 + $0x408] sm:$0xff]
  %v144 = vld [vmem:[%s0 + $0x410] sm:$0xff]
  %v145 = vld [vmem:[%s0 + $0x418] sm:$0xff]
  %v146 = vld [vmem:[%s0 + $0x420] sm:$0xff]
  %v147 = vld [vmem:[%s0 + $0x428] sm:$0xff]
  %v148 = vld [vmem:[%s0 + $0x430] sm:$0xff]
  %v149 = vld [vmem:[%s0 + $0x438] sm:$0xff]
  %v150 = vld [vmem:[%s0 + $0x440] sm:$0xff]
  %v151 = vld [vmem:[%s0 + $0x448] sm:$0xff]
  %v152 = vld [vmem:[%s0 + $0x450] sm:$0xff]
  %v153 = vld [vmem:[%s0 + $0x458] sm:$0xff]
  %v154 = vld [vmem:[%s0 + $0x460] sm:$0xff]
  %v155 = vld [vmem:[%s0 + $0x468] sm:$0xff]
  %v156 = vld [vmem:[%s0 + $0x470] sm:$0xff]
  %v157 = vld [vmem:[%s0 + $0x478] sm:$0xff]
  %v158 = vld [vmem:[%s0 + $0x480] sm:$0xff]
  %v159 = vld [vmem:[%s0 + $0x488] sm:$0xff]
  %v160 = vld [vmem:[%s0 + $0x490] sm:$0xff]
  %v161 = vld [vmem:[%s0 + $0x498] sm:$0xff]
  %v162 = vld [vmem:[%s0 + $0x4a0] sm:$0xff]
  %v163 = vld [vmem:[%s0 + $0x4a8] sm:$0xff]
  %v164 = vld [vmem:[%s0 + $0x4b0] sm:$0xff]
  %v165 = vld [vmem:[%s0 + $0x4b8] sm:$0xff]
  %v166 = vld [vmem:[%s0 + $0x4c0] sm:$0xff]
  %v167 = vld [vmem:[%s0 + $0x4c8] sm:$0xff]
  %v168 = vld [vmem:[%s0 + $0x4d0] sm:$0xff]
  %v169 = vld [vmem:[%s0 + $0x4d8] sm:$0xff]
  %v170 = vld [vmem:[%s0 + $0x4e0] sm:$0xff]
  %v171 = vld [vmem:[%s0 + $0x4e8] sm:$0xff]
  %v172 = vld [vmem:[%s0 + $0x4f0] sm:$0xff]
  %v173 = vld [vmem:[%s0 + $0x4f8] sm:$0xff]
  %v174 = vld [vmem:[%s0 + $0x500] sm:$0xff]
  %v175 = vld [vmem:[%s0 + $0x508] sm:$0xff]
  %v176 = vld [vmem:[%s0 + $0x510] sm:$0xff]
  %v177 = vld [vmem:[%s0 + $0x518] sm:$0xff]
  %v178 = vld [vmem:[%s0 + $0x520] sm:$0xff]
  %v179 = vld [vmem:[%s0 + $0x528] sm:$0xff]
  %v180 = vld [vmem:[%s0 + $0x530] sm:$0xff]
  %v181 = vld [vmem:[%s0 + $0x538] sm:$0xff]
  %v182 = vld [vmem:[%s0 + $0x540] sm:$0xff]
  %v183 = vld [vmem:[%s0 + $0x548] sm:$0xff]
  %v184 = vld [vmem:[%s0 + $0x550] sm:$0xff]
  %v185 = vld [vmem:[%s0 + $0x558] sm:$0xff]
  %v186 = vld [vmem:[%s0 + $0x560] sm:$0xff]
  %v187 = vld [vmem:[%s0 + $0x568] sm:$0xff]
  %v188 = vld [vmem:[%s0 + $0x570] sm:$0xff]
  %v189 = vld [vmem:[%s0 + $0x578] sm:$0xff]
  %v190 = vld [vmem:[%s0 + $0x580] sm:$0xff]
  %v191 = vld [vmem:[%s0 + $0x588] sm:$0xff]
  %v192 = vld [vmem:[%s0 + $0x590] sm:$0xff]
  %v193 = vld [vmem:[%s0 + $0x598] sm:$0xff]
  %v194 = vld [vmem:[%s0 + $0x5a0] sm:$0xff]
  %v195 = vld [vmem:[%s0 + $0x5a8] sm:$0xff]
  %v196 = vld [vmem:[%s0 + $0x5b0] sm:$0xff]
  %v197 = vld [vmem:[%s0 + $0x5b8] sm:$0xff]
  %v198 = vld [vmem:[%s0 + $0x5c0] sm:$0xff]
  %v199 = vld [vmem:[%s0 + $0x5c8] sm:$0xff]
  %v200 = vld [vmem:[%s0 + $0x5d0] sm:$0xff]
  %v201 = vld [vmem:[%s0 + $0x5d8] sm:$0xff]
  %v202 = vld [vmem:[%s0 + $0x5e0] sm:$0xff]
  %v203 = vld [vmem:[%s0 + $0x5e8] sm:$0xff]
  %v204 = vld [vmem:[%s0 + $0x5f0] sm:$0xff]
  %v205 = vld [vmem:[%s0 + $0x5f8] sm:$0xff]
  %v206 = vld [vmem:[%s0 + $0x600] sm:$0xff]
  %v207 = vld [vmem:[%s0 + $0x608] sm:$0xff]
  %v208 = vld [vmem:[%s0 + $0x610] sm:$0xff]
  %v209 = vld [vmem:[%s0 + $0x618] sm:$0xff]
  %v210 = vld [vmem:[%s0 + $0x620] sm:$0xff]
  %v211 = vld [vmem:[%s0 + $0x628] sm:$0xff]
  %v212 = vld [vmem:[%s0 + $0x630] sm:$0xff]
  %v213 = vld [vmem:[%s0 + $0x638] sm:$0xff]
  %v214 = vld [vmem:[%s0 + $0x640] sm:$0xff]
  %v215 = vld [vmem:[%s0 + $0x648] sm:$0xff]
  %v216 = vld [vmem:[%s0 + $0x650] sm:$0xff]
  %v217 = vld [vmem:[%s0 + $0x658] sm:$0xff]
  %v218 = vld [vmem:[%s0 + $0x660] sm:$0xff]
  %v219 = vld [vmem:[%s0 + $0x668] sm:$0xff]
  %v220 = vld [vmem:[%s0 + $0x670] sm:$0xff]
  %v221 = vld [vmem:[%s0 + $0x678] sm:$0xff]
  %v222 = vld [vmem:[%s0 + $0x680] sm:$0xff]
  %v223 = vld [vmem:[%s0 + $0x688] sm:$0xff]
  %v224 = vld [vmem:[%s0 + $0x690] sm:$0xff]
  %v225 = vld [vmem:[%s0 + $0x698] sm:$0xff]
  %v226 = vld [vmem:[%s0 + $0x6a0] sm:$0xff]
  %v227 = vld [vmem:[%s0 + $0x6a8] sm:$0xff]
  %v228 = vld [vmem:[%s0 + $0x6b0] sm:$0xff]
  %v229 = vld [vmem:[%s0 + $0x6b8] sm:$0xff]
  %v230 = vld [vmem:[%s0 + $0x6c0] sm:$0xff]
  %v231 = vld [vmem:[%s0 + $0x6c8] sm:$0xff]
  %v232 = vld [vmem:[%s0 + $0x6d0] sm:$0xff]
  %v233 = vld [vmem:[%s0 + $0x6d8] sm:$0xff]
  %v234 = vld [vmem:[%s0 + $0x6e0] sm:$0xff]
  %v235 = vld [vmem:[%s0 + $0x6e8] sm:$0xff]
  %v236 = vld [vmem:[%s0 + $0x6f0] sm:$0xff]
  %v237 = vld [vmem:[%s0 + $0x6f8] sm:$0xff]
  %v238 = vld [vmem:[%s0 + $0x700] sm:$0xff]
  %v239 = vld [vmem:[%s0 + $0x708] sm:$0xff]
  %v240 = vld [vmem:[%s0 + $0x710] sm:$0xff]
  %v241 = vld [vmem:[%s0 + $0x718] sm:$0xff]
  %v242 = vld [vmem:[%s0 + $0x720] sm:$0xff]
  %v243 = vld [vmem:[%s0 + $0x728] sm:$0xff]
  %v244 = vld [vmem:[%s0 + $0x730] sm:$0xff]
  %v245 = vld [vmem:[%s0 + $0x738] sm:$0xff]
  %v246 = vld [vmem:[%s0 + $0x740] sm:$0xff]
  %v247 = vld [vmem:[%s0 + $0x748] sm:$0xff]
  %v248 = vld [vmem:[%s0 + $0x750] sm:$0xff]
  %v249 = vld [vmem:[%s0 + $0x758] sm:$0xff]
  %v250 = vld [vmem:[%s0 + $0x760] sm:$0xff]
  %v251 = vld [vmem:[%s0 + $0x768] sm:$0xff]
  %v252 = vld [vmem:[%s0 + $0x770] sm:$0xff]
  %v253 = vld [vmem:[%s0 + $0x778] sm:$0xff]
  %v254 = vld [vmem:[%s0 + $0x780] sm:$0xff]
  %v255 = vld [vmem:[%s0 + $0x788] sm:$0xff]
  %v256 = vld [vmem:[%s0 + $0x790] sm:$0xff]
  %v257 = vld [vmem:[%s0 + $0x798] sm:$0xff]
  %v258 = vld [vmem:[%s0 + $0x7a0] sm:$0xff]
  %v259 = vld [vmem:[%s0 + $0x7a8] sm:$0xff]
  %v260 = vld [vmem:[%s0 + $0x7b0] sm:$0xff]
  %v261 = vld [vmem:[%s0 + $0x7b8] sm:$0xff]
  %v262 = vld [vmem:[%s0 + $0x7c0] sm:$0xff]
  %v263 = vld [vmem:[%s0 + $0x7c8] sm:$0xff]
  %v264 = vld [vmem:[%s0 + $0x7d0] sm:$0xff]
  %v265 = vld [vmem:[%s0 + $0x7d8] sm:$0xff]
  %v266 = vld [vmem:[%s0 + $0x7e0] sm:$0xff]
  %v267 = vld [vmem:[%s0 + $0x7e8] sm:$0xff]
  %v268 = vld [vmem:[%s0 + $0x7f0] sm:$0xff]
  %v269 = vld [vmem:[%s0 + $0x7f8] sm:$0xff]
  %v270 = vld [vmem:[%s0 + $0x800] sm:$0xff]
  %v271 = vld [vmem:[%s0 + $0x808] sm:$0xff]
  %v272 = vld [vmem:[%s0 + $0x810] sm:$0xff]
  %v273 = vld [vmem:[%s0 + $0x818] sm:$0xff]
  %v274 = vld [vmem:[%s0 + $0x820] sm:$0xff]
  %v275 = vld [vmem:[%s0 + $0x828] sm:$0xff]
  %v276 = vld [vmem:[%s0 + $0x830] sm:$0xff]
  %v277 = vld [vmem:[%s0 + $0x838] sm:$0xff]
  %v278 = vld [vmem:[%s0 + $0x840] sm:$0xff]
  %v279 = vld [vmem:[%s0 + $0x848] sm:$0xff]
  %v280 = vld [vmem:[%s0 + $0x850] sm:$0xff]
  %v281 = vld [vmem:[%s0 + $0x858] sm:$0xff]
  %v282 = vld [vmem:[%s0 + $0x860] sm:$0xff]
  %v283 = vld [vmem:[%s0 + $0x868] sm:$0xff]
  %v284 = vld [vmem:[%s0 + $0x870] sm:$0xff]
  %v285 = vld [vmem:[%s0 + $0x878] sm:$0xff]
  %v286 = vld [vmem:[%s0 + $0x880] sm:$0xff]
  %v287 = vld [vmem:[%s0 + $0x888] sm:$0xff]
  %v288 = vld [vmem:[%s0 + $0x890] sm:$0xff]
  %v289 = vld [vmem:[%s0 + $0x898] sm:$0xff]
  %v290 = vld [vmem:[%s0 + $0x8a0] sm:$0xff]
  %v291 = vld [vmem:[%s0 + $0x8a8] sm:$0xff]
  %v292 = vld [vmem:[%s0 + $0x8b0] sm:$0xff]
  %v293 = vld [vmem:[%s0 + $0x8b8] sm:$0xff]
  %v294 = vld [vmem:[%s0 + $0x8c0] sm:$0xff]
  %v295 = vld [vmem:[%s0 + $0x8c8] sm:$0xff]
  %v296 = vld [vmem:[%s0 + $0x8d0] sm:$0xff]
  %v297 = vld [vmem:[%s0 + $0x8d8] sm:$0xff]
  %v298 = vld [vmem:[%s0 + $0x8e0] sm:$0xff]
  %v299 = vld [vmem:[%s0 + $0x8e8] sm:$0xff]
  %v300 = vld [vmem:[%s0 + $0x8f0] sm:$0xff]
  %v301 = vld [vmem:[%s0 + $0x8f8] sm:$0xff]
  %v302 = vld [vmem:[%s0 + $0x900] sm:$0xff]
  %v303 = vld [vmem:[%s0 + $0x908] sm:$0xff]
  %v304 = vld [vmem:[%s0 + $0x910] sm:$0xff]
  %v305 = vld [vmem:[%s0 + $0x918] sm:$0xff]
  %v306 = vld [vmem:[%s0 + $0x920] sm:$0xff]
  %v307 = vld [vmem:[%s0 + $0x928] sm:$0xff]
  %v308 = vld [vmem:[%s0 + $0x930] sm:$0xff]
  %v309 = vld [vmem:[%s0 + $0x938] sm:$0xff]
  %v310 = vld [vmem:[%s0 + $0x940] sm:$0xff]
  %v311 = vld [vmem:[%s0 + $0x948] sm:$0xff]
  %v312 = vld [vmem:[%s0 + $0x950] sm:$0xff]
  %v313 = vld [vmem:[%s0 + $0x958] sm:$0xff]
  %v314 = vld [vmem:[%s0 + $0x960] sm:$0xff]
  %v315 = vld [vmem:[%s0 + $0x968] sm:$0xff]
  %v316 = vld [vmem:[%s0 + $0x970] sm:$0xff]
  %v317 = vld [vmem:[%s0 + $0x978] sm:$0xff]
  %v318 = vld [vmem:[%s0 + $0x980] sm:$0xff]
  %v319 = vld [vmem:[%s0 + $0x988] sm:$0xff]
  %v320 = vld [vmem:[%s0 + $0x990] sm:$0xff]
  %v321 = vld [vmem:[%s0 + $0x998] sm:$0xff]
  %v322 = vld [vmem:[%s0 + $0x9a0] sm:$0xff]
  %v323 = vld [vmem:[%s0 + $0x9a8] sm:$0xff]
  %v324 = vld [vmem:[%s0 + $0x9b0] sm:$0xff]
  %v325 = vld [vmem:[%s0 + $0x9b8] sm:$0xff]
  %v326 = vld [vmem:[%s0 + $0x9c0] sm:$0xff]
  %v327 = vld [vmem:[%s0 + $0x9c8] sm:$0xff]
  %v328 = vld [vmem:[%s0 + $0x9d0] sm:$0xff]
  %v329 = vld [vmem:[%s0 + $0x9d8] sm:$0xff]
  %v330 = vld [vmem:[%s0 + $0x9e0] sm:$0xff]
  %v331 = vld [vmem:[%s0 + $0x9e8] sm:$0xff]
  %v332 = vld [vmem:[%s0 + $0x9f0] sm:$0xff]
  %v333 = vld [vmem:[%s0 + $0x9f8] sm:$0xff]
  %v334 = vld [vmem:[%s0 + $0xa00] sm:$0xff]
  %v335 = vld [vmem:[%s0 + $0xa08] sm:$0xff]
  %v336 = vld [vmem:[%s0 + $0xa10] sm:$0xff]
  %v337 = vld [vmem:[%s0 + $0xa18] sm:$0xff]
  %v338 = vld [vmem:[%s0 + $0xa20] sm:$0xff]
  %v339 = vld [vmem:[%s0 + $0xa28] sm:$0xff]
  %v340 = vld [vmem:[%s0 + $0xa30] sm:$0xff]
  %v341 = vld [vmem:[%s0 + $0xa38] sm:$0xff]
  %v342 = vld [vmem:[%s0 + $0xa40] sm:$0xff]
  %v343 = vld [vmem:[%s0 + $0xa48] sm:$0xff]
  %v344 = vld [vmem:[%s0 + $0xa50] sm:$0xff]
  %v345 = vld [vmem:[%s0 + $0xa58] sm:$0xff]
  %v346 = vld [vmem:[%s0 + $0xa60] sm:$0xff]
  %v347 = vld [vmem:[%s0 + $0xa68] sm:$0xff]
  %v348 = vld [vmem:[%s0 + $0xa70] sm:$0xff]
  %v349 = vld [vmem:[%s0 + $0xa78] sm:$0xff]
  %v350 = vld [vmem:[%s0 + $0xa80] sm:$0xff]
  %v351 = vld [vmem:[%s0 + $0xa88] sm:$0xff]
  %v352 = vld [vmem:[%s0 + $0xa90] sm:$0xff]
  %v353 = vld [vmem:[%s0 + $0xa98] sm:$0xff]
  %v354 = vld [vmem:[%s0 + $0xaa0] sm:$0xff]
  %v355 = vld [vmem:[%s0 + $0xaa8] sm:$0xff]
  %v356 = vld [vmem:[%s0 + $0xab0] sm:$0xff]
  %v357 = vld [vmem:[%s0 + $0xab8] sm:$0xff]
  %v358 = vld [vmem:[%s0 + $0xac0] sm:$0xff]
  %v359 = vld [vmem:[%s0 + $0xac8] sm:$0xff]
  %v360 = vld [vmem:[%s0 + $0xad0] sm:$0xff]
  %v361 = vld [vmem:[%s0 + $0xad8] sm:$0xff]
  %v362 = vld [vmem:[%s0 + $0xae0] sm:$0xff]
  %v363 = vld [vmem:[%s0 + $0xae8] sm:$0xff]
  %v364 = vld [vmem:[%s0 + $0xaf0] sm:$0xff]
  %v365 = vld [vmem:[%s0 + $0xaf8] sm:$0xff]
  %v366 = vld [vmem:[%s0 + $0xb00] sm:$0xff]
  %v367 = vld [vmem:[%s0 + $0xb08] sm:$0xff]
  %v368 = vld [vmem:[%s0 + $0xb10] sm:$0xff]
  %v369 = vld [vmem:[%s0 + $0xb18] sm:$0xff]
  %v370 = vld [vmem:[%s0 + $0xb20] sm:$0xff]
  %v371 = vld [vmem:[%s0 + $0xb28] sm:$0xff]
  %v372 = vld [vmem:[%s0 + $0xb30] sm:$0xff]
  %v373 = vld [vmem:[%s0 + $0xb38] sm:$0xff]
  %v374 = vld [vmem:[%s0 + $0xb40] sm:$0xff]
  %v375 = vld [vmem:[%s0 + $0xb48] sm:$0xff]
  %v376 = vld [vmem:[%s0 + $0xb50] sm:$0xff]
  %v377 = vld [vmem:[%s0 + $0xb58] sm:$0xff]
  %v378 = vld [vmem:[%s0 + $0xb60] sm:$0xff]
  %v379 = vld [vmem:[%s0 + $0xb68] sm:$0xff]
  %v380 = vld [vmem:[%s0 + $0xb70] sm:$0xff]
  %v381 = vld [vmem:[%s0 + $0xb78] sm:$0xff]
  %v382 = vld [vmem:[%s0 + $0xb80] sm:$0xff]
  %v383 = vld [vmem:[%s0 + $0xb88] sm:$0xff]
  %v384 = vld [vmem:[%s0 + $0xb90] sm:$0xff]
  %v385 = vld [vmem:[%s0 + $0xb98] sm:$0xff]
  %v386 = vld [vmem:[%s0 + $0xba0] sm:$0xff]
  %v387 = vld [vmem:[%s0 + $0xba8] sm:$0xff]
  %v388 = vld [vmem:[%s0 + $0xbb0] sm:$0xff]
  %v389 = vld [vmem:[%s0 + $0xbb8] sm:$0xff]
  %v390 = vld [vmem:[%s0 + $0xbc0] sm:$0xff]
  %v391 = vld [vmem:[%s0 + $0xbc8] sm:$0xff]
  %v392 = vld [vmem:[%s0 + $0xbd0] sm:$0xff]
  %v393 = vld [vmem:[%s0 + $0xbd8] sm:$0xff]
  %v394 = vld [vmem:[%s0 + $0xbe0] sm:$0xff]
  %v395 = vld [vmem:[%s0 + $0xbe8] sm:$0xff]
  %v396 = vld [vmem:[%s0 + $0xbf0] sm:$0xff]
  %v397 = vld [vmem:[%s0 + $0xbf8] sm:$0xff]
  %v398 = vld [vmem:[%s0 + $0xc00] sm:$0xff]
  %v399 = vld [vmem:[%s0 + $0xc08] sm:$0xff]
  %v400 = vld [vmem:[%s0 + $0xc10] sm:$0xff]
  %v401 = vld [vmem:[%s0 + $0xc18] sm:$0xff]
  %v402 = vld [vmem:[%s0 + $0xc20] sm:$0xff]
  %v403 = vld [vmem:[%s0 + $0xc28] sm:$0xff]
  %v404 = vld [vmem:[%s0 + $0xc30] sm:$0xff]
  %v405 = vld [vmem:[%s0 + $0xc38] sm:$0xff]
  %v406 = vld [vmem:[%s0 + $0xc40] sm:$0xff]
  %v407 = vld [vmem:[%s0 + $0xc48] sm:$0xff]
  %v408 = vld [vmem:[%s0 + $0xc50] sm:$0xff]
  %v409 = vld [vmem:[%s0 + $0xc58] sm:$0xff]
  %v410 = vld [vmem:[%s0 + $0xc60] sm:$0xff]
  %v411 = vld [vmem:[%s0 + $0xc68] sm:$0xff]
  %v412 = vld [vmem:[%s0 + $0xc70] sm:$0xff]
  %v413 = vld [vmem:[%s0 + $0xc78] sm:$0xff]
  %v414 = vld [vmem:[%s0 + $0xc80] sm:$0xff]
  %v415 = vld [vmem:[%s0 + $0xc88] sm:$0xff]
  %v416 = vld [vmem:[%s0 + $0xc90] sm:$0xff]
  %v417 = vld [vmem:[%s0 + $0xc98] sm:$0xff]
  %v418 = vld [vmem:[%s0 + $0xca0] sm:$0xff]
  %v419 = vld [vmem:[%s0 + $0xca8] sm:$0xff]
  %v420 = vld [vmem:[%s0 + $0xcb0] sm:$0xff]
  %v421 = vld [vmem:[%s0 + $0xcb8] sm:$0xff]
  %v422 = vld [vmem:[%s0 + $0xcc0] sm:$0xff]
  %v423 = vld [vmem:[%s0 + $0xcc8] sm:$0xff]
  %v424 = vld [vmem:[%s0 + $0xcd0] sm:$0xff]
  %v425 = vld [vmem:[%s0 + $0xcd8] sm:$0xff]
  %v426 = vld [vmem:[%s0 + $0xce0] sm:$0xff]
  %v427 = vld [vmem:[%s0 + $0xce8] sm:$0xff]
  %v428 = vld [vmem:[%s0 + $0xcf0] sm:$0xff]
  %v429 = vld [vmem:[%s0 + $0xcf8] sm:$0xff]
  %v430 = vld [vmem:[%s0 + $0xd00] sm:$0xff]
  %v431 = vld [vmem:[%s0 + $0xd08] sm:$0xff]
  %v432 = vld [vmem:[%s0 + $0xd10] sm:$0xff]
  %v433 = vld [vmem:[%s0 + $0xd18] sm:$0xff]
  %v434 = vld [vmem:[%s0 + $0xd20] sm:$0xff]
  %v435 = vld [vmem:[%s0 + $0xd28] sm:$0xff]
  %v436 = vld [vmem:[%s0 + $0xd30] sm:$0xff]
  %v437 = vld [vmem:[%s0 + $0xd38] sm:$0xff]
  %v438 = vld [vmem:[%s0 + $0xd40] sm:$0xff]
  %v439 = vld [vmem:[%s0 + $0xd48] sm:$0xff]
  %v440 = vld [vmem:[%s0 + $0xd50] sm:$0xff]
  %v441 = vld [vmem:[%s0 + $0xd58] sm:$0xff]
  %v442 = vld [vmem:[%s0 + $0xd60] sm:$0xff]
  %v443 = vld [vmem:[%s0 + $0xd68] sm:$0xff]
  %v444 = vld [vmem:[%s0 + $0xd70] sm:$0xff]
  %v445 = vld [vmem:[%s0 + $0xd78] sm:$0xff]
  %v446 = vld [vmem:[%s0 + $0xd80] sm:$0xff]
  %v447 = vld [vmem:[%s0 + $0xd88] sm:$0xff]
  %v448 = vld [vmem:[%s0 + $0xd90] sm:$0xff]
  %v449 = vld [vmem:[%s0 + $0xd98] sm:$0xff]
  %v450 = vld [vmem:[%s0 + $0xda0] sm:$0xff]
  %v451 = vld [vmem:[%s0 + $0xda8] sm:$0xff]
  %v452 = vld [vmem:[%s0 + $0xdb0] sm:$0xff]
  %v453 = vld [vmem:[%s0 + $0xdb8] sm:$0xff]
  %v454 = vld [vmem:[%s0 + $0xdc0] sm:$0xff]
  %v455 = vld [vmem:[%s0 + $0xdc8] sm:$0xff]
  %v456 = vld [vmem:[%s0 + $0xdd0] sm:$0xff]
  %v457 = vld [vmem:[%s0 + $0xdd8] sm:$0xff]
  %v458 = vld [vmem:[%s0 + $0xde0] sm:$0xff]
  %v459 = vld [vmem:[%s0 + $0xde8] sm:$0xff]
  %v460 = vld [vmem:[%s0 + $0xdf0] sm:$0xff]
  %v461 = vld [vmem:[%s0 + $0xdf8] sm:$0xff]
  %v462 = vld [vmem:[%s0 + $0xe00] sm:$0xff]
  %v463 = vld [vmem:[%s0 + $0xe08] sm:$0xff]
  %v464 = vld [vmem:[%s0 + $0xe10] sm:$0xff]
  %v465 = vld [vmem:[%s0 + $0xe18] sm:$0xff]
  %v466 = vld [vmem:[%s0 + $0xe20] sm:$0xff]
  %v467 = vld [vmem:[%s0 + $0xe28] sm:$0xff]
  %v468 = vld [vmem:[%s0 + $0xe30] sm:$0xff]
  %v469 = vld [vmem:[%s0 + $0xe38] sm:$0xff]
  %v470 = vld [vmem:[%s0 + $0xe40] sm:$0xff]
  %v471 = vld [vmem:[%s0 + $0xe48] sm:$0xff]
  %v472 = vld [vmem:[%s0 + $0xe50] sm:$0xff]
  %v473 = vld [vmem:[%s0 + $0xe58] sm:$0xff]
  %v474 = vld [vmem:[%s0 + $0xe60] sm:$0xff]
  %v475 = vld [vmem:[%s0 + $0xe68] sm:$0xff]
  %v476 = vld [vmem:[%s0 + $0xe70] sm:$0xff]
  %v477 = vld [vmem:[%s0 + $0xe78] sm:$0xff]
  %v478 = vld [vmem:[%s0 + $0xe80] sm:$0xff]
  %v479 = vld [vmem:[%s0 + $0xe88] sm:$0xff]
  %v480 = vld [vmem:[%s0 + $0xe90] sm:$0xff]
  %v481 = vld [vmem:[%s0 + $0xe98] sm:$0xff]
  %v482 = vld [vmem:[%s0 + $0xea0] sm:$0xff]
  %v483 = vld [vmem:[%s0 + $0xea8] sm:$0xff]
  %v484 = vld [vmem:[%s0 + $0xeb0] sm:$0xff]
  %v485 = vld [vmem:[%s0 + $0xeb8] sm:$0xff]
  %v486 = vld [vmem:[%s0 + $0xec0] sm:$0xff]
  %v487 = vld [vmem:[%s0 + $0xec8] sm:$0xff]
  %v488 = vld [vmem:[%s0 + $0xed0] sm:$0xff]
  %v489 = vld [vmem:[%s0 + $0xed8] sm:$0xff]
  %v490 = vld [vmem:[%s0 + $0xee0] sm:$0xff]
  %v491 = vld [vmem:[%s0 + $0xee8] sm:$0xff]
  %v492 = vld [vmem:[%s0 + $0xef0] sm:$0xff]
  %v493 = vld [vmem:[%s0 + $0xef8] sm:$0xff]
  %v494 = vld [vmem:[%s0 + $0xf00] sm:$0xff]
  %v495 = vld [vmem:[%s0 + $0xf08] sm:$0xff]
  %v496 = vld [vmem:[%s0 + $0xf10] sm:$0xff]
  %v497 = vld [vmem:[%s0 + $0xf18] sm:$0xff]
  %v498 = vld [vmem:[%s0 + $0xf20] sm:$0xff]
  %v499 = vld [vmem:[%s0 + $0xf28] sm:$0xff]
  %v500 = vld [vmem:[%s0 + $0xf30] sm:$0xff]
  %v501 = vld [vmem:[%s0 + $0xf38] sm:$0xff]
  %v502 = vld [vmem:[%s0 + $0xf40] sm:$0xff]
  %v503 = vld [vmem:[%s0 + $0xf48] sm:$0xff]
  %v504 = vld [vmem:[%s0 + $0xf50] sm:$0xff]
  %v505 = vld [vmem:[%s0 + $0xf58] sm:$0xff]
  %v506 = vld [vmem:[%s0 + $0xf60] sm:$0xff]
  %v507 = vld [vmem:[%s0 + $0xf68] sm:$0xff]
  %v508 = vld [vmem:[%s0 + $0xf70] sm:$0xff]
  %v509 = vld [vmem:[%s0 + $0xf78] sm:$0xff]
  %v510 = vld [vmem:[%s0 + $0xf80] sm:$0xff]
  %v511 = vld [vmem:[%s0 + $0xf88] sm:$0xff]
  %v512 = vld [vmem:[%s0 + $0xf90] sm:$0xff]
  %v513 = vld [vmem:[%s0 + $0xf98] sm:$0xff]
  %v514 = vld [vmem:[%s0 + $0xfa0] sm:$0xff]
  %v515 = vld [vmem:[%s0 + $0xfa8] sm:$0xff]
  %v516 = vld [vmem:[%s0 + $0xfb0] sm:$0xff]
  %v517 = vld [vmem:[%s0 + $0xfb8] sm:$0xff]
  %v518 = vld [vmem:[%s0 + $0xfc0] sm:$0xff]
  %v519 = vld [vmem:[%s0 + $0xfc8] sm:$0xff]
  %v520 = vld [vmem:[%s0 + $0xfd0] sm:$0xff]
  %v521 = vld [vmem:[%s0 + $0xfd8] sm:$0xff]
  %v522 = vld [vmem:[%s0 + $0xfe0] sm:$0xff]
  %v523 = vld [vmem:[%s0 + $0xfe8] sm:$0xff]
  %v524 = vld [vmem:[%s0 + $0xff0] sm:$0xff]
  %v525 = vld [vmem:[%s0 + $0xff8] sm:$0xff]
  %v526 = vld [vmem:[%s0 + $0x1000] sm:$0xff]
  %v527 = vld [vmem:[%s0 + $0x1008] sm:$0xff]
  %v528 = vld [vmem:[%s0 + $0x1010] sm:$0xff]
  %v529 = vld [vmem:[%s0 + $0x1018] sm:$0xff]
  %v530 = vld [vmem:[%s0 + $0x1020] sm:$0xff]
  %v531 = vld [vmem:[%s0 + $0x1028] sm:$0xff]
  %v532 = vld [vmem:[%s0 + $0x1030] sm:$0xff]
  %v533 = vld [vmem:[%s0 + $0x1038] sm:$0xff]
  %v534 = vld [vmem:[%s0 + $0x1040] sm:$0xff]
  %v535 = vld [vmem:[%s0 + $0x1048] sm:$0xff]
  %v536 = vld [vmem:[%s0 + $0x1050] sm:$0xff]
  %v537 = vld [vmem:[%s0 + $0x1058] sm:$0xff]
  %v538 = vld [vmem:[%s0 + $0x1060] sm:$0xff]
  %v539 = vld [vmem:[%s0 + $0x1068] sm:$0xff]
  %v540 = vld [vmem:[%s0 + $0x1070] sm:$0xff]
  %v541 = vld [vmem:[%s0 + $0x1078] sm:$0xff]
  %v542 = vld [vmem:[%s0 + $0x1080] sm:$0xff]
  %v543 = vld [vmem:[%s0 + $0x1088] sm:$0xff]
  %v544 = vld [vmem:[%s0 + $0x1090] sm:$0xff]
  %v545 = vld [vmem:[%s0 + $0x1098] sm:$0xff]
  %v546 = vld [vmem:[%s0 + $0x10a0] sm:$0xff]
  %v547 = vld [vmem:[%s0 + $0x10a8] sm:$0xff]
  %v548 = vld [vmem:[%s0 + $0x10b0] sm:$0xff]
  %v549 = vld [vmem:[%s0 + $0x10b8] sm:$0xff]
  %v550 = vld [vmem:[%s0 + $0x10c0] sm:$0xff]
  %v551 = vld [vmem:[%s0 + $0x10c8] sm:$0xff]
  %v552 = vld [vmem:[%s0 + $0x10d0] sm:$0xff]
  %v553 = vld [vmem:[%s0 + $0x10d8] sm:$0xff]
  %v554 = vld [vmem:[%s0 + $0x10e0] sm:$0xff]
  %v555 = vld [vmem:[%s0 + $0x10e8] sm:$0xff]
  %v556 = vld [vmem:[%s0 + $0x10f0] sm:$0xff]
  %v557 = vld [vmem:[%s0 + $0x10f8] sm:$0xff]
  %v558 = vld [vmem:[%s0 + $0x1100] sm:$0xff]
  %v559 = vld [vmem:[%s0 + $0x1108] sm:$0xff]
  %v560 = vld [vmem:[%s0 + $0x1110] sm:$0xff]
  %v561 = vld [vmem:[%s0 + $0x1118] sm:$0xff]
  %v562 = vld [vmem:[%s0 + $0x1120] sm:$0xff]
  %v563 = vld [vmem:[%s0 + $0x1128] sm:$0xff]
  %v564 = vld [vmem:[%s0 + $0x1130] sm:$0xff]
  %v565 = vld [vmem:[%s0 + $0x1138] sm:$0xff]
  %v566 = vld [vmem:[%s0 + $0x1140] sm:$0xff]
  %v567 = vld [vmem:[%s0 + $0x1148] sm:$0xff]
  %v568 = vld [vmem:[%s0 + $0x1150] sm:$0xff]
  %v569 = vld [vmem:[%s0 + $0x1158] sm:$0xff]
  %v570 = vld [vmem:[%s0 + $0x1160] sm:$0xff]
  %v571 = vld [vmem:[%s0 + $0x1168] sm:$0xff]
  %v572 = vld [vmem:[%s0 + $0x1170] sm:$0xff]
  %v573 = vld [vmem:[%s0 + $0x1178] sm:$0xff]
  %v574 = vld [vmem:[%s0 + $0x1180] sm:$0xff]
  %v575 = vld [vmem:[%s0 + $0x1188] sm:$0xff]
  %v576 = vld [vmem:[%s0 + $0x1190] sm:$0xff]
  %v577 = vld [vmem:[%s0 + $0x1198] sm:$0xff]
  %v578 = vld [vmem:[%s0 + $0x11a0] sm:$0xff]
  %v579 = vld [vmem:[%s0 + $0x11a8] sm:$0xff]
  %v580 = vld [vmem:[%s0 + $0x11b0] sm:$0xff]
  %v581 = vld [vmem:[%s0 + $0x11b8] sm:$0xff]
  %v582 = vld [vmem:[%s0 + $0x11c0] sm:$0xff]
  %v583 = vld [vmem:[%s0 + $0x11c8] sm:$0xff]
  %v584 = vld [vmem:[%s0 + $0x11d0] sm:$0xff]
  %v585 = vld [vmem:[%s0 + $0x11d8] sm:$0xff]
  %v586 = vld [vmem:[%s0 + $0x11e0] sm:$0xff]
  %v587 = vld [vmem:[%s0 + $0x11e8] sm:$0xff]
  %v588 = vld [vmem:[%s0 + $0x11f0] sm:$0xff]
  %v589 = vld [vmem:[%s0 + $0x11f8] sm:$0xff]
  %v590 = vld [vmem:[%s1] sm:$0xff]
  %v591 = vld [vmem:[%s1 + $0x8] sm:$0xff]
  %v592 = vld [vmem:[%s1 + $0x10] sm:$0xff]
  %v593 = vld [vmem:[%s1 + $0x18] sm:$0xff]
  %vm594 = vcmask 261120
  %v596 = vsel %vm594, %v14, 0
  %v599 = vsel %vm594, %v15, 0
  %v602 = vsel %vm594, %v16, 0
  %v605 = vsel %vm594, %v17, 0
  %v608 = vsel %vm594, %v18, 0
  %v611 = vsel %vm594, %v19, 0
  %v614 = vsel %vm594, %v20, 0
  %v617 = vsel %vm594, %v21, 0
  %v620 = vsel %vm594, %v22, 0
  %v623 = vsel %vm594, %v23, 0
  %v626 = vsel %vm594, %v24, 0
  %v629 = vsel %vm594, %v25, 0
  %v632 = vsel %vm594, %v26, 0
  %v635 = vsel %vm594, %v27, 0
  %v638 = vsel %vm594, %v28, 0
  %v641 = vsel %vm594, %v29, 0
  %v644 = vsel %vm594, %v30, 0
  %v647 = vsel %vm594, %v31, 0
  %v650 = vsel %vm594, %v32, 0
  %v653 = vsel %vm594, %v33, 0
  %v656 = vsel %vm594, %v34, 0
  %v659 = vsel %vm594, %v35, 0
  %v662 = vsel %vm594, %v36, 0
  %v665 = vsel %vm594, %v37, 0
  %v668 = vsel %vm594, %v38, 0
  %v671 = vsel %vm594, %v39, 0
  %v674 = vsel %vm594, %v40, 0
  %v677 = vsel %vm594, %v41, 0
  %v680 = vsel %vm594, %v42, 0
  %v683 = vsel %vm594, %v43, 0
  %v686 = vsel %vm594, %v44, 0
  %v689 = vsel %vm594, %v45, 0
  %v692 = vsel %vm594, %v46, 0
  %v695 = vsel %vm594, %v47, 0
  %v698 = vsel %vm594, %v48, 0
  %v701 = vsel %vm594, %v49, 0
  %v704 = vsel %vm594, %v50, 0
  %v707 = vsel %vm594, %v51, 0
  %v710 = vsel %vm594, %v52, 0
  %v713 = vsel %vm594, %v53, 0
  %v716 = vsel %vm594, %v54, 0
  %v719 = vsel %vm594, %v55, 0
  %v722 = vsel %vm594, %v56, 0
  %v725 = vsel %vm594, %v57, 0
  %v728 = vsel %vm594, %v58, 0
  %v731 = vsel %vm594, %v59, 0
  %v734 = vsel %vm594, %v60, 0
  %v737 = vsel %vm594, %v61, 0
  %v740 = vsel %vm594, %v62, 0
  %v743 = vsel %vm594, %v63, 0
  %v746 = vsel %vm594, %v64, 0
  %v749 = vsel %vm594, %v65, 0
  %v752 = vsel %vm594, %v66, 0
  %v755 = vsel %vm594, %v67, 0
  %v758 = vsel %vm594, %v68, 0
  %v761 = vsel %vm594, %v69, 0
  %v764 = vsel %vm594, %v70, 0
  %v767 = vsel %vm594, %v71, 0
  %v770 = vsel %vm594, %v72, 0
  %v773 = vsel %vm594, %v73, 0
  %v776 = vsel %vm594, %v74, 0
  %v779 = vsel %vm594, %v75, 0
  %v782 = vsel %vm594, %v76, 0
  %v785 = vsel %vm594, %v77, 0
  %v788 = vsel %vm594, %v78, 0
  %v791 = vsel %vm594, %v79, 0
  %v794 = vsel %vm594, %v80, 0
  %v797 = vsel %vm594, %v81, 0
  %v800 = vsel %vm594, %v82, 0
  %v803 = vsel %vm594, %v83, 0
  %v806 = vsel %vm594, %v84, 0
  %v809 = vsel %vm594, %v85, 0
  %v812 = vsel %vm594, %v86, 0
  %v815 = vsel %vm594, %v87, 0
  %v818 = vsel %vm594, %v88, 0
  %v821 = vsel %vm594, %v89, 0
  %v824 = vsel %vm594, %v90, 0
  %v827 = vsel %vm594, %v91, 0
  %v830 = vsel %vm594, %v92, 0
  %v833 = vsel %vm594, %v93, 0
  %v836 = vsel %vm594, %v94, 0
  %v839 = vsel %vm594, %v95, 0
  %v842 = vsel %vm594, %v96, 0
  %v845 = vsel %vm594, %v97, 0
  %v848 = vsel %vm594, %v98, 0
  %v851 = vsel %vm594, %v99, 0
  %v854 = vsel %vm594, %v100, 0
  %v857 = vsel %vm594, %v101, 0
  %v860 = vsel %vm594, %v102, 0
  %v863 = vsel %vm594, %v103, 0
  %v866 = vsel %vm594, %v104, 0
  %v869 = vsel %vm594, %v105, 0
  %v872 = vsel %vm594, %v106, 0
  %v875 = vsel %vm594, %v107, 0
  %v878 = vsel %vm594, %v108, 0
  %v881 = vsel %vm594, %v109, 0
  %v884 = vsel %vm594, %v110, 0
  %v887 = vsel %vm594, %v111, 0
  %v890 = vsel %vm594, %v112, 0
  %v893 = vsel %vm594, %v113, 0
  %v896 = vsel %vm594, %v114, 0
  %v899 = vsel %vm594, %v115, 0
  %v902 = vsel %vm594, %v116, 0
  %v905 = vsel %vm594, %v117, 0
  %v908 = vsel %vm594, %v118, 0
  %v911 = vsel %vm594, %v119, 0
  %v914 = vsel %vm594, %v120, 0
  %v917 = vsel %vm594, %v121, 0
  %v920 = vsel %vm594, %v122, 0
  %v923 = vsel %vm594, %v123, 0
  %v926 = vsel %vm594, %v124, 0
  %v929 = vsel %vm594, %v125, 0
  %v932 = vsel %vm594, %v126, 0
  %v935 = vsel %vm594, %v127, 0
  %v938 = vsel %vm594, %v128, 0
  %v941 = vsel %vm594, %v129, 0
  %v944 = vsel %vm594, %v130, 0
  %v947 = vsel %vm594, %v131, 0
  %v950 = vsel %vm594, %v132, 0
  %v953 = vsel %vm594, %v133, 0
  %v956 = vsel %vm594, %v134, 0
  %v959 = vsel %vm594, %v135, 0
  %v962 = vsel %vm594, %v136, 0
  %v965 = vsel %vm594, %v137, 0
  %v968 = vsel %vm594, %v138, 0
  %v971 = vsel %vm594, %v139, 0
  %v974 = vsel %vm594, %v140, 0
  %v977 = vsel %vm594, %v141, 0
  %v980 = vsel %vm594, %v142, 0
  %v983 = vsel %vm594, %v143, 0
  %v986 = vsel %vm594, %v144, 0
  %v989 = vsel %vm594, %v145, 0
  %v992 = vsel %vm594, %v146, 0
  %v995 = vsel %vm594, %v147, 0
  %v998 = vsel %vm594, %v148, 0
  %v1001 = vsel %vm594, %v149, 0
  %v1004 = vsel %vm594, %v150, 0
  %v1007 = vsel %vm594, %v151, 0
  %v1010 = vsel %vm594, %v152, 0
  %v1013 = vsel %vm594, %v153, 0
  %v1016 = vsel %vm594, %v154, 0
  %v1019 = vsel %vm594, %v155, 0
  %v1022 = vsel %vm594, %v156, 0
  %v1025 = vsel %vm594, %v157, 0
  %v1028 = vsel %vm594, %v158, 0
  %v1031 = vsel %vm594, %v159, 0
  %v1034 = vsel %vm594, %v160, 0
  %v1037 = vsel %vm594, %v161, 0
  %v1040 = vsel %vm594, %v162, 0
  %v1043 = vsel %vm594, %v163, 0
  %v1046 = vsel %vm594, %v164, 0
  %v1049 = vsel %vm594, %v165, 0
  %v1052 = vsel %vm594, %v166, 0
  %v1055 = vsel %vm594, %v167, 0
  %v1058 = vsel %vm594, %v168, 0
  %v1061 = vsel %vm594, %v169, 0
  %v1064 = vsel %vm594, %v170, 0
  %v1067 = vsel %vm594, %v171, 0
  %v1070 = vsel %vm594, %v172, 0
  %v1073 = vsel %vm594, %v173, 0
  %v1076 = vsel %vm594, %v174, 0
  %v1079 = vsel %vm594, %v175, 0
  %v1082 = vsel %vm594, %v176, 0
  %v1085 = vsel %vm594, %v177, 0
  %v1088 = vsel %vm594, %v178, 0
  %v1091 = vsel %vm594, %v179, 0
  %v1094 = vsel %vm594, %v180, 0
  %v1097 = vsel %vm594, %v181, 0
  %v1100 = vsel %vm594, %v182, 0
  %v1103 = vsel %vm594, %v183, 0
  %v1106 = vsel %vm594, %v184, 0
  %v1109 = vsel %vm594, %v185, 0
  %v1112 = vsel %vm594, %v186, 0
  %v1115 = vsel %vm594, %v187, 0
  %v1118 = vsel %vm594, %v188, 0
  %v1121 = vsel %vm594, %v189, 0
  %v1124 = vsel %vm594, %v190, 0
  %v1127 = vsel %vm594, %v191, 0
  %v1130 = vsel %vm594, %v192, 0
  %v1133 = vsel %vm594, %v193, 0
  %v1136 = vsel %vm594, %v194, 0
  %v1139 = vsel %vm594, %v195, 0
  %v1142 = vsel %vm594, %v196, 0
  %v1145 = vsel %vm594, %v197, 0
  %v1148 = vsel %vm594, %v198, 0
  %v1151 = vsel %vm594, %v199, 0
  %v1154 = vsel %vm594, %v200, 0
  %v1157 = vsel %vm594, %v201, 0
  %v1160 = vsel %vm594, %v202, 0
  %v1163 = vsel %vm594, %v203, 0
  %v1166 = vsel %vm594, %v204, 0
  %v1169 = vsel %vm594, %v205, 0
  %v1172 = vsel %vm594, %v206, 0
  %v1175 = vsel %vm594, %v207, 0
  %v1178 = vsel %vm594, %v208, 0
  %v1181 = vsel %vm594, %v209, 0
  %v1184 = vsel %vm594, %v210, 0
  %v1187 = vsel %vm594, %v211, 0
  %v1190 = vsel %vm594, %v212, 0
  %v1193 = vsel %vm594, %v213, 0
  %v1196 = vsel %vm594, %v214, 0
  %v1199 = vsel %vm594, %v215, 0
  %v1202 = vsel %vm594, %v216, 0
  %v1205 = vsel %vm594, %v217, 0
  %v1208 = vsel %vm594, %v218, 0
  %v1211 = vsel %vm594, %v219, 0
  %v1214 = vsel %vm594, %v220, 0
  %v1217 = vsel %vm594, %v221, 0
  %v1220 = vsel %vm594, %v222, 0
  %v1223 = vsel %vm594, %v223, 0
  %v1226 = vsel %vm594, %v224, 0
  %v1229 = vsel %vm594, %v225, 0
  %v1232 = vsel %vm594, %v226, 0
  %v1235 = vsel %vm594, %v227, 0
  %v1238 = vsel %vm594, %v228, 0
  %v1241 = vsel %vm594, %v229, 0
  %v1244 = vsel %vm594, %v230, 0
  %v1247 = vsel %vm594, %v231, 0
  %v1250 = vsel %vm594, %v232, 0
  %v1253 = vsel %vm594, %v233, 0
  %v1256 = vsel %vm594, %v234, 0
  %v1259 = vsel %vm594, %v235, 0
  %v1262 = vsel %vm594, %v236, 0
  %v1265 = vsel %vm594, %v237, 0
  %v1268 = vsel %vm594, %v238, 0
  %v1271 = vsel %vm594, %v239, 0
  %v1274 = vsel %vm594, %v240, 0
  %v1277 = vsel %vm594, %v241, 0
  %v1280 = vsel %vm594, %v242, 0
  %v1283 = vsel %vm594, %v243, 0
  %v1286 = vsel %vm594, %v244, 0
  %v1289 = vsel %vm594, %v245, 0
  %v1292 = vsel %vm594, %v246, 0
  %v1295 = vsel %vm594, %v247, 0
  %v1298 = vsel %vm594, %v248, 0
  %v1301 = vsel %vm594, %v249, 0
  %v1304 = vsel %vm594, %v250, 0
  %v1307 = vsel %vm594, %v251, 0
  %v1310 = vsel %vm594, %v252, 0
  %v1313 = vsel %vm594, %v253, 0
  %v1316 = vsel %vm594, %v254, 0
  %v1319 = vsel %vm594, %v255, 0
  %v1322 = vsel %vm594, %v256, 0
  %v1325 = vsel %vm594, %v257, 0
  %v1328 = vsel %vm594, %v258, 0
  %v1331 = vsel %vm594, %v259, 0
  %v1334 = vsel %vm594, %v260, 0
  %v1337 = vsel %vm594, %v261, 0
  %v1340 = vsel %vm594, %v262, 0
  %v1343 = vsel %vm594, %v263, 0
  %v1346 = vsel %vm594, %v264, 0
  %v1349 = vsel %vm594, %v265, 0
  %v1352 = vsel %vm594, %v266, 0
  %v1355 = vsel %vm594, %v267, 0
  %v1358 = vsel %vm594, %v268, 0
  %v1361 = vsel %vm594, %v269, 0
  %v1364 = vsel %vm594, %v270, 0
  %v1367 = vsel %vm594, %v271, 0
  %v1370 = vsel %vm594, %v272, 0
  %v1373 = vsel %vm594, %v273, 0
  %v1376 = vsel %vm594, %v274, 0
  %v1379 = vsel %vm594, %v275, 0
  %v1382 = vsel %vm594, %v276, 0
  %v1385 = vsel %vm594, %v277, 0
  %v1388 = vsel %vm594, %v278, 0
  %v1391 = vsel %vm594, %v279, 0
  %v1394 = vsel %vm594, %v280, 0
  %v1397 = vsel %vm594, %v281, 0
  %v1400 = vsel %vm594, %v282, 0
  %v1403 = vsel %vm594, %v283, 0
  %v1406 = vsel %vm594, %v284, 0
  %v1409 = vsel %vm594, %v285, 0
  %v1412 = vsel %vm594, %v286, 0
  %v1415 = vsel %vm594, %v287, 0
  %v1418 = vsel %vm594, %v288, 0
  %v1421 = vsel %vm594, %v289, 0
  %v1424 = vsel %vm594, %v290, 0
  %v1427 = vsel %vm594, %v291, 0
  %v1430 = vsel %vm594, %v292, 0
  %v1433 = vsel %vm594, %v293, 0
  %v1436 = vsel %vm594, %v294, 0
  %v1439 = vsel %vm594, %v295, 0
  %v1442 = vsel %vm594, %v296, 0
  %v1445 = vsel %vm594, %v297, 0
  %v1448 = vsel %vm594, %v298, 0
  %v1451 = vsel %vm594, %v299, 0
  %v1454 = vsel %vm594, %v300, 0
  %v1457 = vsel %vm594, %v301, 0
  %v1460 = vsel %vm594, %v302, 0
  %v1463 = vsel %vm594, %v303, 0
  %v1466 = vsel %vm594, %v304, 0
  %v1469 = vsel %vm594, %v305, 0
  %v1472 = vsel %vm594, %v306, 0
  %v1475 = vsel %vm594, %v307, 0
  %v1478 = vsel %vm594, %v308, 0
  %v1481 = vsel %vm594, %v309, 0
  %v1484 = vsel %vm594, %v310, 0
  %v1487 = vsel %vm594, %v311, 0
  %v1490 = vsel %vm594, %v312, 0
  %v1493 = vsel %vm594, %v313, 0
  %v1496 = vsel %vm594, %v314, 0
  %v1499 = vsel %vm594, %v315, 0
  %v1502 = vsel %vm594, %v316, 0
  %v1505 = vsel %vm594, %v317, 0
  %v1508 = vsel %vm594, %v318, 0
  %v1511 = vsel %vm594, %v319, 0
  %v1514 = vsel %vm594, %v320, 0
  %v1517 = vsel %vm594, %v321, 0
  %v1520 = vsel %vm594, %v322, 0
  %v1523 = vsel %vm594, %v323, 0
  %v1526 = vsel %vm594, %v324, 0
  %v1529 = vsel %vm594, %v325, 0
  %v1532 = vsel %vm594, %v326, 0
  %v1535 = vsel %vm594, %v327, 0
  %v1538 = vsel %vm594, %v328, 0
  %v1541 = vsel %vm594, %v329, 0
  %v1544 = vsel %vm594, %v330, 0
  %v1547 = vsel %vm594, %v331, 0
  %v1550 = vsel %vm594, %v332, 0
  %v1553 = vsel %vm594, %v333, 0
  %v1556 = vsel %vm594, %v334, 0
  %v1559 = vsel %vm594, %v335, 0
  %v1562 = vsel %vm594, %v336, 0
  %v1565 = vsel %vm594, %v337, 0
  %v1568 = vsel %vm594, %v338, 0
  %v1571 = vsel %vm594, %v339, 0
  %v1574 = vsel %vm594, %v340, 0
  %v1577 = vsel %vm594, %v341, 0
  %v1580 = vsel %vm594, %v342, 0
  %v1583 = vsel %vm594, %v343, 0
  %v1586 = vsel %vm594, %v344, 0
  %v1589 = vsel %vm594, %v345, 0
  %v1592 = vsel %vm594, %v346, 0
  %v1595 = vsel %vm594, %v347, 0
  %v1598 = vsel %vm594, %v348, 0
  %v1601 = vsel %vm594, %v349, 0
  %v1604 = vsel %vm594, %v350, 0
  %v1607 = vsel %vm594, %v351, 0
  %v1610 = vsel %vm594, %v352, 0
  %v1613 = vsel %vm594, %v353, 0
  %v1616 = vsel %vm594, %v354, 0
  %v1619 = vsel %vm594, %v355, 0
  %v1622 = vsel %vm594, %v356, 0
  %v1625 = vsel %vm594, %v357, 0
  %v1628 = vsel %vm594, %v358, 0
  %v1631 = vsel %vm594, %v359, 0
  %v1634 = vsel %vm594, %v360, 0
  %v1637 = vsel %vm594, %v361, 0
  %v1640 = vsel %vm594, %v362, 0
  %v1643 = vsel %vm594, %v363, 0
  %v1646 = vsel %vm594, %v364, 0
  %v1649 = vsel %vm594, %v365, 0
  %v1652 = vsel %vm594, %v366, 0
  %v1655 = vsel %vm594, %v367, 0
  %v1658 = vsel %vm594, %v368, 0
  %v1661 = vsel %vm594, %v369, 0
  %v1664 = vsel %vm594, %v370, 0
  %v1667 = vsel %vm594, %v371, 0
  %v1670 = vsel %vm594, %v372, 0
  %v1673 = vsel %vm594, %v373, 0
  %v1676 = vsel %vm594, %v374, 0
  %v1679 = vsel %vm594, %v375, 0
  %v1682 = vsel %vm594, %v376, 0
  %v1685 = vsel %vm594, %v377, 0
  %v1688 = vsel %vm594, %v378, 0
  %v1691 = vsel %vm594, %v379, 0
  %v1694 = vsel %vm594, %v380, 0
  %v1697 = vsel %vm594, %v381, 0
  %v1700 = vsel %vm594, %v382, 0
  %v1703 = vsel %vm594, %v383, 0
  %v1706 = vsel %vm594, %v384, 0
  %v1709 = vsel %vm594, %v385, 0
  %v1712 = vsel %vm594, %v386, 0
  %v1715 = vsel %vm594, %v387, 0
  %v1718 = vsel %vm594, %v388, 0
  %v1721 = vsel %vm594, %v389, 0
  %v1724 = vsel %vm594, %v390, 0
  %v1727 = vsel %vm594, %v391, 0
  %v1730 = vsel %vm594, %v392, 0
  %v1733 = vsel %vm594, %v393, 0
  %v1736 = vsel %vm594, %v394, 0
  %v1739 = vsel %vm594, %v395, 0
  %v1742 = vsel %vm594, %v396, 0
  %v1745 = vsel %vm594, %v397, 0
  %v1748 = vsel %vm594, %v398, 0
  %v1751 = vsel %vm594, %v399, 0
  %v1754 = vsel %vm594, %v400, 0
  %v1757 = vsel %vm594, %v401, 0
  %v1760 = vsel %vm594, %v402, 0
  %v1763 = vsel %vm594, %v403, 0
  %v1766 = vsel %vm594, %v404, 0
  %v1769 = vsel %vm594, %v405, 0
  %v1772 = vsel %vm594, %v406, 0
  %v1775 = vsel %vm594, %v407, 0
  %v1778 = vsel %vm594, %v408, 0
  %v1781 = vsel %vm594, %v409, 0
  %v1784 = vsel %vm594, %v410, 0
  %v1787 = vsel %vm594, %v411, 0
  %v1790 = vsel %vm594, %v412, 0
  %v1793 = vsel %vm594, %v413, 0
  %v1796 = vsel %vm594, %v414, 0
  %v1799 = vsel %vm594, %v415, 0
  %v1802 = vsel %vm594, %v416, 0
  %v1805 = vsel %vm594, %v417, 0
  %v1808 = vsel %vm594, %v418, 0
  %v1811 = vsel %vm594, %v419, 0
  %v1814 = vsel %vm594, %v420, 0
  %v1817 = vsel %vm594, %v421, 0
  %v1820 = vsel %vm594, %v422, 0
  %v1823 = vsel %vm594, %v423, 0
  %v1826 = vsel %vm594, %v424, 0
  %v1829 = vsel %vm594, %v425, 0
  %v1832 = vsel %vm594, %v426, 0
  %v1835 = vsel %vm594, %v427, 0
  %v1838 = vsel %vm594, %v428, 0
  %v1841 = vsel %vm594, %v429, 0
  %v1844 = vsel %vm594, %v430, 0
  %v1847 = vsel %vm594, %v431, 0
  %v1850 = vsel %vm594, %v432, 0
  %v1853 = vsel %vm594, %v433, 0
  %v1856 = vsel %vm594, %v434, 0
  %v1859 = vsel %vm594, %v435, 0
  %v1862 = vsel %vm594, %v436, 0
  %v1865 = vsel %vm594, %v437, 0
  %v1868 = vsel %vm594, %v438, 0
  %v1871 = vsel %vm594, %v439, 0
  %v1874 = vsel %vm594, %v440, 0
  %v1877 = vsel %vm594, %v441, 0
  %v1880 = vsel %vm594, %v442, 0
  %v1883 = vsel %vm594, %v443, 0
  %v1886 = vsel %vm594, %v444, 0
  %v1889 = vsel %vm594, %v445, 0
  %v1892 = vsel %vm594, %v446, 0
  %v1895 = vsel %vm594, %v447, 0
  %v1898 = vsel %vm594, %v448, 0
  %v1901 = vsel %vm594, %v449, 0
  %v1904 = vsel %vm594, %v450, 0
  %v1907 = vsel %vm594, %v451, 0
  %v1910 = vsel %vm594, %v452, 0
  %v1913 = vsel %vm594, %v453, 0
  %v1916 = vsel %vm594, %v454, 0
  %v1919 = vsel %vm594, %v455, 0
  %v1922 = vsel %vm594, %v456, 0
  %v1925 = vsel %vm594, %v457, 0
  %v1928 = vsel %vm594, %v458, 0
  %v1931 = vsel %vm594, %v459, 0
  %v1934 = vsel %vm594, %v460, 0
  %v1937 = vsel %vm594, %v461, 0
  %v1940 = vsel %vm594, %v462, 0
  %v1943 = vsel %vm594, %v463, 0
  %v1946 = vsel %vm594, %v464, 0
  %v1949 = vsel %vm594, %v465, 0
  %v1952 = vsel %vm594, %v466, 0
  %v1955 = vsel %vm594, %v467, 0
  %v1958 = vsel %vm594, %v468, 0
  %v1961 = vsel %vm594, %v469, 0
  %v1964 = vsel %vm594, %v470, 0
  %v1967 = vsel %vm594, %v471, 0
  %v1970 = vsel %vm594, %v472, 0
  %v1973 = vsel %vm594, %v473, 0
  %v1976 = vsel %vm594, %v474, 0
  %v1979 = vsel %vm594, %v475, 0
  %v1982 = vsel %vm594, %v476, 0
  %v1985 = vsel %vm594, %v477, 0
  %v1988 = vsel %vm594, %v478, 0
  %v1991 = vsel %vm594, %v479, 0
  %v1994 = vsel %vm594, %v480, 0
  %v1997 = vsel %vm594, %v481, 0
  %v2000 = vsel %vm594, %v482, 0
  %v2003 = vsel %vm594, %v483, 0
  %v2006 = vsel %vm594, %v484, 0
  %v2009 = vsel %vm594, %v485, 0
  %v2012 = vsel %vm594, %v486, 0
  %v2015 = vsel %vm594, %v487, 0
  %v2018 = vsel %vm594, %v488, 0
  %v2021 = vsel %vm594, %v489, 0
  %v2024 = vsel %vm594, %v490, 0
  %v2027 = vsel %vm594, %v491, 0
  %v2030 = vsel %vm594, %v492, 0
  %v2033 = vsel %vm594, %v493, 0
  %v2036 = vsel %vm594, %v494, 0
  %v2039 = vsel %vm594, %v495, 0
  %v2042 = vsel %vm594, %v496, 0
  %v2045 = vsel %vm594, %v497, 0
  %v2048 = vsel %vm594, %v498, 0
  %v2051 = vsel %vm594, %v499, 0
  %v2054 = vsel %vm594, %v500, 0
  %v2057 = vsel %vm594, %v501, 0
  %v2060 = vsel %vm594, %v502, 0
  %v2063 = vsel %vm594, %v503, 0
  %v2066 = vsel %vm594, %v504, 0
  %v2069 = vsel %vm594, %v505, 0
  %v2072 = vsel %vm594, %v506, 0
  %v2075 = vsel %vm594, %v507, 0
  %v2078 = vsel %vm594, %v508, 0
  %v2081 = vsel %vm594, %v509, 0
  %v2084 = vsel %vm594, %v510, 0
  %v2087 = vsel %vm594, %v511, 0
  %v2090 = vsel %vm594, %v512, 0
  %v2093 = vsel %vm594, %v513, 0
  %v2096 = vsel %vm594, %v514, 0
  %v2099 = vsel %vm594, %v515, 0
  %v2102 = vsel %vm594, %v516, 0
  %v2105 = vsel %vm594, %v517, 0
  %v2108 = vsel %vm594, %v518, 0
  %v2111 = vsel %vm594, %v519, 0
  %v2114 = vsel %vm594, %v520, 0
  %v2117 = vsel %vm594, %v521, 0
  %v2120 = vsel %vm594, %v522, 0
  %v2123 = vsel %vm594, %v523, 0
  %v2126 = vsel %vm594, %v524, 0
  %v2129 = vsel %vm594, %v525, 0
  %v2132 = vsel %vm594, %v526, 0
  %v2135 = vsel %vm594, %v527, 0
  %v2138 = vsel %vm594, %v528, 0
  %v2141 = vsel %vm594, %v529, 0
  %v2144 = vsel %vm594, %v530, 0
  %v2147 = vsel %vm594, %v531, 0
  %v2150 = vsel %vm594, %v532, 0
  %v2153 = vsel %vm594, %v533, 0
  %v2156 = vsel %vm594, %v534, 0
  %v2159 = vsel %vm594, %v535, 0
  %v2162 = vsel %vm594, %v536, 0
  %v2165 = vsel %vm594, %v537, 0
  %v2168 = vsel %vm594, %v538, 0
  %v2171 = vsel %vm594, %v539, 0
  %v2174 = vsel %vm594, %v540, 0
  %v2177 = vsel %vm594, %v541, 0
  %v2180 = vsel %vm594, %v542, 0
  %v2183 = vsel %vm594, %v543, 0
  %v2186 = vsel %vm594, %v544, 0
  %v2189 = vsel %vm594, %v545, 0
  %v2192 = vsel %vm594, %v546, 0
  %v2195 = vsel %vm594, %v547, 0
  %v2198 = vsel %vm594, %v548, 0
  %v2201 = vsel %vm594, %v549, 0
  %v2204 = vsel %vm594, %v550, 0
  %v2207 = vsel %vm594, %v551, 0
  %v2210 = vsel %vm594, %v552, 0
  %v2213 = vsel %vm594, %v553, 0
  %v2216 = vsel %vm594, %v554, 0
  %v2219 = vsel %vm594, %v555, 0
  %v2222 = vsel %vm594, %v556, 0
  %v2225 = vsel %vm594, %v557, 0
  %v2228 = vsel %vm594, %v558, 0
  %v2231 = vsel %vm594, %v559, 0
  %v2234 = vsel %vm594, %v560, 0
  %v2237 = vsel %vm594, %v561, 0
  %v2240 = vsel %vm594, %v562, 0
  %v2243 = vsel %vm594, %v563, 0
  %v2246 = vsel %vm594, %v564, 0
  %v2249 = vsel %vm594, %v565, 0
  %v2252 = vsel %vm594, %v566, 0
  %v2255 = vsel %vm594, %v567, 0
  %v2258 = vsel %vm594, %v568, 0
  %v2261 = vsel %vm594, %v569, 0
  %v2264 = vsel %vm594, %v570, 0
  %v2267 = vsel %vm594, %v571, 0
  %v2270 = vsel %vm594, %v572, 0
  %v2273 = vsel %vm594, %v573, 0
  %v2276 = vsel %vm594, %v574, 0
  %v2279 = vsel %vm594, %v575, 0
  %v2282 = vsel %vm594, %v576, 0
  %v2285 = vsel %vm594, %v577, 0
  %v2288 = vsel %vm594, %v578, 0
  %v2291 = vsel %vm594, %v579, 0
  %v2294 = vsel %vm594, %v580, 0
  %v2297 = vsel %vm594, %v581, 0
  %v2300 = vsel %vm594, %v582, 0
  %v2303 = vsel %vm594, %v583, 0
  %v2306 = vsel %vm594, %v584, 0
  %v2309 = vsel %vm594, %v585, 0
  %v2312 = vsel %vm594, %v586, 0
  %v2315 = vsel %vm594, %v587, 0
  %v2318 = vsel %vm594, %v588, 0
  %v2321 = vsel %vm594, %v589, 0
  %2323 = vmatpush.msra.mxu0 0.0
  %2324 = vmatpush.msra.mxu0 0.0
  %2325 = vmatpush.msra.mxu0 0.0
  %2326 = vmatpush.msra.mxu0 0.0
  %2327 = vmatpush.msra.mxu0 0.0
  %2328 = vmatpush.msra.mxu0 0.0
  %2329 = vmatpush.msra.mxu0 0.0
  %2330 = vmatpush.msra.mxu0 0.0
  %2331 = vmatpush.msra.mxu0 0.0
  %2332 = vmatpush.msra.mxu0 0.0
  %2333 = vmatpush.msra.mxu0 0.0
  %2334 = vmatpush.msra.mxu0 0.0
  %2335 = vmatpush.msra.mxu0 %v593
  %2336 = vmatpush.msra.mxu0 %v592
  %2337 = vmatpush.msra.mxu0 %v591
  %2338 = vmatpush.msra.mxu0 %v590
  %2339 = vmatmul.f32.gmra.mxu0 %v596
  %v2340 = vpop.f32.mrf.mxu0
  %v2341 = vadd.f32 0.0, %v2340
  %2342 = vmatmul.f32.gmra.mxu0 %v599
  %v2343 = vpop.f32.mrf.mxu0
  %v2344 = vadd.f32 0.0, %v2343
  %2345 = vmatmul.f32.gmra.mxu0 %v602
  %v2346 = vpop.f32.mrf.mxu0
  %v2347 = vadd.f32 0.0, %v2346
  %2348 = vmatmul.f32.gmra.mxu0 %v605
  %v2349 = vpop.f32.mrf.mxu0
  %v2350 = vadd.f32 0.0, %v2349
  %2351 = vmatmul.f32.gmra.mxu0 %v608
  %v2352 = vpop.f32.mrf.mxu0
  %v2353 = vadd.f32 0.0, %v2352
  %2354 = vmatmul.f32.gmra.mxu0 %v611
  %v2355 = vpop.f32.mrf.mxu0
  %v2356 = vadd.f32 0.0, %v2355
  %2357 = vmatmul.f32.gmra.mxu0 %v614
  %v2358 = vpop.f32.mrf.mxu0
  %v2359 = vadd.f32 0.0, %v2358
  %2360 = vmatmul.f32.gmra.mxu0 %v617
  %v2361 = vpop.f32.mrf.mxu0
  %v2362 = vadd.f32 0.0, %v2361
  %2363 = vmatmul.f32.gmra.mxu0 %v620
  %v2364 = vpop.f32.mrf.mxu0
  %v2365 = vadd.f32 0.0, %v2364
  %2366 = vmatmul.f32.gmra.mxu0 %v623
  %v2367 = vpop.f32.mrf.mxu0
  %v2368 = vadd.f32 0.0, %v2367
  %2369 = vmatmul.f32.gmra.mxu0 %v626
  %v2370 = vpop.f32.mrf.mxu0
  %v2371 = vadd.f32 0.0, %v2370
  %2372 = vmatmul.f32.gmra.mxu0 %v629
  %v2373 = vpop.f32.mrf.mxu0
  %v2374 = vadd.f32 0.0, %v2373
  %2375 = vmatmul.f32.gmra.mxu0 %v632
  %v2376 = vpop.f32.mrf.mxu0
  %v2377 = vadd.f32 0.0, %v2376
  %2378 = vmatmul.f32.gmra.mxu0 %v635
  %v2379 = vpop.f32.mrf.mxu0
  %v2380 = vadd.f32 0.0, %v2379
  %2381 = vmatmul.f32.gmra.mxu0 %v638
  %v2382 = vpop.f32.mrf.mxu0
  %v2383 = vadd.f32 0.0, %v2382
  %2384 = vmatmul.f32.gmra.mxu0 %v641
  %v2385 = vpop.f32.mrf.mxu0
  %v2386 = vadd.f32 0.0, %v2385
  %2387 = vmatmul.f32.gmra.mxu0 %v644
  %v2388 = vpop.f32.mrf.mxu0
  %v2389 = vadd.f32 0.0, %v2388
  %2390 = vmatmul.f32.gmra.mxu0 %v647
  %v2391 = vpop.f32.mrf.mxu0
  %v2392 = vadd.f32 0.0, %v2391
  %2393 = vmatmul.f32.gmra.mxu0 %v650
  %v2394 = vpop.f32.mrf.mxu0
  %v2395 = vadd.f32 0.0, %v2394
  %2396 = vmatmul.f32.gmra.mxu0 %v653
  %v2397 = vpop.f32.mrf.mxu0
  %v2398 = vadd.f32 0.0, %v2397
  %2399 = vmatmul.f32.gmra.mxu0 %v656
  %v2400 = vpop.f32.mrf.mxu0
  %v2401 = vadd.f32 0.0, %v2400
  %2402 = vmatmul.f32.gmra.mxu0 %v659
  %v2403 = vpop.f32.mrf.mxu0
  %v2404 = vadd.f32 0.0, %v2403
  %2405 = vmatmul.f32.gmra.mxu0 %v662
  %v2406 = vpop.f32.mrf.mxu0
  %v2407 = vadd.f32 0.0, %v2406
  %2408 = vmatmul.f32.gmra.mxu0 %v665
  %v2409 = vpop.f32.mrf.mxu0
  %v2410 = vadd.f32 0.0, %v2409
  %2411 = vmatmul.f32.gmra.mxu0 %v668
  %v2412 = vpop.f32.mrf.mxu0
  %v2413 = vadd.f32 0.0, %v2412
  %2414 = vmatmul.f32.gmra.mxu0 %v671
  %v2415 = vpop.f32.mrf.mxu0
  %v2416 = vadd.f32 0.0, %v2415
  %2417 = vmatmul.f32.gmra.mxu0 %v674
  %v2418 = vpop.f32.mrf.mxu0
  %v2419 = vadd.f32 0.0, %v2418
  %2420 = vmatmul.f32.gmra.mxu0 %v677
  %v2421 = vpop.f32.mrf.mxu0
  %v2422 = vadd.f32 0.0, %v2421
  %2423 = vmatmul.f32.gmra.mxu0 %v680
  %v2424 = vpop.f32.mrf.mxu0
  %v2425 = vadd.f32 0.0, %v2424
  %2426 = vmatmul.f32.gmra.mxu0 %v683
  %v2427 = vpop.f32.mrf.mxu0
  %v2428 = vadd.f32 0.0, %v2427
  %2429 = vmatmul.f32.gmra.mxu0 %v686
  %v2430 = vpop.f32.mrf.mxu0
  %v2431 = vadd.f32 0.0, %v2430
  %2432 = vmatmul.f32.gmra.mxu0 %v689
  %v2433 = vpop.f32.mrf.mxu0
  %v2434 = vadd.f32 0.0, %v2433
  %2435 = vmatmul.f32.gmra.mxu0 %v692
  %v2436 = vpop.f32.mrf.mxu0
  %v2437 = vadd.f32 0.0, %v2436
  %2438 = vmatmul.f32.gmra.mxu0 %v695
  %v2439 = vpop.f32.mrf.mxu0
  %v2440 = vadd.f32 0.0, %v2439
  %2441 = vmatmul.f32.gmra.mxu0 %v698
  %v2442 = vpop.f32.mrf.mxu0
  %v2443 = vadd.f32 0.0, %v2442
  %2444 = vmatmul.f32.gmra.mxu0 %v701
  %v2445 = vpop.f32.mrf.mxu0
  %v2446 = vadd.f32 0.0, %v2445
  %2447 = vmatmul.f32.gmra.mxu0 %v704
  %v2448 = vpop.f32.mrf.mxu0
  %v2449 = vadd.f32 0.0, %v2448
  %2450 = vmatmul.f32.gmra.mxu0 %v707
  %v2451 = vpop.f32.mrf.mxu0
  %v2452 = vadd.f32 0.0, %v2451
  %2453 = vmatmul.f32.gmra.mxu0 %v710
  %v2454 = vpop.f32.mrf.mxu0
  %v2455 = vadd.f32 0.0, %v2454
  %2456 = vmatmul.f32.gmra.mxu0 %v713
  %v2457 = vpop.f32.mrf.mxu0
  %v2458 = vadd.f32 0.0, %v2457
  %2459 = vmatmul.f32.gmra.mxu0 %v716
  %v2460 = vpop.f32.mrf.mxu0
  %v2461 = vadd.f32 0.0, %v2460
  %2462 = vmatmul.f32.gmra.mxu0 %v719
  %v2463 = vpop.f32.mrf.mxu0
  %v2464 = vadd.f32 0.0, %v2463
  %2465 = vmatmul.f32.gmra.mxu0 %v722
  %v2466 = vpop.f32.mrf.mxu0
  %v2467 = vadd.f32 0.0, %v2466
  %2468 = vmatmul.f32.gmra.mxu0 %v725
  %v2469 = vpop.f32.mrf.mxu0
  %v2470 = vadd.f32 0.0, %v2469
  %2471 = vmatmul.f32.gmra.mxu0 %v728
  %v2472 = vpop.f32.mrf.mxu0
  %v2473 = vadd.f32 0.0, %v2472
  %2474 = vmatmul.f32.gmra.mxu0 %v731
  %v2475 = vpop.f32.mrf.mxu0
  %v2476 = vadd.f32 0.0, %v2475
  %2477 = vmatmul.f32.gmra.mxu0 %v734
  %v2478 = vpop.f32.mrf.mxu0
  %v2479 = vadd.f32 0.0, %v2478
  %2480 = vmatmul.f32.gmra.mxu0 %v737
  %v2481 = vpop.f32.mrf.mxu0
  %v2482 = vadd.f32 0.0, %v2481
  %2483 = vmatmul.f32.gmra.mxu0 %v740
  %v2484 = vpop.f32.mrf.mxu0
  %v2485 = vadd.f32 0.0, %v2484
  %2486 = vmatmul.f32.gmra.mxu0 %v743
  %v2487 = vpop.f32.mrf.mxu0
  %v2488 = vadd.f32 0.0, %v2487
  %2489 = vmatmul.f32.gmra.mxu0 %v746
  %v2490 = vpop.f32.mrf.mxu0
  %v2491 = vadd.f32 0.0, %v2490
  %2492 = vmatmul.f32.gmra.mxu0 %v749
  %v2493 = vpop.f32.mrf.mxu0
  %v2494 = vadd.f32 0.0, %v2493
  %2495 = vmatmul.f32.gmra.mxu0 %v752
  %v2496 = vpop.f32.mrf.mxu0
  %v2497 = vadd.f32 0.0, %v2496
  %2498 = vmatmul.f32.gmra.mxu0 %v755
  %v2499 = vpop.f32.mrf.mxu0
  %v2500 = vadd.f32 0.0, %v2499
  %2501 = vmatmul.f32.gmra.mxu0 %v758
  %v2502 = vpop.f32.mrf.mxu0
  %v2503 = vadd.f32 0.0, %v2502
  %2504 = vmatmul.f32.gmra.mxu0 %v761
  %v2505 = vpop.f32.mrf.mxu0
  %v2506 = vadd.f32 0.0, %v2505
  %2507 = vmatmul.f32.gmra.mxu0 %v764
  %v2508 = vpop.f32.mrf.mxu0
  %v2509 = vadd.f32 0.0, %v2508
  %2510 = vmatmul.f32.gmra.mxu0 %v767
  %v2511 = vpop.f32.mrf.mxu0
  %v2512 = vadd.f32 0.0, %v2511
  %2513 = vmatmul.f32.gmra.mxu0 %v770
  %v2514 = vpop.f32.mrf.mxu0
  %v2515 = vadd.f32 0.0, %v2514
  %2516 = vmatmul.f32.gmra.mxu0 %v773
  %v2517 = vpop.f32.mrf.mxu0
  %v2518 = vadd.f32 0.0, %v2517
  %2519 = vmatmul.f32.gmra.mxu0 %v776
  %v2520 = vpop.f32.mrf.mxu0
  %v2521 = vadd.f32 0.0, %v2520
  %2522 = vmatmul.f32.gmra.mxu0 %v779
  %v2523 = vpop.f32.mrf.mxu0
  %v2524 = vadd.f32 0.0, %v2523
  %2525 = vmatmul.f32.gmra.mxu0 %v782
  %v2526 = vpop.f32.mrf.mxu0
  %v2527 = vadd.f32 0.0, %v2526
  %2528 = vmatmul.f32.gmra.mxu0 %v785
  %v2529 = vpop.f32.mrf.mxu0
  %v2530 = vadd.f32 0.0, %v2529
  %2531 = vmatmul.f32.gmra.mxu0 %v788
  %v2532 = vpop.f32.mrf.mxu0
  %v2533 = vadd.f32 0.0, %v2532
  %2534 = vmatmul.f32.gmra.mxu0 %v791
  %v2535 = vpop.f32.mrf.mxu0
  %v2536 = vadd.f32 0.0, %v2535
  %2537 = vmatmul.f32.gmra.mxu0 %v794
  %v2538 = vpop.f32.mrf.mxu0
  %v2539 = vadd.f32 0.0, %v2538
  %2540 = vmatmul.f32.gmra.mxu0 %v797
  %v2541 = vpop.f32.mrf.mxu0
  %v2542 = vadd.f32 0.0, %v2541
  %2543 = vmatmul.f32.gmra.mxu0 %v800
  %v2544 = vpop.f32.mrf.mxu0
  %v2545 = vadd.f32 0.0, %v2544
  %2546 = vmatmul.f32.gmra.mxu0 %v803
  %v2547 = vpop.f32.mrf.mxu0
  %v2548 = vadd.f32 0.0, %v2547
  %2549 = vmatmul.f32.gmra.mxu0 %v806
  %v2550 = vpop.f32.mrf.mxu0
  %v2551 = vadd.f32 0.0, %v2550
  %2552 = vmatmul.f32.gmra.mxu0 %v809
  %v2553 = vpop.f32.mrf.mxu0
  %v2554 = vadd.f32 0.0, %v2553
  %2555 = vmatmul.f32.gmra.mxu0 %v812
  %v2556 = vpop.f32.mrf.mxu0
  %v2557 = vadd.f32 0.0, %v2556
  %2558 = vmatmul.f32.gmra.mxu0 %v815
  %v2559 = vpop.f32.mrf.mxu0
  %v2560 = vadd.f32 0.0, %v2559
  %2561 = vmatmul.f32.gmra.mxu0 %v818
  %v2562 = vpop.f32.mrf.mxu0
  %v2563 = vadd.f32 0.0, %v2562
  %2564 = vmatmul.f32.gmra.mxu0 %v821
  %v2565 = vpop.f32.mrf.mxu0
  %v2566 = vadd.f32 0.0, %v2565
  %2567 = vmatmul.f32.gmra.mxu0 %v824
  %v2568 = vpop.f32.mrf.mxu0
  %v2569 = vadd.f32 0.0, %v2568
  %2570 = vmatmul.f32.gmra.mxu0 %v827
  %v2571 = vpop.f32.mrf.mxu0
  %v2572 = vadd.f32 0.0, %v2571
  %2573 = vmatmul.f32.gmra.mxu0 %v830
  %v2574 = vpop.f32.mrf.mxu0
  %v2575 = vadd.f32 0.0, %v2574
  %2576 = vmatmul.f32.gmra.mxu0 %v833
  %v2577 = vpop.f32.mrf.mxu0
  %v2578 = vadd.f32 0.0, %v2577
  %2579 = vmatmul.f32.gmra.mxu0 %v836
  %v2580 = vpop.f32.mrf.mxu0
  %v2581 = vadd.f32 0.0, %v2580
  %2582 = vmatmul.f32.gmra.mxu0 %v839
  %v2583 = vpop.f32.mrf.mxu0
  %v2584 = vadd.f32 0.0, %v2583
  %2585 = vmatmul.f32.gmra.mxu0 %v842
  %v2586 = vpop.f32.mrf.mxu0
  %v2587 = vadd.f32 0.0, %v2586
  %2588 = vmatmul.f32.gmra.mxu0 %v845
  %v2589 = vpop.f32.mrf.mxu0
  %v2590 = vadd.f32 0.0, %v2589
  %2591 = vmatmul.f32.gmra.mxu0 %v848
  %v2592 = vpop.f32.mrf.mxu0
  %v2593 = vadd.f32 0.0, %v2592
  %2594 = vmatmul.f32.gmra.mxu0 %v851
  %v2595 = vpop.f32.mrf.mxu0
  %v2596 = vadd.f32 0.0, %v2595
  %2597 = vmatmul.f32.gmra.mxu0 %v854
  %v2598 = vpop.f32.mrf.mxu0
  %v2599 = vadd.f32 0.0, %v2598
  %2600 = vmatmul.f32.gmra.mxu0 %v857
  %v2601 = vpop.f32.mrf.mxu0
  %v2602 = vadd.f32 0.0, %v2601
  %2603 = vmatmul.f32.gmra.mxu0 %v860
  %v2604 = vpop.f32.mrf.mxu0
  %v2605 = vadd.f32 0.0, %v2604
  %2606 = vmatmul.f32.gmra.mxu0 %v863
  %v2607 = vpop.f32.mrf.mxu0
  %v2608 = vadd.f32 0.0, %v2607
  %2609 = vmatmul.f32.gmra.mxu0 %v866
  %v2610 = vpop.f32.mrf.mxu0
  %v2611 = vadd.f32 0.0, %v2610
  %2612 = vmatmul.f32.gmra.mxu0 %v869
  %v2613 = vpop.f32.mrf.mxu0
  %v2614 = vadd.f32 0.0, %v2613
  %2615 = vmatmul.f32.gmra.mxu0 %v872
  %v2616 = vpop.f32.mrf.mxu0
  %v2617 = vadd.f32 0.0, %v2616
  %2618 = vmatmul.f32.gmra.mxu0 %v875
  %v2619 = vpop.f32.mrf.mxu0
  %v2620 = vadd.f32 0.0, %v2619
  %2621 = vmatmul.f32.gmra.mxu0 %v878
  %v2622 = vpop.f32.mrf.mxu0
  %v2623 = vadd.f32 0.0, %v2622
  %2624 = vmatmul.f32.gmra.mxu0 %v881
  %v2625 = vpop.f32.mrf.mxu0
  %v2626 = vadd.f32 0.0, %v2625
  %2627 = vmatmul.f32.gmra.mxu0 %v884
  %v2628 = vpop.f32.mrf.mxu0
  %v2629 = vadd.f32 0.0, %v2628
  %2630 = vmatmul.f32.gmra.mxu0 %v887
  %v2631 = vpop.f32.mrf.mxu0
  %v2632 = vadd.f32 0.0, %v2631
  %2633 = vmatmul.f32.gmra.mxu0 %v890
  %v2634 = vpop.f32.mrf.mxu0
  %v2635 = vadd.f32 0.0, %v2634
  %2636 = vmatmul.f32.gmra.mxu0 %v893
  %v2637 = vpop.f32.mrf.mxu0
  %v2638 = vadd.f32 0.0, %v2637
  %2639 = vmatmul.f32.gmra.mxu0 %v896
  %v2640 = vpop.f32.mrf.mxu0
  %v2641 = vadd.f32 0.0, %v2640
  %2642 = vmatmul.f32.gmra.mxu0 %v899
  %v2643 = vpop.f32.mrf.mxu0
  %v2644 = vadd.f32 0.0, %v2643
  %2645 = vmatmul.f32.gmra.mxu0 %v902
  %v2646 = vpop.f32.mrf.mxu0
  %v2647 = vadd.f32 0.0, %v2646
  %2648 = vmatmul.f32.gmra.mxu0 %v905
  %v2649 = vpop.f32.mrf.mxu0
  %v2650 = vadd.f32 0.0, %v2649
  %2651 = vmatmul.f32.gmra.mxu0 %v908
  %v2652 = vpop.f32.mrf.mxu0
  %v2653 = vadd.f32 0.0, %v2652
  %2654 = vmatmul.f32.gmra.mxu0 %v911
  %v2655 = vpop.f32.mrf.mxu0
  %v2656 = vadd.f32 0.0, %v2655
  %2657 = vmatmul.f32.gmra.mxu0 %v914
  %v2658 = vpop.f32.mrf.mxu0
  %v2659 = vadd.f32 0.0, %v2658
  %2660 = vmatmul.f32.gmra.mxu0 %v917
  %v2661 = vpop.f32.mrf.mxu0
  %v2662 = vadd.f32 0.0, %v2661
  %2663 = vmatmul.f32.gmra.mxu0 %v920
  %v2664 = vpop.f32.mrf.mxu0
  %v2665 = vadd.f32 0.0, %v2664
  %2666 = vmatmul.f32.gmra.mxu0 %v923
  %v2667 = vpop.f32.mrf.mxu0
  %v2668 = vadd.f32 0.0, %v2667
  %2669 = vmatmul.f32.gmra.mxu0 %v926
  %v2670 = vpop.f32.mrf.mxu0
  %v2671 = vadd.f32 0.0, %v2670
  %2672 = vmatmul.f32.gmra.mxu0 %v929
  %v2673 = vpop.f32.mrf.mxu0
  %v2674 = vadd.f32 0.0, %v2673
  %2675 = vmatmul.f32.gmra.mxu0 %v932
  %v2676 = vpop.f32.mrf.mxu0
  %v2677 = vadd.f32 0.0, %v2676
  %2678 = vmatmul.f32.gmra.mxu0 %v935
  %v2679 = vpop.f32.mrf.mxu0
  %v2680 = vadd.f32 0.0, %v2679
  %2681 = vmatmul.f32.gmra.mxu0 %v938
  %v2682 = vpop.f32.mrf.mxu0
  %v2683 = vadd.f32 0.0, %v2682
  %2684 = vmatmul.f32.gmra.mxu0 %v941
  %v2685 = vpop.f32.mrf.mxu0
  %v2686 = vadd.f32 0.0, %v2685
  %2687 = vmatmul.f32.gmra.mxu0 %v944
  %v2688 = vpop.f32.mrf.mxu0
  %v2689 = vadd.f32 0.0, %v2688
  %2690 = vmatmul.f32.gmra.mxu0 %v947
  %v2691 = vpop.f32.mrf.mxu0
  %v2692 = vadd.f32 0.0, %v2691
  %2693 = vmatmul.f32.gmra.mxu0 %v950
  %v2694 = vpop.f32.mrf.mxu0
  %v2695 = vadd.f32 0.0, %v2694
  %2696 = vmatmul.f32.gmra.mxu0 %v953
  %v2697 = vpop.f32.mrf.mxu0
  %v2698 = vadd.f32 0.0, %v2697
  %2699 = vmatmul.f32.gmra.mxu0 %v956
  %v2700 = vpop.f32.mrf.mxu0
  %v2701 = vadd.f32 0.0, %v2700
  %2702 = vmatmul.f32.gmra.mxu0 %v959
  %v2703 = vpop.f32.mrf.mxu0
  %v2704 = vadd.f32 0.0, %v2703
  %2705 = vmatmul.f32.gmra.mxu0 %v962
  %v2706 = vpop.f32.mrf.mxu0
  %v2707 = vadd.f32 0.0, %v2706
  %2708 = vmatmul.f32.gmra.mxu0 %v965
  %v2709 = vpop.f32.mrf.mxu0
  %v2710 = vadd.f32 0.0, %v2709
  %2711 = vmatmul.f32.gmra.mxu0 %v968
  %v2712 = vpop.f32.mrf.mxu0
  %v2713 = vadd.f32 0.0, %v2712
  %2714 = vmatmul.f32.gmra.mxu0 %v971
  %v2715 = vpop.f32.mrf.mxu0
  %v2716 = vadd.f32 0.0, %v2715
  %2717 = vmatmul.f32.gmra.mxu0 %v974
  %v2718 = vpop.f32.mrf.mxu0
  %v2719 = vadd.f32 0.0, %v2718
  %2720 = vmatmul.f32.gmra.mxu0 %v977
  %v2721 = vpop.f32.mrf.mxu0
  %v2722 = vadd.f32 0.0, %v2721
  %2723 = vmatmul.f32.gmra.mxu0 %v980
  %v2724 = vpop.f32.mrf.mxu0
  %v2725 = vadd.f32 0.0, %v2724
  %2726 = vmatmul.f32.gmra.mxu0 %v983
  %v2727 = vpop.f32.mrf.mxu0
  %v2728 = vadd.f32 0.0, %v2727
  %2729 = vmatmul.f32.gmra.mxu0 %v986
  %v2730 = vpop.f32.mrf.mxu0
  %v2731 = vadd.f32 0.0, %v2730
  %2732 = vmatmul.f32.gmra.mxu0 %v989
  %v2733 = vpop.f32.mrf.mxu0
  %v2734 = vadd.f32 0.0, %v2733
  %2735 = vmatmul.f32.gmra.mxu0 %v992
  %v2736 = vpop.f32.mrf.mxu0
  %v2737 = vadd.f32 0.0, %v2736
  %2738 = vmatmul.f32.gmra.mxu0 %v995
  %v2739 = vpop.f32.mrf.mxu0
  %v2740 = vadd.f32 0.0, %v2739
  %2741 = vmatmul.f32.gmra.mxu0 %v998
  %v2742 = vpop.f32.mrf.mxu0
  %v2743 = vadd.f32 0.0, %v2742
  %2744 = vmatmul.f32.gmra.mxu0 %v1001
  %v2745 = vpop.f32.mrf.mxu0
  %v2746 = vadd.f32 0.0, %v2745
  %2747 = vmatmul.f32.gmra.mxu0 %v1004
  %v2748 = vpop.f32.mrf.mxu0
  %v2749 = vadd.f32 0.0, %v2748
  %2750 = vmatmul.f32.gmra.mxu0 %v1007
  %v2751 = vpop.f32.mrf.mxu0
  %v2752 = vadd.f32 0.0, %v2751
  %2753 = vmatmul.f32.gmra.mxu0 %v1010
  %v2754 = vpop.f32.mrf.mxu0
  %v2755 = vadd.f32 0.0, %v2754
  %2756 = vmatmul.f32.gmra.mxu0 %v1013
  %v2757 = vpop.f32.mrf.mxu0
  %v2758 = vadd.f32 0.0, %v2757
  %2759 = vmatmul.f32.gmra.mxu0 %v1016
  %v2760 = vpop.f32.mrf.mxu0
  %v2761 = vadd.f32 0.0, %v2760
  %2762 = vmatmul.f32.gmra.mxu0 %v1019
  %v2763 = vpop.f32.mrf.mxu0
  %v2764 = vadd.f32 0.0, %v2763
  %2765 = vmatmul.f32.gmra.mxu0 %v1022
  %v2766 = vpop.f32.mrf.mxu0
  %v2767 = vadd.f32 0.0, %v2766
  %2768 = vmatmul.f32.gmra.mxu0 %v1025
  %v2769 = vpop.f32.mrf.mxu0
  %v2770 = vadd.f32 0.0, %v2769
  %2771 = vmatmul.f32.gmra.mxu0 %v1028
  %v2772 = vpop.f32.mrf.mxu0
  %v2773 = vadd.f32 0.0, %v2772
  %2774 = vmatmul.f32.gmra.mxu0 %v1031
  %v2775 = vpop.f32.mrf.mxu0
  %v2776 = vadd.f32 0.0, %v2775
  %2777 = vmatmul.f32.gmra.mxu0 %v1034
  %v2778 = vpop.f32.mrf.mxu0
  %v2779 = vadd.f32 0.0, %v2778
  %2780 = vmatmul.f32.gmra.mxu0 %v1037
  %v2781 = vpop.f32.mrf.mxu0
  %v2782 = vadd.f32 0.0, %v2781
  %2783 = vmatmul.f32.gmra.mxu0 %v1040
  %v2784 = vpop.f32.mrf.mxu0
  %v2785 = vadd.f32 0.0, %v2784
  %2786 = vmatmul.f32.gmra.mxu0 %v1043
  %v2787 = vpop.f32.mrf.mxu0
  %v2788 = vadd.f32 0.0, %v2787
  %2789 = vmatmul.f32.gmra.mxu0 %v1046
  %v2790 = vpop.f32.mrf.mxu0
  %v2791 = vadd.f32 0.0, %v2790
  %2792 = vmatmul.f32.gmra.mxu0 %v1049
  %v2793 = vpop.f32.mrf.mxu0
  %v2794 = vadd.f32 0.0, %v2793
  %2795 = vmatmul.f32.gmra.mxu0 %v1052
  %v2796 = vpop.f32.mrf.mxu0
  %v2797 = vadd.f32 0.0, %v2796
  %2798 = vmatmul.f32.gmra.mxu0 %v1055
  %v2799 = vpop.f32.mrf.mxu0
  %v2800 = vadd.f32 0.0, %v2799
  %2801 = vmatmul.f32.gmra.mxu0 %v1058
  %v2802 = vpop.f32.mrf.mxu0
  %v2803 = vadd.f32 0.0, %v2802
  %2804 = vmatmul.f32.gmra.mxu0 %v1061
  %v2805 = vpop.f32.mrf.mxu0
  %v2806 = vadd.f32 0.0, %v2805
  %2807 = vmatmul.f32.gmra.mxu0 %v1064
  %v2808 = vpop.f32.mrf.mxu0
  %v2809 = vadd.f32 0.0, %v2808
  %2810 = vmatmul.f32.gmra.mxu0 %v1067
  %v2811 = vpop.f32.mrf.mxu0
  %v2812 = vadd.f32 0.0, %v2811
  %2813 = vmatmul.f32.gmra.mxu0 %v1070
  %v2814 = vpop.f32.mrf.mxu0
  %v2815 = vadd.f32 0.0, %v2814
  %2816 = vmatmul.f32.gmra.mxu0 %v1073
  %v2817 = vpop.f32.mrf.mxu0
  %v2818 = vadd.f32 0.0, %v2817
  %2819 = vmatmul.f32.gmra.mxu0 %v1076
  %v2820 = vpop.f32.mrf.mxu0
  %v2821 = vadd.f32 0.0, %v2820
  %2822 = vmatmul.f32.gmra.mxu0 %v1079
  %v2823 = vpop.f32.mrf.mxu0
  %v2824 = vadd.f32 0.0, %v2823
  %2825 = vmatmul.f32.gmra.mxu0 %v1082
  %v2826 = vpop.f32.mrf.mxu0
  %v2827 = vadd.f32 0.0, %v2826
  %2828 = vmatmul.f32.gmra.mxu0 %v1085
  %v2829 = vpop.f32.mrf.mxu0
  %v2830 = vadd.f32 0.0, %v2829
  %2831 = vmatmul.f32.gmra.mxu0 %v1088
  %v2832 = vpop.f32.mrf.mxu0
  %v2833 = vadd.f32 0.0, %v2832
  %2834 = vmatmul.f32.gmra.mxu0 %v1091
  %v2835 = vpop.f32.mrf.mxu0
  %v2836 = vadd.f32 0.0, %v2835
  %2837 = vmatmul.f32.gmra.mxu0 %v1094
  %v2838 = vpop.f32.mrf.mxu0
  %v2839 = vadd.f32 0.0, %v2838
  %2840 = vmatmul.f32.gmra.mxu0 %v1097
  %v2841 = vpop.f32.mrf.mxu0
  %v2842 = vadd.f32 0.0, %v2841
  %2843 = vmatmul.f32.gmra.mxu0 %v1100
  %v2844 = vpop.f32.mrf.mxu0
  %v2845 = vadd.f32 0.0, %v2844
  %2846 = vmatmul.f32.gmra.mxu0 %v1103
  %v2847 = vpop.f32.mrf.mxu0
  %v2848 = vadd.f32 0.0, %v2847
  %2849 = vmatmul.f32.gmra.mxu0 %v1106
  %v2850 = vpop.f32.mrf.mxu0
  %v2851 = vadd.f32 0.0, %v2850
  %2852 = vmatmul.f32.gmra.mxu0 %v1109
  %v2853 = vpop.f32.mrf.mxu0
  %v2854 = vadd.f32 0.0, %v2853
  %2855 = vmatmul.f32.gmra.mxu0 %v1112
  %v2856 = vpop.f32.mrf.mxu0
  %v2857 = vadd.f32 0.0, %v2856
  %2858 = vmatmul.f32.gmra.mxu0 %v1115
  %v2859 = vpop.f32.mrf.mxu0
  %v2860 = vadd.f32 0.0, %v2859
  %2861 = vmatmul.f32.gmra.mxu0 %v1118
  %v2862 = vpop.f32.mrf.mxu0
  %v2863 = vadd.f32 0.0, %v2862
  %2864 = vmatmul.f32.gmra.mxu0 %v1121
  %v2865 = vpop.f32.mrf.mxu0
  %v2866 = vadd.f32 0.0, %v2865
  %2867 = vmatmul.f32.gmra.mxu0 %v1124
  %v2868 = vpop.f32.mrf.mxu0
  %v2869 = vadd.f32 0.0, %v2868
  %2870 = vmatmul.f32.gmra.mxu0 %v1127
  %v2871 = vpop.f32.mrf.mxu0
  %v2872 = vadd.f32 0.0, %v2871
  %2873 = vmatmul.f32.gmra.mxu0 %v1130
  %v2874 = vpop.f32.mrf.mxu0
  %v2875 = vadd.f32 0.0, %v2874
  %2876 = vmatmul.f32.gmra.mxu0 %v1133
  %v2877 = vpop.f32.mrf.mxu0
  %v2878 = vadd.f32 0.0, %v2877
  %2879 = vmatmul.f32.gmra.mxu0 %v1136
  %v2880 = vpop.f32.mrf.mxu0
  %v2881 = vadd.f32 0.0, %v2880
  %2882 = vmatmul.f32.gmra.mxu0 %v1139
  %v2883 = vpop.f32.mrf.mxu0
  %v2884 = vadd.f32 0.0, %v2883
  %2885 = vmatmul.f32.gmra.mxu0 %v1142
  %v2886 = vpop.f32.mrf.mxu0
  %v2887 = vadd.f32 0.0, %v2886
  %2888 = vmatmul.f32.gmra.mxu0 %v1145
  %v2889 = vpop.f32.mrf.mxu0
  %v2890 = vadd.f32 0.0, %v2889
  %2891 = vmatmul.f32.gmra.mxu0 %v1148
  %v2892 = vpop.f32.mrf.mxu0
  %v2893 = vadd.f32 0.0, %v2892
  %2894 = vmatmul.f32.gmra.mxu0 %v1151
  %v2895 = vpop.f32.mrf.mxu0
  %v2896 = vadd.f32 0.0, %v2895
  %2897 = vmatmul.f32.gmra.mxu0 %v1154
  %v2898 = vpop.f32.mrf.mxu0
  %v2899 = vadd.f32 0.0, %v2898
  %2900 = vmatmul.f32.gmra.mxu0 %v1157
  %v2901 = vpop.f32.mrf.mxu0
  %v2902 = vadd.f32 0.0, %v2901
  %2903 = vmatmul.f32.gmra.mxu0 %v1160
  %v2904 = vpop.f32.mrf.mxu0
  %v2905 = vadd.f32 0.0, %v2904
  %2906 = vmatmul.f32.gmra.mxu0 %v1163
  %v2907 = vpop.f32.mrf.mxu0
  %v2908 = vadd.f32 0.0, %v2907
  %2909 = vmatmul.f32.gmra.mxu0 %v1166
  %v2910 = vpop.f32.mrf.mxu0
  %v2911 = vadd.f32 0.0, %v2910
  %2912 = vmatmul.f32.gmra.mxu0 %v1169
  %v2913 = vpop.f32.mrf.mxu0
  %v2914 = vadd.f32 0.0, %v2913
  %2915 = vmatmul.f32.gmra.mxu0 %v1172
  %v2916 = vpop.f32.mrf.mxu0
  %v2917 = vadd.f32 0.0, %v2916
  %2918 = vmatmul.f32.gmra.mxu0 %v1175
  %v2919 = vpop.f32.mrf.mxu0
  %v2920 = vadd.f32 0.0, %v2919
  %2921 = vmatmul.f32.gmra.mxu0 %v1178
  %v2922 = vpop.f32.mrf.mxu0
  %v2923 = vadd.f32 0.0, %v2922
  %2924 = vmatmul.f32.gmra.mxu0 %v1181
  %v2925 = vpop.f32.mrf.mxu0
  %v2926 = vadd.f32 0.0, %v2925
  %2927 = vmatmul.f32.gmra.mxu0 %v1184
  %v2928 = vpop.f32.mrf.mxu0
  %v2929 = vadd.f32 0.0, %v2928
  %2930 = vmatmul.f32.gmra.mxu0 %v1187
  %v2931 = vpop.f32.mrf.mxu0
  %v2932 = vadd.f32 0.0, %v2931
  %2933 = vmatmul.f32.gmra.mxu0 %v1190
  %v2934 = vpop.f32.mrf.mxu0
  %v2935 = vadd.f32 0.0, %v2934
  %2936 = vmatmul.f32.gmra.mxu0 %v1193
  %v2937 = vpop.f32.mrf.mxu0
  %v2938 = vadd.f32 0.0, %v2937
  %2939 = vmatmul.f32.gmra.mxu0 %v1196
  %v2940 = vpop.f32.mrf.mxu0
  %v2941 = vadd.f32 0.0, %v2940
  %2942 = vmatmul.f32.gmra.mxu0 %v1199
  %v2943 = vpop.f32.mrf.mxu0
  %v2944 = vadd.f32 0.0, %v2943
  %2945 = vmatmul.f32.gmra.mxu0 %v1202
  %v2946 = vpop.f32.mrf.mxu0
  %v2947 = vadd.f32 0.0, %v2946
  %2948 = vmatmul.f32.gmra.mxu0 %v1205
  %v2949 = vpop.f32.mrf.mxu0
  %v2950 = vadd.f32 0.0, %v2949
  %2951 = vmatmul.f32.gmra.mxu0 %v1208
  %v2952 = vpop.f32.mrf.mxu0
  %v2953 = vadd.f32 0.0, %v2952
  %2954 = vmatmul.f32.gmra.mxu0 %v1211
  %v2955 = vpop.f32.mrf.mxu0
  %v2956 = vadd.f32 0.0, %v2955
  %2957 = vmatmul.f32.gmra.mxu0 %v1214
  %v2958 = vpop.f32.mrf.mxu0
  %v2959 = vadd.f32 0.0, %v2958
  %2960 = vmatmul.f32.gmra.mxu0 %v1217
  %v2961 = vpop.f32.mrf.mxu0
  %v2962 = vadd.f32 0.0, %v2961
  %2963 = vmatmul.f32.gmra.mxu0 %v1220
  %v2964 = vpop.f32.mrf.mxu0
  %v2965 = vadd.f32 0.0, %v2964
  %2966 = vmatmul.f32.gmra.mxu0 %v1223
  %v2967 = vpop.f32.mrf.mxu0
  %v2968 = vadd.f32 0.0, %v2967
  %2969 = vmatmul.f32.gmra.mxu0 %v1226
  %v2970 = vpop.f32.mrf.mxu0
  %v2971 = vadd.f32 0.0, %v2970
  %2972 = vmatmul.f32.gmra.mxu0 %v1229
  %v2973 = vpop.f32.mrf.mxu0
  %v2974 = vadd.f32 0.0, %v2973
  %2975 = vmatmul.f32.gmra.mxu0 %v1232
  %v2976 = vpop.f32.mrf.mxu0
  %v2977 = vadd.f32 0.0, %v2976
  %2978 = vmatmul.f32.gmra.mxu0 %v1235
  %v2979 = vpop.f32.mrf.mxu0
  %v2980 = vadd.f32 0.0, %v2979
  %2981 = vmatmul.f32.gmra.mxu0 %v1238
  %v2982 = vpop.f32.mrf.mxu0
  %v2983 = vadd.f32 0.0, %v2982
  %2984 = vmatmul.f32.gmra.mxu0 %v1241
  %v2985 = vpop.f32.mrf.mxu0
  %v2986 = vadd.f32 0.0, %v2985
  %2987 = vmatmul.f32.gmra.mxu0 %v1244
  %v2988 = vpop.f32.mrf.mxu0
  %v2989 = vadd.f32 0.0, %v2988
  %2990 = vmatmul.f32.gmra.mxu0 %v1247
  %v2991 = vpop.f32.mrf.mxu0
  %v2992 = vadd.f32 0.0, %v2991
  %2993 = vmatmul.f32.gmra.mxu0 %v1250
  %v2994 = vpop.f32.mrf.mxu0
  %v2995 = vadd.f32 0.0, %v2994
  %2996 = vmatmul.f32.gmra.mxu0 %v1253
  %v2997 = vpop.f32.mrf.mxu0
  %v2998 = vadd.f32 0.0, %v2997
  %2999 = vmatmul.f32.gmra.mxu0 %v1256
  %v3000 = vpop.f32.mrf.mxu0
  %v3001 = vadd.f32 0.0, %v3000
  %3002 = vmatmul.f32.gmra.mxu0 %v1259
  %v3003 = vpop.f32.mrf.mxu0
  %v3004 = vadd.f32 0.0, %v3003
  %3005 = vmatmul.f32.gmra.mxu0 %v1262
  %v3006 = vpop.f32.mrf.mxu0
  %v3007 = vadd.f32 0.0, %v3006
  %3008 = vmatmul.f32.gmra.mxu0 %v1265
  %v3009 = vpop.f32.mrf.mxu0
  %v3010 = vadd.f32 0.0, %v3009
  %3011 = vmatmul.f32.gmra.mxu0 %v1268
  %v3012 = vpop.f32.mrf.mxu0
  %v3013 = vadd.f32 0.0, %v3012
  %3014 = vmatmul.f32.gmra.mxu0 %v1271
  %v3015 = vpop.f32.mrf.mxu0
  %v3016 = vadd.f32 0.0, %v3015
  %3017 = vmatmul.f32.gmra.mxu0 %v1274
  %v3018 = vpop.f32.mrf.mxu0
  %v3019 = vadd.f32 0.0, %v3018
  %3020 = vmatmul.f32.gmra.mxu0 %v1277
  %v3021 = vpop.f32.mrf.mxu0
  %v3022 = vadd.f32 0.0, %v3021
  %3023 = vmatmul.f32.gmra.mxu0 %v1280
  %v3024 = vpop.f32.mrf.mxu0
  %v3025 = vadd.f32 0.0, %v3024
  %3026 = vmatmul.f32.gmra.mxu0 %v1283
  %v3027 = vpop.f32.mrf.mxu0
  %v3028 = vadd.f32 0.0, %v3027
  %3029 = vmatmul.f32.gmra.mxu0 %v1286
  %v3030 = vpop.f32.mrf.mxu0
  %v3031 = vadd.f32 0.0, %v3030
  %3032 = vmatmul.f32.gmra.mxu0 %v1289
  %v3033 = vpop.f32.mrf.mxu0
  %v3034 = vadd.f32 0.0, %v3033
  %3035 = vmatmul.f32.gmra.mxu0 %v1292
  %v3036 = vpop.f32.mrf.mxu0
  %v3037 = vadd.f32 0.0, %v3036
  %3038 = vmatmul.f32.gmra.mxu0 %v1295
  %v3039 = vpop.f32.mrf.mxu0
  %v3040 = vadd.f32 0.0, %v3039
  %3041 = vmatmul.f32.gmra.mxu0 %v1298
  %v3042 = vpop.f32.mrf.mxu0
  %v3043 = vadd.f32 0.0, %v3042
  %3044 = vmatmul.f32.gmra.mxu0 %v1301
  %v3045 = vpop.f32.mrf.mxu0
  %v3046 = vadd.f32 0.0, %v3045
  %3047 = vmatmul.f32.gmra.mxu0 %v1304
  %v3048 = vpop.f32.mrf.mxu0
  %v3049 = vadd.f32 0.0, %v3048
  %3050 = vmatmul.f32.gmra.mxu0 %v1307
  %v3051 = vpop.f32.mrf.mxu0
  %v3052 = vadd.f32 0.0, %v3051
  %3053 = vmatmul.f32.gmra.mxu0 %v1310
  %v3054 = vpop.f32.mrf.mxu0
  %v3055 = vadd.f32 0.0, %v3054
  %3056 = vmatmul.f32.gmra.mxu0 %v1313
  %v3057 = vpop.f32.mrf.mxu0
  %v3058 = vadd.f32 0.0, %v3057
  %3059 = vmatmul.f32.gmra.mxu0 %v1316
  %v3060 = vpop.f32.mrf.mxu0
  %v3061 = vadd.f32 0.0, %v3060
  %3062 = vmatmul.f32.gmra.mxu0 %v1319
  %v3063 = vpop.f32.mrf.mxu0
  %v3064 = vadd.f32 0.0, %v3063
  %3065 = vmatmul.f32.gmra.mxu0 %v1322
  %v3066 = vpop.f32.mrf.mxu0
  %v3067 = vadd.f32 0.0, %v3066
  %3068 = vmatmul.f32.gmra.mxu0 %v1325
  %v3069 = vpop.f32.mrf.mxu0
  %v3070 = vadd.f32 0.0, %v3069
  %3071 = vmatmul.f32.gmra.mxu0 %v1328
  %v3072 = vpop.f32.mrf.mxu0
  %v3073 = vadd.f32 0.0, %v3072
  %3074 = vmatmul.f32.gmra.mxu0 %v1331
  %v3075 = vpop.f32.mrf.mxu0
  %v3076 = vadd.f32 0.0, %v3075
  %3077 = vmatmul.f32.gmra.mxu0 %v1334
  %v3078 = vpop.f32.mrf.mxu0
  %v3079 = vadd.f32 0.0, %v3078
  %3080 = vmatmul.f32.gmra.mxu0 %v1337
  %v3081 = vpop.f32.mrf.mxu0
  %v3082 = vadd.f32 0.0, %v3081
  %3083 = vmatmul.f32.gmra.mxu0 %v1340
  %v3084 = vpop.f32.mrf.mxu0
  %v3085 = vadd.f32 0.0, %v3084
  %3086 = vmatmul.f32.gmra.mxu0 %v1343
  %v3087 = vpop.f32.mrf.mxu0
  %v3088 = vadd.f32 0.0, %v3087
  %3089 = vmatmul.f32.gmra.mxu0 %v1346
  %v3090 = vpop.f32.mrf.mxu0
  %v3091 = vadd.f32 0.0, %v3090
  %3092 = vmatmul.f32.gmra.mxu0 %v1349
  %v3093 = vpop.f32.mrf.mxu0
  %v3094 = vadd.f32 0.0, %v3093
  %3095 = vmatmul.f32.gmra.mxu0 %v1352
  %v3096 = vpop.f32.mrf.mxu0
  %v3097 = vadd.f32 0.0, %v3096
  %3098 = vmatmul.f32.gmra.mxu0 %v1355
  %v3099 = vpop.f32.mrf.mxu0
  %v3100 = vadd.f32 0.0, %v3099
  %3101 = vmatmul.f32.gmra.mxu0 %v1358
  %v3102 = vpop.f32.mrf.mxu0
  %v3103 = vadd.f32 0.0, %v3102
  %3104 = vmatmul.f32.gmra.mxu0 %v1361
  %v3105 = vpop.f32.mrf.mxu0
  %v3106 = vadd.f32 0.0, %v3105
  %3107 = vmatmul.f32.gmra.mxu0 %v1364
  %v3108 = vpop.f32.mrf.mxu0
  %v3109 = vadd.f32 0.0, %v3108
  %3110 = vmatmul.f32.gmra.mxu0 %v1367
  %v3111 = vpop.f32.mrf.mxu0
  %v3112 = vadd.f32 0.0, %v3111
  %3113 = vmatmul.f32.gmra.mxu0 %v1370
  %v3114 = vpop.f32.mrf.mxu0
  %v3115 = vadd.f32 0.0, %v3114
  %3116 = vmatmul.f32.gmra.mxu0 %v1373
  %v3117 = vpop.f32.mrf.mxu0
  %v3118 = vadd.f32 0.0, %v3117
  %3119 = vmatmul.f32.gmra.mxu0 %v1376
  %v3120 = vpop.f32.mrf.mxu0
  %v3121 = vadd.f32 0.0, %v3120
  %3122 = vmatmul.f32.gmra.mxu0 %v1379
  %v3123 = vpop.f32.mrf.mxu0
  %v3124 = vadd.f32 0.0, %v3123
  %3125 = vmatmul.f32.gmra.mxu0 %v1382
  %v3126 = vpop.f32.mrf.mxu0
  %v3127 = vadd.f32 0.0, %v3126
  %3128 = vmatmul.f32.gmra.mxu0 %v1385
  %v3129 = vpop.f32.mrf.mxu0
  %v3130 = vadd.f32 0.0, %v3129
  %3131 = vmatmul.f32.gmra.mxu0 %v1388
  %v3132 = vpop.f32.mrf.mxu0
  %v3133 = vadd.f32 0.0, %v3132
  %3134 = vmatmul.f32.gmra.mxu0 %v1391
  %v3135 = vpop.f32.mrf.mxu0
  %v3136 = vadd.f32 0.0, %v3135
  %3137 = vmatmul.f32.gmra.mxu0 %v1394
  %v3138 = vpop.f32.mrf.mxu0
  %v3139 = vadd.f32 0.0, %v3138
  %3140 = vmatmul.f32.gmra.mxu0 %v1397
  %v3141 = vpop.f32.mrf.mxu0
  %v3142 = vadd.f32 0.0, %v3141
  %3143 = vmatmul.f32.gmra.mxu0 %v1400
  %v3144 = vpop.f32.mrf.mxu0
  %v3145 = vadd.f32 0.0, %v3144
  %3146 = vmatmul.f32.gmra.mxu0 %v1403
  %v3147 = vpop.f32.mrf.mxu0
  %v3148 = vadd.f32 0.0, %v3147
  %3149 = vmatmul.f32.gmra.mxu0 %v1406
  %v3150 = vpop.f32.mrf.mxu0
  %v3151 = vadd.f32 0.0, %v3150
  %3152 = vmatmul.f32.gmra.mxu0 %v1409
  %v3153 = vpop.f32.mrf.mxu0
  %v3154 = vadd.f32 0.0, %v3153
  %3155 = vmatmul.f32.gmra.mxu0 %v1412
  %v3156 = vpop.f32.mrf.mxu0
  %v3157 = vadd.f32 0.0, %v3156
  %3158 = vmatmul.f32.gmra.mxu0 %v1415
  %v3159 = vpop.f32.mrf.mxu0
  %v3160 = vadd.f32 0.0, %v3159
  %3161 = vmatmul.f32.gmra.mxu0 %v1418
  %v3162 = vpop.f32.mrf.mxu0
  %v3163 = vadd.f32 0.0, %v3162
  %3164 = vmatmul.f32.gmra.mxu0 %v1421
  %v3165 = vpop.f32.mrf.mxu0
  %v3166 = vadd.f32 0.0, %v3165
  %3167 = vmatmul.f32.gmra.mxu0 %v1424
  %v3168 = vpop.f32.mrf.mxu0
  %v3169 = vadd.f32 0.0, %v3168
  %3170 = vmatmul.f32.gmra.mxu0 %v1427
  %v3171 = vpop.f32.mrf.mxu0
  %v3172 = vadd.f32 0.0, %v3171
  %3173 = vmatmul.f32.gmra.mxu0 %v1430
  %v3174 = vpop.f32.mrf.mxu0
  %v3175 = vadd.f32 0.0, %v3174
  %3176 = vmatmul.f32.gmra.mxu0 %v1433
  %v3177 = vpop.f32.mrf.mxu0
  %v3178 = vadd.f32 0.0, %v3177
  %3179 = vmatmul.f32.gmra.mxu0 %v1436
  %v3180 = vpop.f32.mrf.mxu0
  %v3181 = vadd.f32 0.0, %v3180
  %3182 = vmatmul.f32.gmra.mxu0 %v1439
  %v3183 = vpop.f32.mrf.mxu0
  %v3184 = vadd.f32 0.0, %v3183
  %3185 = vmatmul.f32.gmra.mxu0 %v1442
  %v3186 = vpop.f32.mrf.mxu0
  %v3187 = vadd.f32 0.0, %v3186
  %3188 = vmatmul.f32.gmra.mxu0 %v1445
  %v3189 = vpop.f32.mrf.mxu0
  %v3190 = vadd.f32 0.0, %v3189
  %3191 = vmatmul.f32.gmra.mxu0 %v1448
  %v3192 = vpop.f32.mrf.mxu0
  %v3193 = vadd.f32 0.0, %v3192
  %3194 = vmatmul.f32.gmra.mxu0 %v1451
  %v3195 = vpop.f32.mrf.mxu0
  %v3196 = vadd.f32 0.0, %v3195
  %3197 = vmatmul.f32.gmra.mxu0 %v1454
  %v3198 = vpop.f32.mrf.mxu0
  %v3199 = vadd.f32 0.0, %v3198
  %3200 = vmatmul.f32.gmra.mxu0 %v1457
  %v3201 = vpop.f32.mrf.mxu0
  %v3202 = vadd.f32 0.0, %v3201
  %3203 = vmatmul.f32.gmra.mxu0 %v1460
  %v3204 = vpop.f32.mrf.mxu0
  %v3205 = vadd.f32 0.0, %v3204
  %3206 = vmatmul.f32.gmra.mxu0 %v1463
  %v3207 = vpop.f32.mrf.mxu0
  %v3208 = vadd.f32 0.0, %v3207
  %3209 = vmatmul.f32.gmra.mxu0 %v1466
  %v3210 = vpop.f32.mrf.mxu0
  %v3211 = vadd.f32 0.0, %v3210
  %3212 = vmatmul.f32.gmra.mxu0 %v1469
  %v3213 = vpop.f32.mrf.mxu0
  %v3214 = vadd.f32 0.0, %v3213
  %3215 = vmatmul.f32.gmra.mxu0 %v1472
  %v3216 = vpop.f32.mrf.mxu0
  %v3217 = vadd.f32 0.0, %v3216
  %3218 = vmatmul.f32.gmra.mxu0 %v1475
  %v3219 = vpop.f32.mrf.mxu0
  %v3220 = vadd.f32 0.0, %v3219
  %3221 = vmatmul.f32.gmra.mxu0 %v1478
  %v3222 = vpop.f32.mrf.mxu0
  %v3223 = vadd.f32 0.0, %v3222
  %3224 = vmatmul.f32.gmra.mxu0 %v1481
  %v3225 = vpop.f32.mrf.mxu0
  %v3226 = vadd.f32 0.0, %v3225
  %3227 = vmatmul.f32.gmra.mxu0 %v1484
  %v3228 = vpop.f32.mrf.mxu0
  %v3229 = vadd.f32 0.0, %v3228
  %3230 = vmatmul.f32.gmra.mxu0 %v1487
  %v3231 = vpop.f32.mrf.mxu0
  %v3232 = vadd.f32 0.0, %v3231
  %3233 = vmatmul.f32.gmra.mxu0 %v1490
  %v3234 = vpop.f32.mrf.mxu0
  %v3235 = vadd.f32 0.0, %v3234
  %3236 = vmatmul.f32.gmra.mxu0 %v1493
  %v3237 = vpop.f32.mrf.mxu0
  %v3238 = vadd.f32 0.0, %v3237
  %3239 = vmatmul.f32.gmra.mxu0 %v1496
  %v3240 = vpop.f32.mrf.mxu0
  %v3241 = vadd.f32 0.0, %v3240
  %3242 = vmatmul.f32.gmra.mxu0 %v1499
  %v3243 = vpop.f32.mrf.mxu0
  %v3244 = vadd.f32 0.0, %v3243
  %3245 = vmatmul.f32.gmra.mxu0 %v1502
  %v3246 = vpop.f32.mrf.mxu0
  %v3247 = vadd.f32 0.0, %v3246
  %3248 = vmatmul.f32.gmra.mxu0 %v1505
  %v3249 = vpop.f32.mrf.mxu0
  %v3250 = vadd.f32 0.0, %v3249
  %3251 = vmatmul.f32.gmra.mxu0 %v1508
  %v3252 = vpop.f32.mrf.mxu0
  %v3253 = vadd.f32 0.0, %v3252
  %3254 = vmatmul.f32.gmra.mxu0 %v1511
  %v3255 = vpop.f32.mrf.mxu0
  %v3256 = vadd.f32 0.0, %v3255
  %3257 = vmatmul.f32.gmra.mxu0 %v1514
  %v3258 = vpop.f32.mrf.mxu0
  %v3259 = vadd.f32 0.0, %v3258
  %3260 = vmatmul.f32.gmra.mxu0 %v1517
  %v3261 = vpop.f32.mrf.mxu0
  %v3262 = vadd.f32 0.0, %v3261
  %3263 = vmatmul.f32.gmra.mxu0 %v1520
  %v3264 = vpop.f32.mrf.mxu0
  %v3265 = vadd.f32 0.0, %v3264
  %3266 = vmatmul.f32.gmra.mxu0 %v1523
  %v3267 = vpop.f32.mrf.mxu0
  %v3268 = vadd.f32 0.0, %v3267
  %3269 = vmatmul.f32.gmra.mxu0 %v1526
  %v3270 = vpop.f32.mrf.mxu0
  %v3271 = vadd.f32 0.0, %v3270
  %3272 = vmatmul.f32.gmra.mxu0 %v1529
  %v3273 = vpop.f32.mrf.mxu0
  %v3274 = vadd.f32 0.0, %v3273
  %3275 = vmatmul.f32.gmra.mxu0 %v1532
  %v3276 = vpop.f32.mrf.mxu0
  %v3277 = vadd.f32 0.0, %v3276
  %3278 = vmatmul.f32.gmra.mxu0 %v1535
  %v3279 = vpop.f32.mrf.mxu0
  %v3280 = vadd.f32 0.0, %v3279
  %3281 = vmatmul.f32.gmra.mxu0 %v1538
  %v3282 = vpop.f32.mrf.mxu0
  %v3283 = vadd.f32 0.0, %v3282
  %3284 = vmatmul.f32.gmra.mxu0 %v1541
  %v3285 = vpop.f32.mrf.mxu0
  %v3286 = vadd.f32 0.0, %v3285
  %3287 = vmatmul.f32.gmra.mxu0 %v1544
  %v3288 = vpop.f32.mrf.mxu0
  %v3289 = vadd.f32 0.0, %v3288
  %3290 = vmatmul.f32.gmra.mxu0 %v1547
  %v3291 = vpop.f32.mrf.mxu0
  %v3292 = vadd.f32 0.0, %v3291
  %3293 = vmatmul.f32.gmra.mxu0 %v1550
  %v3294 = vpop.f32.mrf.mxu0
  %v3295 = vadd.f32 0.0, %v3294
  %3296 = vmatmul.f32.gmra.mxu0 %v1553
  %v3297 = vpop.f32.mrf.mxu0
  %v3298 = vadd.f32 0.0, %v3297
  %3299 = vmatmul.f32.gmra.mxu0 %v1556
  %v3300 = vpop.f32.mrf.mxu0
  %v3301 = vadd.f32 0.0, %v3300
  %3302 = vmatmul.f32.gmra.mxu0 %v1559
  %v3303 = vpop.f32.mrf.mxu0
  %v3304 = vadd.f32 0.0, %v3303
  %3305 = vmatmul.f32.gmra.mxu0 %v1562
  %v3306 = vpop.f32.mrf.mxu0
  %v3307 = vadd.f32 0.0, %v3306
  %3308 = vmatmul.f32.gmra.mxu0 %v1565
  %v3309 = vpop.f32.mrf.mxu0
  %v3310 = vadd.f32 0.0, %v3309
  %3311 = vmatmul.f32.gmra.mxu0 %v1568
  %v3312 = vpop.f32.mrf.mxu0
  %v3313 = vadd.f32 0.0, %v3312
  %3314 = vmatmul.f32.gmra.mxu0 %v1571
  %v3315 = vpop.f32.mrf.mxu0
  %v3316 = vadd.f32 0.0, %v3315
  %3317 = vmatmul.f32.gmra.mxu0 %v1574
  %v3318 = vpop.f32.mrf.mxu0
  %v3319 = vadd.f32 0.0, %v3318
  %3320 = vmatmul.f32.gmra.mxu0 %v1577
  %v3321 = vpop.f32.mrf.mxu0
  %v3322 = vadd.f32 0.0, %v3321
  %3323 = vmatmul.f32.gmra.mxu0 %v1580
  %v3324 = vpop.f32.mrf.mxu0
  %v3325 = vadd.f32 0.0, %v3324
  %3326 = vmatmul.f32.gmra.mxu0 %v1583
  %v3327 = vpop.f32.mrf.mxu0
  %v3328 = vadd.f32 0.0, %v3327
  %3329 = vmatmul.f32.gmra.mxu0 %v1586
  %v3330 = vpop.f32.mrf.mxu0
  %v3331 = vadd.f32 0.0, %v3330
  %3332 = vmatmul.f32.gmra.mxu0 %v1589
  %v3333 = vpop.f32.mrf.mxu0
  %v3334 = vadd.f32 0.0, %v3333
  %3335 = vmatmul.f32.gmra.mxu0 %v1592
  %v3336 = vpop.f32.mrf.mxu0
  %v3337 = vadd.f32 0.0, %v3336
  %3338 = vmatmul.f32.gmra.mxu0 %v1595
  %v3339 = vpop.f32.mrf.mxu0
  %v3340 = vadd.f32 0.0, %v3339
  %3341 = vmatmul.f32.gmra.mxu0 %v1598
  %v3342 = vpop.f32.mrf.mxu0
  %v3343 = vadd.f32 0.0, %v3342
  %3344 = vmatmul.f32.gmra.mxu0 %v1601
  %v3345 = vpop.f32.mrf.mxu0
  %v3346 = vadd.f32 0.0, %v3345
  %3347 = vmatmul.f32.gmra.mxu0 %v1604
  %v3348 = vpop.f32.mrf.mxu0
  %v3349 = vadd.f32 0.0, %v3348
  %3350 = vmatmul.f32.gmra.mxu0 %v1607
  %v3351 = vpop.f32.mrf.mxu0
  %v3352 = vadd.f32 0.0, %v3351
  %3353 = vmatmul.f32.gmra.mxu0 %v1610
  %v3354 = vpop.f32.mrf.mxu0
  %v3355 = vadd.f32 0.0, %v3354
  %3356 = vmatmul.f32.gmra.mxu0 %v1613
  %v3357 = vpop.f32.mrf.mxu0
  %v3358 = vadd.f32 0.0, %v3357
  %3359 = vmatmul.f32.gmra.mxu0 %v1616
  %v3360 = vpop.f32.mrf.mxu0
  %v3361 = vadd.f32 0.0, %v3360
  %3362 = vmatmul.f32.gmra.mxu0 %v1619
  %v3363 = vpop.f32.mrf.mxu0
  %v3364 = vadd.f32 0.0, %v3363
  %3365 = vmatmul.f32.gmra.mxu0 %v1622
  %v3366 = vpop.f32.mrf.mxu0
  %v3367 = vadd.f32 0.0, %v3366
  %3368 = vmatmul.f32.gmra.mxu0 %v1625
  %v3369 = vpop.f32.mrf.mxu0
  %v3370 = vadd.f32 0.0, %v3369
  %3371 = vmatmul.f32.gmra.mxu0 %v1628
  %v3372 = vpop.f32.mrf.mxu0
  %v3373 = vadd.f32 0.0, %v3372
  %3374 = vmatmul.f32.gmra.mxu0 %v1631
  %v3375 = vpop.f32.mrf.mxu0
  %v3376 = vadd.f32 0.0, %v3375
  %3377 = vmatmul.f32.gmra.mxu0 %v1634
  %v3378 = vpop.f32.mrf.mxu0
  %v3379 = vadd.f32 0.0, %v3378
  %3380 = vmatmul.f32.gmra.mxu0 %v1637
  %v3381 = vpop.f32.mrf.mxu0
  %v3382 = vadd.f32 0.0, %v3381
  %3383 = vmatmul.f32.gmra.mxu0 %v1640
  %v3384 = vpop.f32.mrf.mxu0
  %v3385 = vadd.f32 0.0, %v3384
  %3386 = vmatmul.f32.gmra.mxu0 %v1643
  %v3387 = vpop.f32.mrf.mxu0
  %v3388 = vadd.f32 0.0, %v3387
  %3389 = vmatmul.f32.gmra.mxu0 %v1646
  %v3390 = vpop.f32.mrf.mxu0
  %v3391 = vadd.f32 0.0, %v3390
  %3392 = vmatmul.f32.gmra.mxu0 %v1649
  %v3393 = vpop.f32.mrf.mxu0
  %v3394 = vadd.f32 0.0, %v3393
  %3395 = vmatmul.f32.gmra.mxu0 %v1652
  %v3396 = vpop.f32.mrf.mxu0
  %v3397 = vadd.f32 0.0, %v3396
  %3398 = vmatmul.f32.gmra.mxu0 %v1655
  %v3399 = vpop.f32.mrf.mxu0
  %v3400 = vadd.f32 0.0, %v3399
  %3401 = vmatmul.f32.gmra.mxu0 %v1658
  %v3402 = vpop.f32.mrf.mxu0
  %v3403 = vadd.f32 0.0, %v3402
  %3404 = vmatmul.f32.gmra.mxu0 %v1661
  %v3405 = vpop.f32.mrf.mxu0
  %v3406 = vadd.f32 0.0, %v3405
  %3407 = vmatmul.f32.gmra.mxu0 %v1664
  %v3408 = vpop.f32.mrf.mxu0
  %v3409 = vadd.f32 0.0, %v3408
  %3410 = vmatmul.f32.gmra.mxu0 %v1667
  %v3411 = vpop.f32.mrf.mxu0
  %v3412 = vadd.f32 0.0, %v3411
  %3413 = vmatmul.f32.gmra.mxu0 %v1670
  %v3414 = vpop.f32.mrf.mxu0
  %v3415 = vadd.f32 0.0, %v3414
  %3416 = vmatmul.f32.gmra.mxu0 %v1673
  %v3417 = vpop.f32.mrf.mxu0
  %v3418 = vadd.f32 0.0, %v3417
  %3419 = vmatmul.f32.gmra.mxu0 %v1676
  %v3420 = vpop.f32.mrf.mxu0
  %v3421 = vadd.f32 0.0, %v3420
  %3422 = vmatmul.f32.gmra.mxu0 %v1679
  %v3423 = vpop.f32.mrf.mxu0
  %v3424 = vadd.f32 0.0, %v3423
  %3425 = vmatmul.f32.gmra.mxu0 %v1682
  %v3426 = vpop.f32.mrf.mxu0
  %v3427 = vadd.f32 0.0, %v3426
  %3428 = vmatmul.f32.gmra.mxu0 %v1685
  %v3429 = vpop.f32.mrf.mxu0
  %v3430 = vadd.f32 0.0, %v3429
  %3431 = vmatmul.f32.gmra.mxu0 %v1688
  %v3432 = vpop.f32.mrf.mxu0
  %v3433 = vadd.f32 0.0, %v3432
  %3434 = vmatmul.f32.gmra.mxu0 %v1691
  %v3435 = vpop.f32.mrf.mxu0
  %v3436 = vadd.f32 0.0, %v3435
  %3437 = vmatmul.f32.gmra.mxu0 %v1694
  %v3438 = vpop.f32.mrf.mxu0
  %v3439 = vadd.f32 0.0, %v3438
  %3440 = vmatmul.f32.gmra.mxu0 %v1697
  %v3441 = vpop.f32.mrf.mxu0
  %v3442 = vadd.f32 0.0, %v3441
  %3443 = vmatmul.f32.gmra.mxu0 %v1700
  %v3444 = vpop.f32.mrf.mxu0
  %v3445 = vadd.f32 0.0, %v3444
  %3446 = vmatmul.f32.gmra.mxu0 %v1703
  %v3447 = vpop.f32.mrf.mxu0
  %v3448 = vadd.f32 0.0, %v3447
  %3449 = vmatmul.f32.gmra.mxu0 %v1706
  %v3450 = vpop.f32.mrf.mxu0
  %v3451 = vadd.f32 0.0, %v3450
  %3452 = vmatmul.f32.gmra.mxu0 %v1709
  %v3453 = vpop.f32.mrf.mxu0
  %v3454 = vadd.f32 0.0, %v3453
  %3455 = vmatmul.f32.gmra.mxu0 %v1712
  %v3456 = vpop.f32.mrf.mxu0
  %v3457 = vadd.f32 0.0, %v3456
  %3458 = vmatmul.f32.gmra.mxu0 %v1715
  %v3459 = vpop.f32.mrf.mxu0
  %v3460 = vadd.f32 0.0, %v3459
  %3461 = vmatmul.f32.gmra.mxu0 %v1718
  %v3462 = vpop.f32.mrf.mxu0
  %v3463 = vadd.f32 0.0, %v3462
  %3464 = vmatmul.f32.gmra.mxu0 %v1721
  %v3465 = vpop.f32.mrf.mxu0
  %v3466 = vadd.f32 0.0, %v3465
  %3467 = vmatmul.f32.gmra.mxu0 %v1724
  %v3468 = vpop.f32.mrf.mxu0
  %v3469 = vadd.f32 0.0, %v3468
  %3470 = vmatmul.f32.gmra.mxu0 %v1727
  %v3471 = vpop.f32.mrf.mxu0
  %v3472 = vadd.f32 0.0, %v3471
  %3473 = vmatmul.f32.gmra.mxu0 %v1730
  %v3474 = vpop.f32.mrf.mxu0
  %v3475 = vadd.f32 0.0, %v3474
  %3476 = vmatmul.f32.gmra.mxu0 %v1733
  %v3477 = vpop.f32.mrf.mxu0
  %v3478 = vadd.f32 0.0, %v3477
  %3479 = vmatmul.f32.gmra.mxu0 %v1736
  %v3480 = vpop.f32.mrf.mxu0
  %v3481 = vadd.f32 0.0, %v3480
  %3482 = vmatmul.f32.gmra.mxu0 %v1739
  %v3483 = vpop.f32.mrf.mxu0
  %v3484 = vadd.f32 0.0, %v3483
  %3485 = vmatmul.f32.gmra.mxu0 %v1742
  %v3486 = vpop.f32.mrf.mxu0
  %v3487 = vadd.f32 0.0, %v3486
  %3488 = vmatmul.f32.gmra.mxu0 %v1745
  %v3489 = vpop.f32.mrf.mxu0
  %v3490 = vadd.f32 0.0, %v3489
  %3491 = vmatmul.f32.gmra.mxu0 %v1748
  %v3492 = vpop.f32.mrf.mxu0
  %v3493 = vadd.f32 0.0, %v3492
  %3494 = vmatmul.f32.gmra.mxu0 %v1751
  %v3495 = vpop.f32.mrf.mxu0
  %v3496 = vadd.f32 0.0, %v3495
  %3497 = vmatmul.f32.gmra.mxu0 %v1754
  %v3498 = vpop.f32.mrf.mxu0
  %v3499 = vadd.f32 0.0, %v3498
  %3500 = vmatmul.f32.gmra.mxu0 %v1757
  %v3501 = vpop.f32.mrf.mxu0
  %v3502 = vadd.f32 0.0, %v3501
  %3503 = vmatmul.f32.gmra.mxu0 %v1760
  %v3504 = vpop.f32.mrf.mxu0
  %v3505 = vadd.f32 0.0, %v3504
  %3506 = vmatmul.f32.gmra.mxu0 %v1763
  %v3507 = vpop.f32.mrf.mxu0
  %v3508 = vadd.f32 0.0, %v3507
  %3509 = vmatmul.f32.gmra.mxu0 %v1766
  %v3510 = vpop.f32.mrf.mxu0
  %v3511 = vadd.f32 0.0, %v3510
  %3512 = vmatmul.f32.gmra.mxu0 %v1769
  %v3513 = vpop.f32.mrf.mxu0
  %v3514 = vadd.f32 0.0, %v3513
  %3515 = vmatmul.f32.gmra.mxu0 %v1772
  %v3516 = vpop.f32.mrf.mxu0
  %v3517 = vadd.f32 0.0, %v3516
  %3518 = vmatmul.f32.gmra.mxu0 %v1775
  %v3519 = vpop.f32.mrf.mxu0
  %v3520 = vadd.f32 0.0, %v3519
  %3521 = vmatmul.f32.gmra.mxu0 %v1778
  %v3522 = vpop.f32.mrf.mxu0
  %v3523 = vadd.f32 0.0, %v3522
  %3524 = vmatmul.f32.gmra.mxu0 %v1781
  %v3525 = vpop.f32.mrf.mxu0
  %v3526 = vadd.f32 0.0, %v3525
  %3527 = vmatmul.f32.gmra.mxu0 %v1784
  %v3528 = vpop.f32.mrf.mxu0
  %v3529 = vadd.f32 0.0, %v3528
  %3530 = vmatmul.f32.gmra.mxu0 %v1787
  %v3531 = vpop.f32.mrf.mxu0
  %v3532 = vadd.f32 0.0, %v3531
  %3533 = vmatmul.f32.gmra.mxu0 %v1790
  %v3534 = vpop.f32.mrf.mxu0
  %v3535 = vadd.f32 0.0, %v3534
  %3536 = vmatmul.f32.gmra.mxu0 %v1793
  %v3537 = vpop.f32.mrf.mxu0
  %v3538 = vadd.f32 0.0, %v3537
  %3539 = vmatmul.f32.gmra.mxu0 %v1796
  %v3540 = vpop.f32.mrf.mxu0
  %v3541 = vadd.f32 0.0, %v3540
  %3542 = vmatmul.f32.gmra.mxu0 %v1799
  %v3543 = vpop.f32.mrf.mxu0
  %v3544 = vadd.f32 0.0, %v3543
  %3545 = vmatmul.f32.gmra.mxu0 %v1802
  %v3546 = vpop.f32.mrf.mxu0
  %v3547 = vadd.f32 0.0, %v3546
  %3548 = vmatmul.f32.gmra.mxu0 %v1805
  %v3549 = vpop.f32.mrf.mxu0
  %v3550 = vadd.f32 0.0, %v3549
  %3551 = vmatmul.f32.gmra.mxu0 %v1808
  %v3552 = vpop.f32.mrf.mxu0
  %v3553 = vadd.f32 0.0, %v3552
  %3554 = vmatmul.f32.gmra.mxu0 %v1811
  %v3555 = vpop.f32.mrf.mxu0
  %v3556 = vadd.f32 0.0, %v3555
  %3557 = vmatmul.f32.gmra.mxu0 %v1814
  %v3558 = vpop.f32.mrf.mxu0
  %v3559 = vadd.f32 0.0, %v3558
  %3560 = vmatmul.f32.gmra.mxu0 %v1817
  %v3561 = vpop.f32.mrf.mxu0
  %v3562 = vadd.f32 0.0, %v3561
  %3563 = vmatmul.f32.gmra.mxu0 %v1820
  %v3564 = vpop.f32.mrf.mxu0
  %v3565 = vadd.f32 0.0, %v3564
  %3566 = vmatmul.f32.gmra.mxu0 %v1823
  %v3567 = vpop.f32.mrf.mxu0
  %v3568 = vadd.f32 0.0, %v3567
  %3569 = vmatmul.f32.gmra.mxu0 %v1826
  %v3570 = vpop.f32.mrf.mxu0
  %v3571 = vadd.f32 0.0, %v3570
  %3572 = vmatmul.f32.gmra.mxu0 %v1829
  %v3573 = vpop.f32.mrf.mxu0
  %v3574 = vadd.f32 0.0, %v3573
  %3575 = vmatmul.f32.gmra.mxu0 %v1832
  %v3576 = vpop.f32.mrf.mxu0
  %v3577 = vadd.f32 0.0, %v3576
  %3578 = vmatmul.f32.gmra.mxu0 %v1835
  %v3579 = vpop.f32.mrf.mxu0
  %v3580 = vadd.f32 0.0, %v3579
  %3581 = vmatmul.f32.gmra.mxu0 %v1838
  %v3582 = vpop.f32.mrf.mxu0
  %v3583 = vadd.f32 0.0, %v3582
  %3584 = vmatmul.f32.gmra.mxu0 %v1841
  %v3585 = vpop.f32.mrf.mxu0
  %v3586 = vadd.f32 0.0, %v3585
  %3587 = vmatmul.f32.gmra.mxu0 %v1844
  %v3588 = vpop.f32.mrf.mxu0
  %v3589 = vadd.f32 0.0, %v3588
  %3590 = vmatmul.f32.gmra.mxu0 %v1847
  %v3591 = vpop.f32.mrf.mxu0
  %v3592 = vadd.f32 0.0, %v3591
  %3593 = vmatmul.f32.gmra.mxu0 %v1850
  %v3594 = vpop.f32.mrf.mxu0
  %v3595 = vadd.f32 0.0, %v3594
  %3596 = vmatmul.f32.gmra.mxu0 %v1853
  %v3597 = vpop.f32.mrf.mxu0
  %v3598 = vadd.f32 0.0, %v3597
  %3599 = vmatmul.f32.gmra.mxu0 %v1856
  %v3600 = vpop.f32.mrf.mxu0
  %v3601 = vadd.f32 0.0, %v3600
  %3602 = vmatmul.f32.gmra.mxu0 %v1859
  %v3603 = vpop.f32.mrf.mxu0
  %v3604 = vadd.f32 0.0, %v3603
  %3605 = vmatmul.f32.gmra.mxu0 %v1862
  %v3606 = vpop.f32.mrf.mxu0
  %v3607 = vadd.f32 0.0, %v3606
  %3608 = vmatmul.f32.gmra.mxu0 %v1865
  %v3609 = vpop.f32.mrf.mxu0
  %v3610 = vadd.f32 0.0, %v3609
  %3611 = vmatmul.f32.gmra.mxu0 %v1868
  %v3612 = vpop.f32.mrf.mxu0
  %v3613 = vadd.f32 0.0, %v3612
  %3614 = vmatmul.f32.gmra.mxu0 %v1871
  %v3615 = vpop.f32.mrf.mxu0
  %v3616 = vadd.f32 0.0, %v3615
  %3617 = vmatmul.f32.gmra.mxu0 %v1874
  %v3618 = vpop.f32.mrf.mxu0
  %v3619 = vadd.f32 0.0, %v3618
  %3620 = vmatmul.f32.gmra.mxu0 %v1877
  %v3621 = vpop.f32.mrf.mxu0
  %v3622 = vadd.f32 0.0, %v3621
  %3623 = vmatmul.f32.gmra.mxu0 %v1880
  %v3624 = vpop.f32.mrf.mxu0
  %v3625 = vadd.f32 0.0, %v3624
  %3626 = vmatmul.f32.gmra.mxu0 %v1883
  %v3627 = vpop.f32.mrf.mxu0
  %v3628 = vadd.f32 0.0, %v3627
  %3629 = vmatmul.f32.gmra.mxu0 %v1886
  %v3630 = vpop.f32.mrf.mxu0
  %v3631 = vadd.f32 0.0, %v3630
  %3632 = vmatmul.f32.gmra.mxu0 %v1889
  %v3633 = vpop.f32.mrf.mxu0
  %v3634 = vadd.f32 0.0, %v3633
  %3635 = vmatmul.f32.gmra.mxu0 %v1892
  %v3636 = vpop.f32.mrf.mxu0
  %v3637 = vadd.f32 0.0, %v3636
  %3638 = vmatmul.f32.gmra.mxu0 %v1895
  %v3639 = vpop.f32.mrf.mxu0
  %v3640 = vadd.f32 0.0, %v3639
  %3641 = vmatmul.f32.gmra.mxu0 %v1898
  %v3642 = vpop.f32.mrf.mxu0
  %v3643 = vadd.f32 0.0, %v3642
  %3644 = vmatmul.f32.gmra.mxu0 %v1901
  %v3645 = vpop.f32.mrf.mxu0
  %v3646 = vadd.f32 0.0, %v3645
  %3647 = vmatmul.f32.gmra.mxu0 %v1904
  %v3648 = vpop.f32.mrf.mxu0
  %v3649 = vadd.f32 0.0, %v3648
  %3650 = vmatmul.f32.gmra.mxu0 %v1907
  %v3651 = vpop.f32.mrf.mxu0
  %v3652 = vadd.f32 0.0, %v3651
  %3653 = vmatmul.f32.gmra.mxu0 %v1910
  %v3654 = vpop.f32.mrf.mxu0
  %v3655 = vadd.f32 0.0, %v3654
  %3656 = vmatmul.f32.gmra.mxu0 %v1913
  %v3657 = vpop.f32.mrf.mxu0
  %v3658 = vadd.f32 0.0, %v3657
  %3659 = vmatmul.f32.gmra.mxu0 %v1916
  %v3660 = vpop.f32.mrf.mxu0
  %v3661 = vadd.f32 0.0, %v3660
  %3662 = vmatmul.f32.gmra.mxu0 %v1919
  %v3663 = vpop.f32.mrf.mxu0
  %v3664 = vadd.f32 0.0, %v3663
  %3665 = vmatmul.f32.gmra.mxu0 %v1922
  %v3666 = vpop.f32.mrf.mxu0
  %v3667 = vadd.f32 0.0, %v3666
  %3668 = vmatmul.f32.gmra.mxu0 %v1925
  %v3669 = vpop.f32.mrf.mxu0
  %v3670 = vadd.f32 0.0, %v3669
  %3671 = vmatmul.f32.gmra.mxu0 %v1928
  %v3672 = vpop.f32.mrf.mxu0
  %v3673 = vadd.f32 0.0, %v3672
  %3674 = vmatmul.f32.gmra.mxu0 %v1931
  %v3675 = vpop.f32.mrf.mxu0
  %v3676 = vadd.f32 0.0, %v3675
  %3677 = vmatmul.f32.gmra.mxu0 %v1934
  %v3678 = vpop.f32.mrf.mxu0
  %v3679 = vadd.f32 0.0, %v3678
  %3680 = vmatmul.f32.gmra.mxu0 %v1937
  %v3681 = vpop.f32.mrf.mxu0
  %v3682 = vadd.f32 0.0, %v3681
  %3683 = vmatmul.f32.gmra.mxu0 %v1940
  %v3684 = vpop.f32.mrf.mxu0
  %v3685 = vadd.f32 0.0, %v3684
  %3686 = vmatmul.f32.gmra.mxu0 %v1943
  %v3687 = vpop.f32.mrf.mxu0
  %v3688 = vadd.f32 0.0, %v3687
  %3689 = vmatmul.f32.gmra.mxu0 %v1946
  %v3690 = vpop.f32.mrf.mxu0
  %v3691 = vadd.f32 0.0, %v3690
  %3692 = vmatmul.f32.gmra.mxu0 %v1949
  %v3693 = vpop.f32.mrf.mxu0
  %v3694 = vadd.f32 0.0, %v3693
  %3695 = vmatmul.f32.gmra.mxu0 %v1952
  %v3696 = vpop.f32.mrf.mxu0
  %v3697 = vadd.f32 0.0, %v3696
  %3698 = vmatmul.f32.gmra.mxu0 %v1955
  %v3699 = vpop.f32.mrf.mxu0
  %v3700 = vadd.f32 0.0, %v3699
  %3701 = vmatmul.f32.gmra.mxu0 %v1958
  %v3702 = vpop.f32.mrf.mxu0
  %v3703 = vadd.f32 0.0, %v3702
  %3704 = vmatmul.f32.gmra.mxu0 %v1961
  %v3705 = vpop.f32.mrf.mxu0
  %v3706 = vadd.f32 0.0, %v3705
  %3707 = vmatmul.f32.gmra.mxu0 %v1964
  %v3708 = vpop.f32.mrf.mxu0
  %v3709 = vadd.f32 0.0, %v3708
  %3710 = vmatmul.f32.gmra.mxu0 %v1967
  %v3711 = vpop.f32.mrf.mxu0
  %v3712 = vadd.f32 0.0, %v3711
  %3713 = vmatmul.f32.gmra.mxu0 %v1970
  %v3714 = vpop.f32.mrf.mxu0
  %v3715 = vadd.f32 0.0, %v3714
  %3716 = vmatmul.f32.gmra.mxu0 %v1973
  %v3717 = vpop.f32.mrf.mxu0
  %v3718 = vadd.f32 0.0, %v3717
  %3719 = vmatmul.f32.gmra.mxu0 %v1976
  %v3720 = vpop.f32.mrf.mxu0
  %v3721 = vadd.f32 0.0, %v3720
  %3722 = vmatmul.f32.gmra.mxu0 %v1979
  %v3723 = vpop.f32.mrf.mxu0
  %v3724 = vadd.f32 0.0, %v3723
  %3725 = vmatmul.f32.gmra.mxu0 %v1982
  %v3726 = vpop.f32.mrf.mxu0
  %v3727 = vadd.f32 0.0, %v3726
  %3728 = vmatmul.f32.gmra.mxu0 %v1985
  %v3729 = vpop.f32.mrf.mxu0
  %v3730 = vadd.f32 0.0, %v3729
  %3731 = vmatmul.f32.gmra.mxu0 %v1988
  %v3732 = vpop.f32.mrf.mxu0
  %v3733 = vadd.f32 0.0, %v3732
  %3734 = vmatmul.f32.gmra.mxu0 %v1991
  %v3735 = vpop.f32.mrf.mxu0
  %v3736 = vadd.f32 0.0, %v3735
  %3737 = vmatmul.f32.gmra.mxu0 %v1994
  %v3738 = vpop.f32.mrf.mxu0
  %v3739 = vadd.f32 0.0, %v3738
  %3740 = vmatmul.f32.gmra.mxu0 %v1997
  %v3741 = vpop.f32.mrf.mxu0
  %v3742 = vadd.f32 0.0, %v3741
  %3743 = vmatmul.f32.gmra.mxu0 %v2000
  %v3744 = vpop.f32.mrf.mxu0
  %v3745 = vadd.f32 0.0, %v3744
  %3746 = vmatmul.f32.gmra.mxu0 %v2003
  %v3747 = vpop.f32.mrf.mxu0
  %v3748 = vadd.f32 0.0, %v3747
  %3749 = vmatmul.f32.gmra.mxu0 %v2006
  %v3750 = vpop.f32.mrf.mxu0
  %v3751 = vadd.f32 0.0, %v3750
  %3752 = vmatmul.f32.gmra.mxu0 %v2009
  %v3753 = vpop.f32.mrf.mxu0
  %v3754 = vadd.f32 0.0, %v3753
  %3755 = vmatmul.f32.gmra.mxu0 %v2012
  %v3756 = vpop.f32.mrf.mxu0
  %v3757 = vadd.f32 0.0, %v3756
  %3758 = vmatmul.f32.gmra.mxu0 %v2015
  %v3759 = vpop.f32.mrf.mxu0
  %v3760 = vadd.f32 0.0, %v3759
  %3761 = vmatmul.f32.gmra.mxu0 %v2018
  %v3762 = vpop.f32.mrf.mxu0
  %v3763 = vadd.f32 0.0, %v3762
  %3764 = vmatmul.f32.gmra.mxu0 %v2021
  %v3765 = vpop.f32.mrf.mxu0
  %v3766 = vadd.f32 0.0, %v3765
  %3767 = vmatmul.f32.gmra.mxu0 %v2024
  %v3768 = vpop.f32.mrf.mxu0
  %v3769 = vadd.f32 0.0, %v3768
  %3770 = vmatmul.f32.gmra.mxu0 %v2027
  %v3771 = vpop.f32.mrf.mxu0
  %v3772 = vadd.f32 0.0, %v3771
  %3773 = vmatmul.f32.gmra.mxu0 %v2030
  %v3774 = vpop.f32.mrf.mxu0
  %v3775 = vadd.f32 0.0, %v3774
  %3776 = vmatmul.f32.gmra.mxu0 %v2033
  %v3777 = vpop.f32.mrf.mxu0
  %v3778 = vadd.f32 0.0, %v3777
  %3779 = vmatmul.f32.gmra.mxu0 %v2036
  %v3780 = vpop.f32.mrf.mxu0
  %v3781 = vadd.f32 0.0, %v3780
  %3782 = vmatmul.f32.gmra.mxu0 %v2039
  %v3783 = vpop.f32.mrf.mxu0
  %v3784 = vadd.f32 0.0, %v3783
  %3785 = vmatmul.f32.gmra.mxu0 %v2042
  %v3786 = vpop.f32.mrf.mxu0
  %v3787 = vadd.f32 0.0, %v3786
  %3788 = vmatmul.f32.gmra.mxu0 %v2045
  %v3789 = vpop.f32.mrf.mxu0
  %v3790 = vadd.f32 0.0, %v3789
  %3791 = vmatmul.f32.gmra.mxu0 %v2048
  %v3792 = vpop.f32.mrf.mxu0
  %v3793 = vadd.f32 0.0, %v3792
  %3794 = vmatmul.f32.gmra.mxu0 %v2051
  %v3795 = vpop.f32.mrf.mxu0
  %v3796 = vadd.f32 0.0, %v3795
  %3797 = vmatmul.f32.gmra.mxu0 %v2054
  %v3798 = vpop.f32.mrf.mxu0
  %v3799 = vadd.f32 0.0, %v3798
  %3800 = vmatmul.f32.gmra.mxu0 %v2057
  %v3801 = vpop.f32.mrf.mxu0
  %v3802 = vadd.f32 0.0, %v3801
  %3803 = vmatmul.f32.gmra.mxu0 %v2060
  %v3804 = vpop.f32.mrf.mxu0
  %v3805 = vadd.f32 0.0, %v3804
  %3806 = vmatmul.f32.gmra.mxu0 %v2063
  %v3807 = vpop.f32.mrf.mxu0
  %v3808 = vadd.f32 0.0, %v3807
  %3809 = vmatmul.f32.gmra.mxu0 %v2066
  %v3810 = vpop.f32.mrf.mxu0
  %v3811 = vadd.f32 0.0, %v3810
  %3812 = vmatmul.f32.gmra.mxu0 %v2069
  %v3813 = vpop.f32.mrf.mxu0
  %v3814 = vadd.f32 0.0, %v3813
  %3815 = vmatmul.f32.gmra.mxu0 %v2072
  %v3816 = vpop.f32.mrf.mxu0
  %v3817 = vadd.f32 0.0, %v3816
  %3818 = vmatmul.f32.gmra.mxu0 %v2075
  %v3819 = vpop.f32.mrf.mxu0
  %v3820 = vadd.f32 0.0, %v3819
  %3821 = vmatmul.f32.gmra.mxu0 %v2078
  %v3822 = vpop.f32.mrf.mxu0
  %v3823 = vadd.f32 0.0, %v3822
  %3824 = vmatmul.f32.gmra.mxu0 %v2081
  %v3825 = vpop.f32.mrf.mxu0
  %v3826 = vadd.f32 0.0, %v3825
  %3827 = vmatmul.f32.gmra.mxu0 %v2084
  %v3828 = vpop.f32.mrf.mxu0
  %v3829 = vadd.f32 0.0, %v3828
  %3830 = vmatmul.f32.gmra.mxu0 %v2087
  %v3831 = vpop.f32.mrf.mxu0
  %v3832 = vadd.f32 0.0, %v3831
  %3833 = vmatmul.f32.gmra.mxu0 %v2090
  %v3834 = vpop.f32.mrf.mxu0
  %v3835 = vadd.f32 0.0, %v3834
  %3836 = vmatmul.f32.gmra.mxu0 %v2093
  %v3837 = vpop.f32.mrf.mxu0
  %v3838 = vadd.f32 0.0, %v3837
  %3839 = vmatmul.f32.gmra.mxu0 %v2096
  %v3840 = vpop.f32.mrf.mxu0
  %v3841 = vadd.f32 0.0, %v3840
  %3842 = vmatmul.f32.gmra.mxu0 %v2099
  %v3843 = vpop.f32.mrf.mxu0
  %v3844 = vadd.f32 0.0, %v3843
  %3845 = vmatmul.f32.gmra.mxu0 %v2102
  %v3846 = vpop.f32.mrf.mxu0
  %v3847 = vadd.f32 0.0, %v3846
  %3848 = vmatmul.f32.gmra.mxu0 %v2105
  %v3849 = vpop.f32.mrf.mxu0
  %v3850 = vadd.f32 0.0, %v3849
  %3851 = vmatmul.f32.gmra.mxu0 %v2108
  %v3852 = vpop.f32.mrf.mxu0
  %v3853 = vadd.f32 0.0, %v3852
  %3854 = vmatmul.f32.gmra.mxu0 %v2111
  %v3855 = vpop.f32.mrf.mxu0
  %v3856 = vadd.f32 0.0, %v3855
  %3857 = vmatmul.f32.gmra.mxu0 %v2114
  %v3858 = vpop.f32.mrf.mxu0
  %v3859 = vadd.f32 0.0, %v3858
  %3860 = vmatmul.f32.gmra.mxu0 %v2117
  %v3861 = vpop.f32.mrf.mxu0
  %v3862 = vadd.f32 0.0, %v3861
  %3863 = vmatmul.f32.gmra.mxu0 %v2120
  %v3864 = vpop.f32.mrf.mxu0
  %v3865 = vadd.f32 0.0, %v3864
  %3866 = vmatmul.f32.gmra.mxu0 %v2123
  %v3867 = vpop.f32.mrf.mxu0
  %v3868 = vadd.f32 0.0, %v3867
  %3869 = vmatmul.f32.gmra.mxu0 %v2126
  %v3870 = vpop.f32.mrf.mxu0
  %v3871 = vadd.f32 0.0, %v3870
  %3872 = vmatmul.f32.gmra.mxu0 %v2129
  %v3873 = vpop.f32.mrf.mxu0
  %v3874 = vadd.f32 0.0, %v3873
  %3875 = vmatmul.f32.gmra.mxu0 %v2132
  %v3876 = vpop.f32.mrf.mxu0
  %v3877 = vadd.f32 0.0, %v3876
  %3878 = vmatmul.f32.gmra.mxu0 %v2135
  %v3879 = vpop.f32.mrf.mxu0
  %v3880 = vadd.f32 0.0, %v3879
  %3881 = vmatmul.f32.gmra.mxu0 %v2138
  %v3882 = vpop.f32.mrf.mxu0
  %v3883 = vadd.f32 0.0, %v3882
  %3884 = vmatmul.f32.gmra.mxu0 %v2141
  %v3885 = vpop.f32.mrf.mxu0
  %v3886 = vadd.f32 0.0, %v3885
  %3887 = vmatmul.f32.gmra.mxu0 %v2144
  %v3888 = vpop.f32.mrf.mxu0
  %v3889 = vadd.f32 0.0, %v3888
  %3890 = vmatmul.f32.gmra.mxu0 %v2147
  %v3891 = vpop.f32.mrf.mxu0
  %v3892 = vadd.f32 0.0, %v3891
  %3893 = vmatmul.f32.gmra.mxu0 %v2150
  %v3894 = vpop.f32.mrf.mxu0
  %v3895 = vadd.f32 0.0, %v3894
  %3896 = vmatmul.f32.gmra.mxu0 %v2153
  %v3897 = vpop.f32.mrf.mxu0
  %v3898 = vadd.f32 0.0, %v3897
  %3899 = vmatmul.f32.gmra.mxu0 %v2156
  %v3900 = vpop.f32.mrf.mxu0
  %v3901 = vadd.f32 0.0, %v3900
  %3902 = vmatmul.f32.gmra.mxu0 %v2159
  %v3903 = vpop.f32.mrf.mxu0
  %v3904 = vadd.f32 0.0, %v3903
  %3905 = vmatmul.f32.gmra.mxu0 %v2162
  %v3906 = vpop.f32.mrf.mxu0
  %v3907 = vadd.f32 0.0, %v3906
  %3908 = vmatmul.f32.gmra.mxu0 %v2165
  %v3909 = vpop.f32.mrf.mxu0
  %v3910 = vadd.f32 0.0, %v3909
  %3911 = vmatmul.f32.gmra.mxu0 %v2168
  %v3912 = vpop.f32.mrf.mxu0
  %v3913 = vadd.f32 0.0, %v3912
  %3914 = vmatmul.f32.gmra.mxu0 %v2171
  %v3915 = vpop.f32.mrf.mxu0
  %v3916 = vadd.f32 0.0, %v3915
  %3917 = vmatmul.f32.gmra.mxu0 %v2174
  %v3918 = vpop.f32.mrf.mxu0
  %v3919 = vadd.f32 0.0, %v3918
  %3920 = vmatmul.f32.gmra.mxu0 %v2177
  %v3921 = vpop.f32.mrf.mxu0
  %v3922 = vadd.f32 0.0, %v3921
  %3923 = vmatmul.f32.gmra.mxu0 %v2180
  %v3924 = vpop.f32.mrf.mxu0
  %v3925 = vadd.f32 0.0, %v3924
  %3926 = vmatmul.f32.gmra.mxu0 %v2183
  %v3927 = vpop.f32.mrf.mxu0
  %v3928 = vadd.f32 0.0, %v3927
  %3929 = vmatmul.f32.gmra.mxu0 %v2186
  %v3930 = vpop.f32.mrf.mxu0
  %v3931 = vadd.f32 0.0, %v3930
  %3932 = vmatmul.f32.gmra.mxu0 %v2189
  %v3933 = vpop.f32.mrf.mxu0
  %v3934 = vadd.f32 0.0, %v3933
  %3935 = vmatmul.f32.gmra.mxu0 %v2192
  %v3936 = vpop.f32.mrf.mxu0
  %v3937 = vadd.f32 0.0, %v3936
  %3938 = vmatmul.f32.gmra.mxu0 %v2195
  %v3939 = vpop.f32.mrf.mxu0
  %v3940 = vadd.f32 0.0, %v3939
  %3941 = vmatmul.f32.gmra.mxu0 %v2198
  %v3942 = vpop.f32.mrf.mxu0
  %v3943 = vadd.f32 0.0, %v3942
  %3944 = vmatmul.f32.gmra.mxu0 %v2201
  %v3945 = vpop.f32.mrf.mxu0
  %v3946 = vadd.f32 0.0, %v3945
  %3947 = vmatmul.f32.gmra.mxu0 %v2204
  %v3948 = vpop.f32.mrf.mxu0
  %v3949 = vadd.f32 0.0, %v3948
  %3950 = vmatmul.f32.gmra.mxu0 %v2207
  %v3951 = vpop.f32.mrf.mxu0
  %v3952 = vadd.f32 0.0, %v3951
  %3953 = vmatmul.f32.gmra.mxu0 %v2210
  %v3954 = vpop.f32.mrf.mxu0
  %v3955 = vadd.f32 0.0, %v3954
  %3956 = vmatmul.f32.gmra.mxu0 %v2213
  %v3957 = vpop.f32.mrf.mxu0
  %v3958 = vadd.f32 0.0, %v3957
  %3959 = vmatmul.f32.gmra.mxu0 %v2216
  %v3960 = vpop.f32.mrf.mxu0
  %v3961 = vadd.f32 0.0, %v3960
  %3962 = vmatmul.f32.gmra.mxu0 %v2219
  %v3963 = vpop.f32.mrf.mxu0
  %v3964 = vadd.f32 0.0, %v3963
  %3965 = vmatmul.f32.gmra.mxu0 %v2222
  %v3966 = vpop.f32.mrf.mxu0
  %v3967 = vadd.f32 0.0, %v3966
  %3968 = vmatmul.f32.gmra.mxu0 %v2225
  %v3969 = vpop.f32.mrf.mxu0
  %v3970 = vadd.f32 0.0, %v3969
  %3971 = vmatmul.f32.gmra.mxu0 %v2228
  %v3972 = vpop.f32.mrf.mxu0
  %v3973 = vadd.f32 0.0, %v3972
  %3974 = vmatmul.f32.gmra.mxu0 %v2231
  %v3975 = vpop.f32.mrf.mxu0
  %v3976 = vadd.f32 0.0, %v3975
  %3977 = vmatmul.f32.gmra.mxu0 %v2234
  %v3978 = vpop.f32.mrf.mxu0
  %v3979 = vadd.f32 0.0, %v3978
  %3980 = vmatmul.f32.gmra.mxu0 %v2237
  %v3981 = vpop.f32.mrf.mxu0
  %v3982 = vadd.f32 0.0, %v3981
  %3983 = vmatmul.f32.gmra.mxu0 %v2240
  %v3984 = vpop.f32.mrf.mxu0
  %v3985 = vadd.f32 0.0, %v3984
  %3986 = vmatmul.f32.gmra.mxu0 %v2243
  %v3987 = vpop.f32.mrf.mxu0
  %v3988 = vadd.f32 0.0, %v3987
  %3989 = vmatmul.f32.gmra.mxu0 %v2246
  %v3990 = vpop.f32.mrf.mxu0
  %v3991 = vadd.f32 0.0, %v3990
  %3992 = vmatmul.f32.gmra.mxu0 %v2249
  %v3993 = vpop.f32.mrf.mxu0
  %v3994 = vadd.f32 0.0, %v3993
  %3995 = vmatmul.f32.gmra.mxu0 %v2252
  %v3996 = vpop.f32.mrf.mxu0
  %v3997 = vadd.f32 0.0, %v3996
  %3998 = vmatmul.f32.gmra.mxu0 %v2255
  %v3999 = vpop.f32.mrf.mxu0
  %v4000 = vadd.f32 0.0, %v3999
  %4001 = vmatmul.f32.gmra.mxu0 %v2258
  %v4002 = vpop.f32.mrf.mxu0
  %v4003 = vadd.f32 0.0, %v4002
  %4004 = vmatmul.f32.gmra.mxu0 %v2261
  %v4005 = vpop.f32.mrf.mxu0
  %v4006 = vadd.f32 0.0, %v4005
  %4007 = vmatmul.f32.gmra.mxu0 %v2264
  %v4008 = vpop.f32.mrf.mxu0
  %v4009 = vadd.f32 0.0, %v4008
  %4010 = vmatmul.f32.gmra.mxu0 %v2267
  %v4011 = vpop.f32.mrf.mxu0
  %v4012 = vadd.f32 0.0, %v4011
  %4013 = vmatmul.f32.gmra.mxu0 %v2270
  %v4014 = vpop.f32.mrf.mxu0
  %v4015 = vadd.f32 0.0, %v4014
  %4016 = vmatmul.f32.gmra.mxu0 %v2273
  %v4017 = vpop.f32.mrf.mxu0
  %v4018 = vadd.f32 0.0, %v4017
  %4019 = vmatmul.f32.gmra.mxu0 %v2276
  %v4020 = vpop.f32.mrf.mxu0
  %v4021 = vadd.f32 0.0, %v4020
  %4022 = vmatmul.f32.gmra.mxu0 %v2279
  %v4023 = vpop.f32.mrf.mxu0
  %v4024 = vadd.f32 0.0, %v4023
  %4025 = vmatmul.f32.gmra.mxu0 %v2282
  %v4026 = vpop.f32.mrf.mxu0
  %v4027 = vadd.f32 0.0, %v4026
  %4028 = vmatmul.f32.gmra.mxu0 %v2285
  %v4029 = vpop.f32.mrf.mxu0
  %v4030 = vadd.f32 0.0, %v4029
  %4031 = vmatmul.f32.gmra.mxu0 %v2288
  %v4032 = vpop.f32.mrf.mxu0
  %v4033 = vadd.f32 0.0, %v4032
  %4034 = vmatmul.f32.gmra.mxu0 %v2291
  %v4035 = vpop.f32.mrf.mxu0
  %v4036 = vadd.f32 0.0, %v4035
  %4037 = vmatmul.f32.gmra.mxu0 %v2294
  %v4038 = vpop.f32.mrf.mxu0
  %v4039 = vadd.f32 0.0, %v4038
  %4040 = vmatmul.f32.gmra.mxu0 %v2297
  %v4041 = vpop.f32.mrf.mxu0
  %v4042 = vadd.f32 0.0, %v4041
  %4043 = vmatmul.f32.gmra.mxu0 %v2300
  %v4044 = vpop.f32.mrf.mxu0
  %v4045 = vadd.f32 0.0, %v4044
  %4046 = vmatmul.f32.gmra.mxu0 %v2303
  %v4047 = vpop.f32.mrf.mxu0
  %v4048 = vadd.f32 0.0, %v4047
  %4049 = vmatmul.f32.gmra.mxu0 %v2306
  %v4050 = vpop.f32.mrf.mxu0
  %v4051 = vadd.f32 0.0, %v4050
  %4052 = vmatmul.f32.gmra.mxu0 %v2309
  %v4053 = vpop.f32.mrf.mxu0
  %v4054 = vadd.f32 0.0, %v4053
  %4055 = vmatmul.f32.gmra.mxu0 %v2312
  %v4056 = vpop.f32.mrf.mxu0
  %v4057 = vadd.f32 0.0, %v4056
  %4058 = vmatmul.f32.gmra.mxu0 %v2315
  %v4059 = vpop.f32.mrf.mxu0
  %v4060 = vadd.f32 0.0, %v4059
  %4061 = vmatmul.f32.gmra.mxu0 %v2318
  %v4062 = vpop.f32.mrf.mxu0
  %v4063 = vadd.f32 0.0, %v4062
  %4064 = vmatmul.f32.gmra.mxu0 %v2321
  %v4065 = vpop.f32.mrf.mxu0
  %v4066 = vadd.f32 0.0, %v4065
  %4067 = vdwg.mxu0
  %v4068 = vmax.f32 %v2341, %v2773
  %v4069 = vmax.f32 %v2344, %v2776
  %v4070 = vmax.f32 %v2347, %v2779
  %v4071 = vmax.f32 %v2350, %v2782
  %v4072 = vmax.f32 %v2353, %v2785
  %v4073 = vmax.f32 %v2356, %v2788
  %v4074 = vmax.f32 %v2359, %v2791
  %v4075 = vmax.f32 %v2362, %v2794
  %v4076 = vmax.f32 %v2365, %v2797
  %v4077 = vmax.f32 %v2368, %v2800
  %v4078 = vmax.f32 %v2371, %v2803
  %v4079 = vmax.f32 %v2374, %v2806
  %v4080 = vmax.f32 %v2377, %v2809
  %v4081 = vmax.f32 %v2380, %v2812
  %v4082 = vmax.f32 %v2383, %v2815
  %v4083 = vmax.f32 %v2386, %v2818
  %v4084 = vmax.f32 %v2389, %v2821
  %v4085 = vmax.f32 %v2392, %v2824
  %v4086 = vmax.f32 %v2395, %v2827
  %v4087 = vmax.f32 %v2398, %v2830
  %v4088 = vmax.f32 %v2401, %v2833
  %v4089 = vmax.f32 %v2404, %v2836
  %v4090 = vmax.f32 %v2407, %v2839
  %v4091 = vmax.f32 %v2410, %v2842
  %v4092 = vmax.f32 %v2413, %v2845
  %v4093 = vmax.f32 %v2416, %v2848
  %v4094 = vmax.f32 %v2419, %v2851
  %v4095 = vmax.f32 %v2422, %v2854
  %v4096 = vmax.f32 %v2425, %v2857
  %v4097 = vmax.f32 %v2428, %v2860
  %v4098 = vmax.f32 %v2431, %v2863
  %v4099 = vmax.f32 %v2434, %v2866
  %v4100 = vmax.f32 %v2437, %v2869
  %v4101 = vmax.f32 %v2440, %v2872
  %v4102 = vmax.f32 %v2443, %v2875
  %v4103 = vmax.f32 %v2446, %v2878
  %v4104 = vmax.f32 %v2449, %v2881
  %v4105 = vmax.f32 %v2452, %v2884
  %v4106 = vmax.f32 %v2455, %v2887
  %v4107 = vmax.f32 %v2458, %v2890
  %v4108 = vmax.f32 %v2461, %v2893
  %v4109 = vmax.f32 %v2464, %v2896
  %v4110 = vmax.f32 %v2467, %v2899
  %v4111 = vmax.f32 %v2470, %v2902
  %v4112 = vmax.f32 %v2473, %v2905
  %v4113 = vmax.f32 %v2476, %v2908
  %v4114 = vmax.f32 %v2479, %v2911
  %v4115 = vmax.f32 %v2482, %v2914
  %v4116 = vmax.f32 %v2485, %v2917
  %v4117 = vmax.f32 %v2488, %v2920
  %v4118 = vmax.f32 %v2491, %v2923
  %v4119 = vmax.f32 %v2494, %v2926
  %v4120 = vmax.f32 %v2497, %v2929
  %v4121 = vmax.f32 %v2500, %v2932
  %v4122 = vmax.f32 %v2503, %v2935
  %v4123 = vmax.f32 %v2506, %v2938
  %v4124 = vmax.f32 %v2509, %v2941
  %v4125 = vmax.f32 %v2512, %v2944
  %v4126 = vmax.f32 %v2515, %v2947
  %v4127 = vmax.f32 %v2518, %v2950
  %v4128 = vmax.f32 %v2521, %v2953
  %v4129 = vmax.f32 %v2524, %v2956
  %v4130 = vmax.f32 %v2527, %v2959
  %v4131 = vmax.f32 %v2530, %v2962
  %v4132 = vmax.f32 %v2533, %v2965
  %v4133 = vmax.f32 %v2536, %v2968
  %v4134 = vmax.f32 %v2539, %v2971
  %v4135 = vmax.f32 %v2542, %v2974
  %v4136 = vmax.f32 %v2545, %v2977
  %v4137 = vmax.f32 %v2548, %v2980
  %v4138 = vmax.f32 %v2551, %v2983
  %v4139 = vmax.f32 %v2554, %v2986
  %v4140 = vmax.f32 %v2557, %v2989
  %v4141 = vmax.f32 %v2560, %v2992
  %v4142 = vmax.f32 %v2563, %v2995
  %v4143 = vmax.f32 %v2566, %v2998
  %v4144 = vmax.f32 %v2569, %v3001
  %v4145 = vmax.f32 %v2572, %v3004
  %v4146 = vmax.f32 %v2575, %v3007
  %v4147 = vmax.f32 %v2578, %v3010
  %v4148 = vmax.f32 %v2581, %v3013
  %v4149 = vmax.f32 %v2584, %v3016
  %v4150 = vmax.f32 %v2587, %v3019
  %v4151 = vmax.f32 %v2590, %v3022
  %v4152 = vmax.f32 %v2593, %v3025
  %v4153 = vmax.f32 %v2596, %v3028
  %v4154 = vmax.f32 %v2599, %v3031
  %v4155 = vmax.f32 %v2602, %v3034
  %v4156 = vmax.f32 %v2605, %v3037
  %v4157 = vmax.f32 %v2608, %v3040
  %v4158 = vmax.f32 %v2611, %v3043
  %v4159 = vmax.f32 %v2614, %v3046
  %v4160 = vmax.f32 %v2617, %v3049
  %v4161 = vmax.f32 %v2620, %v3052
  %v4162 = vmax.f32 %v2623, %v3055
  %v4163 = vmax.f32 %v2626, %v3058
  %v4164 = vmax.f32 %v2629, %v3061
  %v4165 = vmax.f32 %v2632, %v3064
  %v4166 = vmax.f32 %v2635, %v3067
  %v4167 = vmax.f32 %v2638, %v3070
  %v4168 = vmax.f32 %v2641, %v3073
  %v4169 = vmax.f32 %v2644, %v3076
  %v4170 = vmax.f32 %v2647, %v3079
  %v4171 = vmax.f32 %v2650, %v3082
  %v4172 = vmax.f32 %v2653, %v3085
  %v4173 = vmax.f32 %v2656, %v3088
  %v4174 = vmax.f32 %v2659, %v3091
  %v4175 = vmax.f32 %v2662, %v3094
  %v4176 = vmax.f32 %v2665, %v3097
  %v4177 = vmax.f32 %v2668, %v3100
  %v4178 = vmax.f32 %v2671, %v3103
  %v4179 = vmax.f32 %v2674, %v3106
  %v4180 = vmax.f32 %v2677, %v3109
  %v4181 = vmax.f32 %v2680, %v3112
  %v4182 = vmax.f32 %v2683, %v3115
  %v4183 = vmax.f32 %v2686, %v3118
  %v4184 = vmax.f32 %v2689, %v3121
  %v4185 = vmax.f32 %v2692, %v3124
  %v4186 = vmax.f32 %v2695, %v3127
  %v4187 = vmax.f32 %v2698, %v3130
  %v4188 = vmax.f32 %v2701, %v3133
  %v4189 = vmax.f32 %v2704, %v3136
  %v4190 = vmax.f32 %v2707, %v3139
  %v4191 = vmax.f32 %v2710, %v3142
  %v4192 = vmax.f32 %v2713, %v3145
  %v4193 = vmax.f32 %v2716, %v3148
  %v4194 = vmax.f32 %v2719, %v3151
  %v4195 = vmax.f32 %v2722, %v3154
  %v4196 = vmax.f32 %v2725, %v3157
  %v4197 = vmax.f32 %v2728, %v3160
  %v4198 = vmax.f32 %v2731, %v3163
  %v4199 = vmax.f32 %v2734, %v3166
  %v4200 = vmax.f32 %v2737, %v3169
  %v4201 = vmax.f32 %v2740, %v3172
  %v4202 = vmax.f32 %v2743, %v3175
  %v4203 = vmax.f32 %v2746, %v3178
  %v4204 = vmax.f32 %v2749, %v3181
  %v4205 = vmax.f32 %v2752, %v3184
  %v4206 = vmax.f32 %v2755, %v3187
  %v4207 = vmax.f32 %v2758, %v3190
  %v4208 = vmax.f32 %v2761, %v3193
  %v4209 = vmax.f32 %v2764, %v3196
  %v4210 = vmax.f32 %v2767, %v3199
  %v4211 = vmax.f32 %v2770, %v3202
  %v4212 = vmax.f32 %v3205, %v3637
  %v4213 = vmax.f32 %v3208, %v3640
  %v4214 = vmax.f32 %v3211, %v3643
  %v4215 = vmax.f32 %v3214, %v3646
  %v4216 = vmax.f32 %v3217, %v3649
  %v4217 = vmax.f32 %v3220, %v3652
  %v4218 = vmax.f32 %v3223, %v3655
  %v4219 = vmax.f32 %v3226, %v3658
  %v4220 = vmax.f32 %v3229, %v3661
  %v4221 = vmax.f32 %v3232, %v3664
  %v4222 = vmax.f32 %v3235, %v3667
  %v4223 = vmax.f32 %v3238, %v3670
  %v4224 = vmax.f32 %v3241, %v3673
  %v4225 = vmax.f32 %v3244, %v3676
  %v4226 = vmax.f32 %v3247, %v3679
  %v4227 = vmax.f32 %v3250, %v3682
  %v4228 = vmax.f32 %v3253, %v3685
  %v4229 = vmax.f32 %v3256, %v3688
  %v4230 = vmax.f32 %v3259, %v3691
  %v4231 = vmax.f32 %v3262, %v3694
  %v4232 = vmax.f32 %v3265, %v3697
  %v4233 = vmax.f32 %v3268, %v3700
  %v4234 = vmax.f32 %v3271, %v3703
  %v4235 = vmax.f32 %v3274, %v3706
  %v4236 = vmax.f32 %v3277, %v3709
  %v4237 = vmax.f32 %v3280, %v3712
  %v4238 = vmax.f32 %v3283, %v3715
  %v4239 = vmax.f32 %v3286, %v3718
  %v4240 = vmax.f32 %v3289, %v3721
  %v4241 = vmax.f32 %v3292, %v3724
  %v4242 = vmax.f32 %v3295, %v3727
  %v4243 = vmax.f32 %v3298, %v3730
  %v4244 = vmax.f32 %v3301, %v3733
  %v4245 = vmax.f32 %v3304, %v3736
  %v4246 = vmax.f32 %v3307, %v3739
  %v4247 = vmax.f32 %v3310, %v3742
  %v4248 = vmax.f32 %v3313, %v3745
  %v4249 = vmax.f32 %v3316, %v3748
  %v4250 = vmax.f32 %v3319, %v3751
  %v4251 = vmax.f32 %v3322, %v3754
  %v4252 = vmax.f32 %v3325, %v3757
  %v4253 = vmax.f32 %v3328, %v3760
  %v4254 = vmax.f32 %v3331, %v3763
  %v4255 = vmax.f32 %v3334, %v3766
  %v4256 = vmax.f32 %v3337, %v3769
  %v4257 = vmax.f32 %v3340, %v3772
  %v4258 = vmax.f32 %v3343, %v3775
  %v4259 = vmax.f32 %v3346, %v3778
  %v4260 = vmax.f32 %v3349, %v3781
  %v4261 = vmax.f32 %v3352, %v3784
  %v4262 = vmax.f32 %v3355, %v3787
  %v4263 = vmax.f32 %v3358, %v3790
  %v4264 = vmax.f32 %v3361, %v3793
  %v4265 = vmax.f32 %v3364, %v3796
  %v4266 = vmax.f32 %v3367, %v3799
  %v4267 = vmax.f32 %v3370, %v3802
  %v4268 = vmax.f32 %v3373, %v3805
  %v4269 = vmax.f32 %v3376, %v3808
  %v4270 = vmax.f32 %v3379, %v3811
  %v4271 = vmax.f32 %v3382, %v3814
  %v4272 = vmax.f32 %v3385, %v3817
  %v4273 = vmax.f32 %v3388, %v3820
  %v4274 = vmax.f32 %v3391, %v3823
  %v4275 = vmax.f32 %v3394, %v3826
  %v4276 = vmax.f32 %v3397, %v3829
  %v4277 = vmax.f32 %v3400, %v3832
  %v4278 = vmax.f32 %v3403, %v3835
  %v4279 = vmax.f32 %v3406, %v3838
  %v4280 = vmax.f32 %v3409, %v3841
  %v4281 = vmax.f32 %v3412, %v3844
  %v4282 = vmax.f32 %v3415, %v3847
  %v4283 = vmax.f32 %v3418, %v3850
  %v4284 = vmax.f32 %v3421, %v3853
  %v4285 = vmax.f32 %v3424, %v3856
  %v4286 = vmax.f32 %v3427, %v3859
  %v4287 = vmax.f32 %v3430, %v3862
  %v4288 = vmax.f32 %v3433, %v3865
  %v4289 = vmax.f32 %v3436, %v3868
  %v4290 = vmax.f32 %v3439, %v3871
  %v4291 = vmax.f32 %v3442, %v3874
  %v4292 = vmax.f32 %v3445, %v3877
  %v4293 = vmax.f32 %v3448, %v3880
  %v4294 = vmax.f32 %v3451, %v3883
  %v4295 = vmax.f32 %v3454, %v3886
  %v4296 = vmax.f32 %v3457, %v3889
  %v4297 = vmax.f32 %v3460, %v3892
  %v4298 = vmax.f32 %v3463, %v3895
  %v4299 = vmax.f32 %v3466, %v3898
  %v4300 = vmax.f32 %v3469, %v3901
  %v4301 = vmax.f32 %v3472, %v3904
  %v4302 = vmax.f32 %v3475, %v3907
  %v4303 = vmax.f32 %v3478, %v3910
  %v4304 = vmax.f32 %v3481, %v3913
  %v4305 = vmax.f32 %v3484, %v3916
  %v4306 = vmax.f32 %v3487, %v3919
  %v4307 = vmax.f32 %v3490, %v3922
  %v4308 = vmax.f32 %v3493, %v3925
  %v4309 = vmax.f32 %v3496, %v3928
  %v4310 = vmax.f32 %v3499, %v3931
  %v4311 = vmax.f32 %v3502, %v3934
  %v4312 = vmax.f32 %v3505, %v3937
  %v4313 = vmax.f32 %v3508, %v3940
  %v4314 = vmax.f32 %v3511, %v3943
  %v4315 = vmax.f32 %v3514, %v3946
  %v4316 = vmax.f32 %v3517, %v3949
  %v4317 = vmax.f32 %v3520, %v3952
  %v4318 = vmax.f32 %v3523, %v3955
  %v4319 = vmax.f32 %v3526, %v3958
  %v4320 = vmax.f32 %v3529, %v3961
  %v4321 = vmax.f32 %v3532, %v3964
  %v4322 = vmax.f32 %v3535, %v3967
  %v4323 = vmax.f32 %v3538, %v3970
  %v4324 = vmax.f32 %v3541, %v3973
  %v4325 = vmax.f32 %v3544, %v3976
  %v4326 = vmax.f32 %v3547, %v3979
  %v4327 = vmax.f32 %v3550, %v3982
  %v4328 = vmax.f32 %v3553, %v3985
  %v4329 = vmax.f32 %v3556, %v3988
  %v4330 = vmax.f32 %v3559, %v3991
  %v4331 = vmax.f32 %v3562, %v3994
  %v4332 = vmax.f32 %v3565, %v3997
  %v4333 = vmax.f32 %v3568, %v4000
  %v4334 = vmax.f32 %v3571, %v4003
  %v4335 = vmax.f32 %v3574, %v4006
  %v4336 = vmax.f32 %v3577, %v4009
  %v4337 = vmax.f32 %v3580, %v4012
  %v4338 = vmax.f32 %v3583, %v4015
  %v4339 = vmax.f32 %v3586, %v4018
  %v4340 = vmax.f32 %v3589, %v4021
  %v4341 = vmax.f32 %v3592, %v4024
  %v4342 = vmax.f32 %v3595, %v4027
  %v4343 = vmax.f32 %v3598, %v4030
  %v4344 = vmax.f32 %v3601, %v4033
  %v4345 = vmax.f32 %v3604, %v4036
  %v4346 = vmax.f32 %v3607, %v4039
  %v4347 = vmax.f32 %v3610, %v4042
  %v4348 = vmax.f32 %v3613, %v4045
  %v4349 = vmax.f32 %v3616, %v4048
  %v4350 = vmax.f32 %v3619, %v4051
  %v4351 = vmax.f32 %v3622, %v4054
  %v4352 = vmax.f32 %v3625, %v4057
  %v4353 = vmax.f32 %v3628, %v4060
  %v4354 = vmax.f32 %v3631, %v4063
  %v4355 = vmax.f32 %v3634, %v4066
  %v4356 = vmax.f32 %v4068, %v4212
  %v4357 = vmax.f32 %v4069, %v4213
  %v4358 = vmax.f32 %v4070, %v4214
  %v4359 = vmax.f32 %v4071, %v4215
  %v4360 = vmax.f32 %v4072, %v4216
  %v4361 = vmax.f32 %v4073, %v4217
  %v4362 = vmax.f32 %v4074, %v4218
  %v4363 = vmax.f32 %v4075, %v4219
  %v4364 = vmax.f32 %v4076, %v4220
  %v4365 = vmax.f32 %v4077, %v4221
  %v4366 = vmax.f32 %v4078, %v4222
  %v4367 = vmax.f32 %v4079, %v4223
  %v4368 = vmax.f32 %v4080, %v4224
  %v4369 = vmax.f32 %v4081, %v4225
  %v4370 = vmax.f32 %v4082, %v4226
  %v4371 = vmax.f32 %v4083, %v4227
  %v4372 = vmax.f32 %v4084, %v4228
  %v4373 = vmax.f32 %v4085, %v4229
  %v4374 = vmax.f32 %v4086, %v4230
  %v4375 = vmax.f32 %v4087, %v4231
  %v4376 = vmax.f32 %v4088, %v4232
  %v4377 = vmax.f32 %v4089, %v4233
  %v4378 = vmax.f32 %v4090, %v4234
  %v4379 = vmax.f32 %v4091, %v4235
  %v4380 = vmax.f32 %v4092, %v4236
  %v4381 = vmax.f32 %v4093, %v4237
  %v4382 = vmax.f32 %v4094, %v4238
  %v4383 = vmax.f32 %v4095, %v4239
  %v4384 = vmax.f32 %v4096, %v4240
  %v4385 = vmax.f32 %v4097, %v4241
  %v4386 = vmax.f32 %v4098, %v4242
  %v4387 = vmax.f32 %v4099, %v4243
  %v4388 = vmax.f32 %v4100, %v4244
  %v4389 = vmax.f32 %v4101, %v4245
  %v4390 = vmax.f32 %v4102, %v4246
  %v4391 = vmax.f32 %v4103, %v4247
  %v4392 = vmax.f32 %v4104, %v4248
  %v4393 = vmax.f32 %v4105, %v4249
  %v4394 = vmax.f32 %v4106, %v4250
  %v4395 = vmax.f32 %v4107, %v4251
  %v4396 = vmax.f32 %v4108, %v4252
  %v4397 = vmax.f32 %v4109, %v4253
  %v4398 = vmax.f32 %v4110, %v4254
  %v4399 = vmax.f32 %v4111, %v4255
  %v4400 = vmax.f32 %v4112, %v4256
  %v4401 = vmax.f32 %v4113, %v4257
  %v4402 = vmax.f32 %v4114, %v4258
  %v4403 = vmax.f32 %v4115, %v4259
  %v4404 = vmax.f32 %v4116, %v4260
  %v4405 = vmax.f32 %v4117, %v4261
  %v4406 = vmax.f32 %v4118, %v4262
  %v4407 = vmax.f32 %v4119, %v4263
  %v4408 = vmax.f32 %v4120, %v4264
  %v4409 = vmax.f32 %v4121, %v4265
  %v4410 = vmax.f32 %v4122, %v4266
  %v4411 = vmax.f32 %v4123, %v4267
  %v4412 = vmax.f32 %v4124, %v4268
  %v4413 = vmax.f32 %v4125, %v4269
  %v4414 = vmax.f32 %v4126, %v4270
  %v4415 = vmax.f32 %v4127, %v4271
  %v4416 = vmax.f32 %v4128, %v4272
  %v4417 = vmax.f32 %v4129, %v4273
  %v4418 = vmax.f32 %v4130, %v4274
  %v4419 = vmax.f32 %v4131, %v4275
  %v4420 = vmax.f32 %v4132, %v4276
  %v4421 = vmax.f32 %v4133, %v4277
  %v4422 = vmax.f32 %v4134, %v4278
  %v4423 = vmax.f32 %v4135, %v4279
  %v4424 = vmax.f32 %v4136, %v4280
  %v4425 = vmax.f32 %v4137, %v4281
  %v4426 = vmax.f32 %v4138, %v4282
  %v4427 = vmax.f32 %v4139, %v4283
  %v4428 = vmax.f32 %v4140, %v4284
  %v4429 = vmax.f32 %v4141, %v4285
  %v4430 = vmax.f32 %v4142, %v4286
  %v4431 = vmax.f32 %v4143, %v4287
  %v4432 = vmax.f32 %v4144, %v4288
  %v4433 = vmax.f32 %v4145, %v4289
  %v4434 = vmax.f32 %v4146, %v4290
  %v4435 = vmax.f32 %v4147, %v4291
  %v4436 = vmax.f32 %v4148, %v4292
  %v4437 = vmax.f32 %v4149, %v4293
  %v4438 = vmax.f32 %v4150, %v4294
  %v4439 = vmax.f32 %v4151, %v4295
  %v4440 = vmax.f32 %v4152, %v4296
  %v4441 = vmax.f32 %v4153, %v4297
  %v4442 = vmax.f32 %v4154, %v4298
  %v4443 = vmax.f32 %v4155, %v4299
  %v4444 = vmax.f32 %v4156, %v4300
  %v4445 = vmax.f32 %v4157, %v4301
  %v4446 = vmax.f32 %v4158, %v4302
  %v4447 = vmax.f32 %v4159, %v4303
  %v4448 = vmax.f32 %v4160, %v4304
  %v4449 = vmax.f32 %v4161, %v4305
  %v4450 = vmax.f32 %v4162, %v4306
  %v4451 = vmax.f32 %v4163, %v4307
  %v4452 = vmax.f32 %v4164, %v4308
  %v4453 = vmax.f32 %v4165, %v4309
  %v4454 = vmax.f32 %v4166, %v4310
  %v4455 = vmax.f32 %v4167, %v4311
  %v4456 = vmax.f32 %v4168, %v4312
  %v4457 = vmax.f32 %v4169, %v4313
  %v4458 = vmax.f32 %v4170, %v4314
  %v4459 = vmax.f32 %v4171, %v4315
  %v4460 = vmax.f32 %v4172, %v4316
  %v4461 = vmax.f32 %v4173, %v4317
  %v4462 = vmax.f32 %v4174, %v4318
  %v4463 = vmax.f32 %v4175, %v4319
  %v4464 = vmax.f32 %v4176, %v4320
  %v4465 = vmax.f32 %v4177, %v4321
  %v4466 = vmax.f32 %v4178, %v4322
  %v4467 = vmax.f32 %v4179, %v4323
  %v4468 = vmax.f32 %v4180, %v4324
  %v4469 = vmax.f32 %v4181, %v4325
  %v4470 = vmax.f32 %v4182, %v4326
  %v4471 = vmax.f32 %v4183, %v4327
  %v4472 = vmax.f32 %v4184, %v4328
  %v4473 = vmax.f32 %v4185, %v4329
  %v4474 = vmax.f32 %v4186, %v4330
  %v4475 = vmax.f32 %v4187, %v4331
  %v4476 = vmax.f32 %v4188, %v4332
  %v4477 = vmax.f32 %v4189, %v4333
  %v4478 = vmax.f32 %v4190, %v4334
  %v4479 = vmax.f32 %v4191, %v4335
  %v4480 = vmax.f32 %v4192, %v4336
  %v4481 = vmax.f32 %v4193, %v4337
  %v4482 = vmax.f32 %v4194, %v4338
  %v4483 = vmax.f32 %v4195, %v4339
  %v4484 = vmax.f32 %v4196, %v4340
  %v4485 = vmax.f32 %v4197, %v4341
  %v4486 = vmax.f32 %v4198, %v4342
  %v4487 = vmax.f32 %v4199, %v4343
  %v4488 = vmax.f32 %v4200, %v4344
  %v4489 = vmax.f32 %v4201, %v4345
  %v4490 = vmax.f32 %v4202, %v4346
  %v4491 = vmax.f32 %v4203, %v4347
  %v4492 = vmax.f32 %v4204, %v4348
  %v4493 = vmax.f32 %v4205, %v4349
  %v4494 = vmax.f32 %v4206, %v4350
  %v4495 = vmax.f32 %v4207, %v4351
  %v4496 = vmax.f32 %v4208, %v4352
  %v4497 = vmax.f32 %v4209, %v4353
  %v4498 = vmax.f32 %v4210, %v4354
  %v4499 = vmax.f32 %v4211, %v4355
  %v4500 = vld [vmem:[%s2] sm:$0x1]
  %v4502 = vperm.slane %v4500, 0
  %v4504 = vadd.f32 %v4356, %v4502
  %v4505 = vadd.f32 %v4357, %v4502
  %v4506 = vadd.f32 %v4358, %v4502
  %v4507 = vadd.f32 %v4359, %v4502
  %v4508 = vadd.f32 %v4360, %v4502
  %v4509 = vadd.f32 %v4361, %v4502
  %v4510 = vadd.f32 %v4362, %v4502
  %v4511 = vadd.f32 %v4363, %v4502
  %v4512 = vadd.f32 %v4364, %v4502
  %v4513 = vadd.f32 %v4365, %v4502
  %v4514 = vadd.f32 %v4366, %v4502
  %v4515 = vadd.f32 %v4367, %v4502
  %v4516 = vadd.f32 %v4368, %v4502
  %v4517 = vadd.f32 %v4369, %v4502
  %v4518 = vadd.f32 %v4370, %v4502
  %v4519 = vadd.f32 %v4371, %v4502
  %v4520 = vadd.f32 %v4372, %v4502
  %v4521 = vadd.f32 %v4373, %v4502
  %v4522 = vadd.f32 %v4374, %v4502
  %v4523 = vadd.f32 %v4375, %v4502
  %v4524 = vadd.f32 %v4376, %v4502
  %v4525 = vadd.f32 %v4377, %v4502
  %v4526 = vadd.f32 %v4378, %v4502
  %v4527 = vadd.f32 %v4379, %v4502
  %v4528 = vadd.f32 %v4380, %v4502
  %v4529 = vadd.f32 %v4381, %v4502
  %v4530 = vadd.f32 %v4382, %v4502
  %v4531 = vadd.f32 %v4383, %v4502
  %v4532 = vadd.f32 %v4384, %v4502
  %v4533 = vadd.f32 %v4385, %v4502
  %v4534 = vadd.f32 %v4386, %v4502
  %v4535 = vadd.f32 %v4387, %v4502
  %v4536 = vadd.f32 %v4388, %v4502
  %v4537 = vadd.f32 %v4389, %v4502
  %v4538 = vadd.f32 %v4390, %v4502
  %v4539 = vadd.f32 %v4391, %v4502
  %v4540 = vadd.f32 %v4392, %v4502
  %v4541 = vadd.f32 %v4393, %v4502
  %v4542 = vadd.f32 %v4394, %v4502
  %v4543 = vadd.f32 %v4395, %v4502
  %v4544 = vadd.f32 %v4396, %v4502
  %v4545 = vadd.f32 %v4397, %v4502
  %v4546 = vadd.f32 %v4398, %v4502
  %v4547 = vadd.f32 %v4399, %v4502
  %v4548 = vadd.f32 %v4400, %v4502
  %v4549 = vadd.f32 %v4401, %v4502
  %v4550 = vadd.f32 %v4402, %v4502
  %v4551 = vadd.f32 %v4403, %v4502
  %v4552 = vadd.f32 %v4404, %v4502
  %v4553 = vadd.f32 %v4405, %v4502
  %v4554 = vadd.f32 %v4406, %v4502
  %v4555 = vadd.f32 %v4407, %v4502
  %v4556 = vadd.f32 %v4408, %v4502
  %v4557 = vadd.f32 %v4409, %v4502
  %v4558 = vadd.f32 %v4410, %v4502
  %v4559 = vadd.f32 %v4411, %v4502
  %v4560 = vadd.f32 %v4412, %v4502
  %v4561 = vadd.f32 %v4413, %v4502
  %v4562 = vadd.f32 %v4414, %v4502
  %v4563 = vadd.f32 %v4415, %v4502
  %v4564 = vadd.f32 %v4416, %v4502
  %v4565 = vadd.f32 %v4417, %v4502
  %v4566 = vadd.f32 %v4418, %v4502
  %v4567 = vadd.f32 %v4419, %v4502
  %v4568 = vadd.f32 %v4420, %v4502
  %v4569 = vadd.f32 %v4421, %v4502
  %v4570 = vadd.f32 %v4422, %v4502
  %v4571 = vadd.f32 %v4423, %v4502
  %v4572 = vadd.f32 %v4424, %v4502
  %v4573 = vadd.f32 %v4425, %v4502
  %v4574 = vadd.f32 %v4426, %v4502
  %v4575 = vadd.f32 %v4427, %v4502
  %v4576 = vadd.f32 %v4428, %v4502
  %v4577 = vadd.f32 %v4429, %v4502
  %v4578 = vadd.f32 %v4430, %v4502
  %v4579 = vadd.f32 %v4431, %v4502
  %v4580 = vadd.f32 %v4432, %v4502
  %v4581 = vadd.f32 %v4433, %v4502
  %v4582 = vadd.f32 %v4434, %v4502
  %v4583 = vadd.f32 %v4435, %v4502
  %v4584 = vadd.f32 %v4436, %v4502
  %v4585 = vadd.f32 %v4437, %v4502
  %v4586 = vadd.f32 %v4438, %v4502
  %v4587 = vadd.f32 %v4439, %v4502
  %v4588 = vadd.f32 %v4440, %v4502
  %v4589 = vadd.f32 %v4441, %v4502
  %v4590 = vadd.f32 %v4442, %v4502
  %v4591 = vadd.f32 %v4443, %v4502
  %v4592 = vadd.f32 %v4444, %v4502
  %v4593 = vadd.f32 %v4445, %v4502
  %v4594 = vadd.f32 %v4446, %v4502
  %v4595 = vadd.f32 %v4447, %v4502
  %v4596 = vadd.f32 %v4448, %v4502
  %v4597 = vadd.f32 %v4449, %v4502
  %v4598 = vadd.f32 %v4450, %v4502
  %v4599 = vadd.f32 %v4451, %v4502
  %v4600 = vadd.f32 %v4452, %v4502
  %v4601 = vadd.f32 %v4453, %v4502
  %v4602 = vadd.f32 %v4454, %v4502
  %v4603 = vadd.f32 %v4455, %v4502
  %v4604 = vadd.f32 %v4456, %v4502
  %v4605 = vadd.f32 %v4457, %v4502
  %v4606 = vadd.f32 %v4458, %v4502
  %v4607 = vadd.f32 %v4459, %v4502
  %v4608 = vadd.f32 %v4460, %v4502
  %v4609 = vadd.f32 %v4461, %v4502
  %v4610 = vadd.f32 %v4462, %v4502
  %v4611 = vadd.f32 %v4463, %v4502
  %v4612 = vadd.f32 %v4464, %v4502
  %v4613 = vadd.f32 %v4465, %v4502
  %v4614 = vadd.f32 %v4466, %v4502
  %v4615 = vadd.f32 %v4467, %v4502
  %v4616 = vadd.f32 %v4468, %v4502
  %v4617 = vadd.f32 %v4469, %v4502
  %v4618 = vadd.f32 %v4470, %v4502
  %v4619 = vadd.f32 %v4471, %v4502
  %v4620 = vadd.f32 %v4472, %v4502
  %v4621 = vadd.f32 %v4473, %v4502
  %v4622 = vadd.f32 %v4474, %v4502
  %v4623 = vadd.f32 %v4475, %v4502
  %v4624 = vadd.f32 %v4476, %v4502
  %v4625 = vadd.f32 %v4477, %v4502
  %v4626 = vadd.f32 %v4478, %v4502
  %v4627 = vadd.f32 %v4479, %v4502
  %v4628 = vadd.f32 %v4480, %v4502
  %v4629 = vadd.f32 %v4481, %v4502
  %v4630 = vadd.f32 %v4482, %v4502
  %v4631 = vadd.f32 %v4483, %v4502
  %v4632 = vadd.f32 %v4484, %v4502
  %v4633 = vadd.f32 %v4485, %v4502
  %v4634 = vadd.f32 %v4486, %v4502
  %v4635 = vadd.f32 %v4487, %v4502
  %v4636 = vadd.f32 %v4488, %v4502
  %v4637 = vadd.f32 %v4489, %v4502
  %v4638 = vadd.f32 %v4490, %v4502
  %v4639 = vadd.f32 %v4491, %v4502
  %v4640 = vadd.f32 %v4492, %v4502
  %v4641 = vadd.f32 %v4493, %v4502
  %v4642 = vadd.f32 %v4494, %v4502
  %v4643 = vadd.f32 %v4495, %v4502
  %v4644 = vadd.f32 %v4496, %v4502
  %v4645 = vadd.f32 %v4497, %v4502
  %v4646 = vadd.f32 %v4498, %v4502
  %v4647 = vadd.f32 %v4499, %v4502
  %v4648 = vmax.f32 %v4504, 0.0
  %v4649 = vmax.f32 %v4505, 0.0
  %v4650 = vmax.f32 %v4506, 0.0
  %v4651 = vmax.f32 %v4507, 0.0
  %v4652 = vmax.f32 %v4508, 0.0
  %v4653 = vmax.f32 %v4509, 0.0
  %v4654 = vmax.f32 %v4510, 0.0
  %v4655 = vmax.f32 %v4511, 0.0
  %v4656 = vmax.f32 %v4512, 0.0
  %v4657 = vmax.f32 %v4513, 0.0
  %v4658 = vmax.f32 %v4514, 0.0
  %v4659 = vmax.f32 %v4515, 0.0
  %v4660 = vmax.f32 %v4516, 0.0
  %v4661 = vmax.f32 %v4517, 0.0
  %v4662 = vmax.f32 %v4518, 0.0
  %v4663 = vmax.f32 %v4519, 0.0
  %v4664 = vmax.f32 %v4520, 0.0
  %v4665 = vmax.f32 %v4521, 0.0
  %v4666 = vmax.f32 %v4522, 0.0
  %v4667 = vmax.f32 %v4523, 0.0
  %v4668 = vmax.f32 %v4524, 0.0
  %v4669 = vmax.f32 %v4525, 0.0
  %v4670 = vmax.f32 %v4526, 0.0
  %v4671 = vmax.f32 %v4527, 0.0
  %v4672 = vmax.f32 %v4528, 0.0
  %v4673 = vmax.f32 %v4529, 0.0
  %v4674 = vmax.f32 %v4530, 0.0
  %v4675 = vmax.f32 %v4531, 0.0
  %v4676 = vmax.f32 %v4532, 0.0
  %v4677 = vmax.f32 %v4533, 0.0
  %v4678 = vmax.f32 %v4534, 0.0
  %v4679 = vmax.f32 %v4535, 0.0
  %v4680 = vmax.f32 %v4536, 0.0
  %v4681 = vmax.f32 %v4537, 0.0
  %v4682 = vmax.f32 %v4538, 0.0
  %v4683 = vmax.f32 %v4539, 0.0
  %v4684 = vmax.f32 %v4540, 0.0
  %v4685 = vmax.f32 %v4541, 0.0
  %v4686 = vmax.f32 %v4542, 0.0
  %v4687 = vmax.f32 %v4543, 0.0
  %v4688 = vmax.f32 %v4544, 0.0
  %v4689 = vmax.f32 %v4545, 0.0
  %v4690 = vmax.f32 %v4546, 0.0
  %v4691 = vmax.f32 %v4547, 0.0
  %v4692 = vmax.f32 %v4548, 0.0
  %v4693 = vmax.f32 %v4549, 0.0
  %v4694 = vmax.f32 %v4550, 0.0
  %v4695 = vmax.f32 %v4551, 0.0
  %v4696 = vmax.f32 %v4552, 0.0
  %v4697 = vmax.f32 %v4553, 0.0
  %v4698 = vmax.f32 %v4554, 0.0
  %v4699 = vmax.f32 %v4555, 0.0
  %v4700 = vmax.f32 %v4556, 0.0
  %v4701 = vmax.f32 %v4557, 0.0
  %v4702 = vmax.f32 %v4558, 0.0
  %v4703 = vmax.f32 %v4559, 0.0
  %v4704 = vmax.f32 %v4560, 0.0
  %v4705 = vmax.f32 %v4561, 0.0
  %v4706 = vmax.f32 %v4562, 0.0
  %v4707 = vmax.f32 %v4563, 0.0
  %v4708 = vmax.f32 %v4564, 0.0
  %v4709 = vmax.f32 %v4565, 0.0
  %v4710 = vmax.f32 %v4566, 0.0
  %v4711 = vmax.f32 %v4567, 0.0
  %v4712 = vmax.f32 %v4568, 0.0
  %v4713 = vmax.f32 %v4569, 0.0
  %v4714 = vmax.f32 %v4570, 0.0
  %v4715 = vmax.f32 %v4571, 0.0
  %v4716 = vmax.f32 %v4572, 0.0
  %v4717 = vmax.f32 %v4573, 0.0
  %v4718 = vmax.f32 %v4574, 0.0
  %v4719 = vmax.f32 %v4575, 0.0
  %v4720 = vmax.f32 %v4576, 0.0
  %v4721 = vmax.f32 %v4577, 0.0
  %v4722 = vmax.f32 %v4578, 0.0
  %v4723 = vmax.f32 %v4579, 0.0
  %v4724 = vmax.f32 %v4580, 0.0
  %v4725 = vmax.f32 %v4581, 0.0
  %v4726 = vmax.f32 %v4582, 0.0
  %v4727 = vmax.f32 %v4583, 0.0
  %v4728 = vmax.f32 %v4584, 0.0
  %v4729 = vmax.f32 %v4585, 0.0
  %v4730 = vmax.f32 %v4586, 0.0
  %v4731 = vmax.f32 %v4587, 0.0
  %v4732 = vmax.f32 %v4588, 0.0
  %v4733 = vmax.f32 %v4589, 0.0
  %v4734 = vmax.f32 %v4590, 0.0
  %v4735 = vmax.f32 %v4591, 0.0
  %v4736 = vmax.f32 %v4592, 0.0
  %v4737 = vmax.f32 %v4593, 0.0
  %v4738 = vmax.f32 %v4594, 0.0
  %v4739 = vmax.f32 %v4595, 0.0
  %v4740 = vmax.f32 %v4596, 0.0
  %v4741 = vmax.f32 %v4597, 0.0
  %v4742 = vmax.f32 %v4598, 0.0
  %v4743 = vmax.f32 %v4599, 0.0
  %v4744 = vmax.f32 %v4600, 0.0
  %v4745 = vmax.f32 %v4601, 0.0
  %v4746 = vmax.f32 %v4602, 0.0
  %v4747 = vmax.f32 %v4603, 0.0
  %v4748 = vmax.f32 %v4604, 0.0
  %v4749 = vmax.f32 %v4605, 0.0
  %v4750 = vmax.f32 %v4606, 0.0
  %v4751 = vmax.f32 %v4607, 0.0
  %v4752 = vmax.f32 %v4608, 0.0
  %v4753 = vmax.f32 %v4609, 0.0
  %v4754 = vmax.f32 %v4610, 0.0
  %v4755 = vmax.f32 %v4611, 0.0
  %v4756 = vmax.f32 %v4612, 0.0
  %v4757 = vmax.f32 %v4613, 0.0
  %v4758 = vmax.f32 %v4614, 0.0
  %v4759 = vmax.f32 %v4615, 0.0
  %v4760 = vmax.f32 %v4616, 0.0
  %v4761 = vmax.f32 %v4617, 0.0
  %v4762 = vmax.f32 %v4618, 0.0
  %v4763 = vmax.f32 %v4619, 0.0
  %v4764 = vmax.f32 %v4620, 0.0
  %v4765 = vmax.f32 %v4621, 0.0
  %v4766 = vmax.f32 %v4622, 0.0
  %v4767 = vmax.f32 %v4623, 0.0
  %v4768 = vmax.f32 %v4624, 0.0
  %v4769 = vmax.f32 %v4625, 0.0
  %v4770 = vmax.f32 %v4626, 0.0
  %v4771 = vmax.f32 %v4627, 0.0
  %v4772 = vmax.f32 %v4628, 0.0
  %v4773 = vmax.f32 %v4629, 0.0
  %v4774 = vmax.f32 %v4630, 0.0
  %v4775 = vmax.f32 %v4631, 0.0
  %v4776 = vmax.f32 %v4632, 0.0
  %v4777 = vmax.f32 %v4633, 0.0
  %v4778 = vmax.f32 %v4634, 0.0
  %v4779 = vmax.f32 %v4635, 0.0
  %v4780 = vmax.f32 %v4636, 0.0
  %v4781 = vmax.f32 %v4637, 0.0
  %v4782 = vmax.f32 %v4638, 0.0
  %v4783 = vmax.f32 %v4639, 0.0
  %v4784 = vmax.f32 %v4640, 0.0
  %v4785 = vmax.f32 %v4641, 0.0
  %v4786 = vmax.f32 %v4642, 0.0
  %v4787 = vmax.f32 %v4643, 0.0
  %v4788 = vmax.f32 %v4644, 0.0
  %v4789 = vmax.f32 %v4645, 0.0
  %v4790 = vmax.f32 %v4646, 0.0
  %v4791 = vmax.f32 %v4647, 0.0
  %vm4792 = vcmask 130048
  %4793 = vst.msk [vmem:[%s3] sm:$0xff] %vm4792, %v4648
  %4794 = vst.msk [vmem:[%s3 + $0x8] sm:$0xff] %vm4792, %v4649
  %4795 = vst.msk [vmem:[%s3 + $0x10] sm:$0xff] %vm4792, %v4650
  %4796 = vst.msk [vmem:[%s3 + $0x18] sm:$0xff] %vm4792, %v4651
  %4797 = vst.msk [vmem:[%s3 + $0x20] sm:$0xff] %vm4792, %v4652
  %4798 = vst.msk [vmem:[%s3 + $0x28] sm:$0xff] %vm4792, %v4653
  %4799 = vst.msk [vmem:[%s3 + $0x30] sm:$0xff] %vm4792, %v4654
  %4800 = vst.msk [vmem:[%s3 + $0x38] sm:$0xff] %vm4792, %v4655
  %4801 = vst.msk [vmem:[%s3 + $0x40] sm:$0xff] %vm4792, %v4656
  %4802 = vst.msk [vmem:[%s3 + $0x48] sm:$0xff] %vm4792, %v4657
  %4803 = vst.msk [vmem:[%s3 + $0x50] sm:$0xff] %vm4792, %v4658
  %4804 = vst.msk [vmem:[%s3 + $0x58] sm:$0xff] %vm4792, %v4659
  %4805 = vst.msk [vmem:[%s3 + $0x60] sm:$0xff] %vm4792, %v4660
  %4806 = vst.msk [vmem:[%s3 + $0x68] sm:$0xff] %vm4792, %v4661
  %4807 = vst.msk [vmem:[%s3 + $0x70] sm:$0xff] %vm4792, %v4662
  %4808 = vst.msk [vmem:[%s3 + $0x78] sm:$0xff] %vm4792, %v4663
  %4809 = vst.msk [vmem:[%s3 + $0x80] sm:$0xff] %vm4792, %v4664
  %4810 = vst.msk [vmem:[%s3 + $0x88] sm:$0xff] %vm4792, %v4665
  %4811 = vst.msk [vmem:[%s3 + $0x90] sm:$0xff] %vm4792, %v4666
  %4812 = vst.msk [vmem:[%s3 + $0x98] sm:$0xff] %vm4792, %v4667
  %4813 = vst.msk [vmem:[%s3 + $0xa0] sm:$0xff] %vm4792, %v4668
  %4814 = vst.msk [vmem:[%s3 + $0xa8] sm:$0xff] %vm4792, %v4669
  %4815 = vst.msk [vmem:[%s3 + $0xb0] sm:$0xff] %vm4792, %v4670
  %4816 = vst.msk [vmem:[%s3 + $0xb8] sm:$0xff] %vm4792, %v4671
  %4817 = vst.msk [vmem:[%s3 + $0xc0] sm:$0xff] %vm4792, %v4672
  %4818 = vst.msk [vmem:[%s3 + $0xc8] sm:$0xff] %vm4792, %v4673
  %4819 = vst.msk [vmem:[%s3 + $0xd0] sm:$0xff] %vm4792, %v4674
  %4820 = vst.msk [vmem:[%s3 + $0xd8] sm:$0xff] %vm4792, %v4675
  %4821 = vst.msk [vmem:[%s3 + $0xe0] sm:$0xff] %vm4792, %v4676
  %4822 = vst.msk [vmem:[%s3 + $0xe8] sm:$0xff] %vm4792, %v4677
  %4823 = vst.msk [vmem:[%s3 + $0xf0] sm:$0xff] %vm4792, %v4678
  %4824 = vst.msk [vmem:[%s3 + $0xf8] sm:$0xff] %vm4792, %v4679
  %4825 = vst.msk [vmem:[%s3 + $0x100] sm:$0xff] %vm4792, %v4680
  %4826 = vst.msk [vmem:[%s3 + $0x108] sm:$0xff] %vm4792, %v4681
  %4827 = vst.msk [vmem:[%s3 + $0x110] sm:$0xff] %vm4792, %v4682
  %4828 = vst.msk [vmem:[%s3 + $0x118] sm:$0xff] %vm4792, %v4683
  %4829 = vst.msk [vmem:[%s3 + $0x120] sm:$0xff] %vm4792, %v4684
  %4830 = vst.msk [vmem:[%s3 + $0x128] sm:$0xff] %vm4792, %v4685
  %4831 = vst.msk [vmem:[%s3 + $0x130] sm:$0xff] %vm4792, %v4686
  %4832 = vst.msk [vmem:[%s3 + $0x138] sm:$0xff] %vm4792, %v4687
  %4833 = vst.msk [vmem:[%s3 + $0x140] sm:$0xff] %vm4792, %v4688
  %4834 = vst.msk [vmem:[%s3 + $0x148] sm:$0xff] %vm4792, %v4689
  %4835 = vst.msk [vmem:[%s3 + $0x150] sm:$0xff] %vm4792, %v4690
  %4836 = vst.msk [vmem:[%s3 + $0x158] sm:$0xff] %vm4792, %v4691
  %4837 = vst.msk [vmem:[%s3 + $0x160] sm:$0xff] %vm4792, %v4692
  %4838 = vst.msk [vmem:[%s3 + $0x168] sm:$0xff] %vm4792, %v4693
  %4839 = vst.msk [vmem:[%s3 + $0x170] sm:$0xff] %vm4792, %v4694
  %4840 = vst.msk [vmem:[%s3 + $0x178] sm:$0xff] %vm4792, %v4695
  %4841 = vst.msk [vmem:[%s3 + $0x180] sm:$0xff] %vm4792, %v4696
  %4842 = vst.msk [vmem:[%s3 + $0x188] sm:$0xff] %vm4792, %v4697
  %4843 = vst.msk [vmem:[%s3 + $0x190] sm:$0xff] %vm4792, %v4698
  %4844 = vst.msk [vmem:[%s3 + $0x198] sm:$0xff] %vm4792, %v4699
  %4845 = vst.msk [vmem:[%s3 + $0x1a0] sm:$0xff] %vm4792, %v4700
  %4846 = vst.msk [vmem:[%s3 + $0x1a8] sm:$0xff] %vm4792, %v4701
  %4847 = vst.msk [vmem:[%s3 + $0x1b0] sm:$0xff] %vm4792, %v4702
  %4848 = vst.msk [vmem:[%s3 + $0x1b8] sm:$0xff] %vm4792, %v4703
  %4849 = vst.msk [vmem:[%s3 + $0x1c0] sm:$0xff] %vm4792, %v4704
  %4850 = vst.msk [vmem:[%s3 + $0x1c8] sm:$0xff] %vm4792, %v4705
  %4851 = vst.msk [vmem:[%s3 + $0x1d0] sm:$0xff] %vm4792, %v4706
  %4852 = vst.msk [vmem:[%s3 + $0x1d8] sm:$0xff] %vm4792, %v4707
  %4853 = vst.msk [vmem:[%s3 + $0x1e0] sm:$0xff] %vm4792, %v4708
  %4854 = vst.msk [vmem:[%s3 + $0x1e8] sm:$0xff] %vm4792, %v4709
  %4855 = vst.msk [vmem:[%s3 + $0x1f0] sm:$0xff] %vm4792, %v4710
  %4856 = vst.msk [vmem:[%s3 + $0x1f8] sm:$0xff] %vm4792, %v4711
  %4857 = vst.msk [vmem:[%s3 + $0x200] sm:$0xff] %vm4792, %v4712
  %4858 = vst.msk [vmem:[%s3 + $0x208] sm:$0xff] %vm4792, %v4713
  %4859 = vst.msk [vmem:[%s3 + $0x210] sm:$0xff] %vm4792, %v4714
  %4860 = vst.msk [vmem:[%s3 + $0x218] sm:$0xff] %vm4792, %v4715
  %4861 = vst.msk [vmem:[%s3 + $0x220] sm:$0xff] %vm4792, %v4716
  %4862 = vst.msk [vmem:[%s3 + $0x228] sm:$0xff] %vm4792, %v4717
  %4863 = vst.msk [vmem:[%s3 + $0x230] sm:$0xff] %vm4792, %v4718
  %4864 = vst.msk [vmem:[%s3 + $0x238] sm:$0xff] %vm4792, %v4719
  %4865 = vst.msk [vmem:[%s3 + $0x240] sm:$0xff] %vm4792, %v4720
  %4866 = vst.msk [vmem:[%s3 + $0x248] sm:$0xff] %vm4792, %v4721
  %4867 = vst.msk [vmem:[%s3 + $0x250] sm:$0xff] %vm4792, %v4722
  %4868 = vst.msk [vmem:[%s3 + $0x258] sm:$0xff] %vm4792, %v4723
  %4869 = vst.msk [vmem:[%s3 + $0x260] sm:$0xff] %vm4792, %v4724
  %4870 = vst.msk [vmem:[%s3 + $0x268] sm:$0xff] %vm4792, %v4725
  %4871 = vst.msk [vmem:[%s3 + $0x270] sm:$0xff] %vm4792, %v4726
  %4872 = vst.msk [vmem:[%s3 + $0x278] sm:$0xff] %vm4792, %v4727
  %4873 = vst.msk [vmem:[%s3 + $0x280] sm:$0xff] %vm4792, %v4728
  %4874 = vst.msk [vmem:[%s3 + $0x288] sm:$0xff] %vm4792, %v4729
  %4875 = vst.msk [vmem:[%s3 + $0x290] sm:$0xff] %vm4792, %v4730
  %4876 = vst.msk [vmem:[%s3 + $0x298] sm:$0xff] %vm4792, %v4731
  %4877 = vst.msk [vmem:[%s3 + $0x2a0] sm:$0xff] %vm4792, %v4732
  %4878 = vst.msk [vmem:[%s3 + $0x2a8] sm:$0xff] %vm4792, %v4733
  %4879 = vst.msk [vmem:[%s3 + $0x2b0] sm:$0xff] %vm4792, %v4734
  %4880 = vst.msk [vmem:[%s3 + $0x2b8] sm:$0xff] %vm4792, %v4735
  %4881 = vst.msk [vmem:[%s3 + $0x2c0] sm:$0xff] %vm4792, %v4736
  %4882 = vst.msk [vmem:[%s3 + $0x2c8] sm:$0xff] %vm4792, %v4737
  %4883 = vst.msk [vmem:[%s3 + $0x2d0] sm:$0xff] %vm4792, %v4738
  %4884 = vst.msk [vmem:[%s3 + $0x2d8] sm:$0xff] %vm4792, %v4739
  %4885 = vst.msk [vmem:[%s3 + $0x2e0] sm:$0xff] %vm4792, %v4740
  %4886 = vst.msk [vmem:[%s3 + $0x2e8] sm:$0xff] %vm4792, %v4741
  %4887 = vst.msk [vmem:[%s3 + $0x2f0] sm:$0xff] %vm4792, %v4742
  %4888 = vst.msk [vmem:[%s3 + $0x2f8] sm:$0xff] %vm4792, %v4743
  %4889 = vst.msk [vmem:[%s3 + $0x300] sm:$0xff] %vm4792, %v4744
  %4890 = vst.msk [vmem:[%s3 + $0x308] sm:$0xff] %vm4792, %v4745
  %4891 = vst.msk [vmem:[%s3 + $0x310] sm:$0xff] %vm4792, %v4746
  %4892 = vst.msk [vmem:[%s3 + $0x318] sm:$0xff] %vm4792, %v4747
  %4893 = vst.msk [vmem:[%s3 + $0x320] sm:$0xff] %vm4792, %v4748
  %4894 = vst.msk [vmem:[%s3 + $0x328] sm:$0xff] %vm4792, %v4749
  %4895 = vst.msk [vmem:[%s3 + $0x330] sm:$0xff] %vm4792, %v4750
  %4896 = vst.msk [vmem:[%s3 + $0x338] sm:$0xff] %vm4792, %v4751
  %4897 = vst.msk [vmem:[%s3 + $0x340] sm:$0xff] %vm4792, %v4752
  %4898 = vst.msk [vmem:[%s3 + $0x348] sm:$0xff] %vm4792, %v4753
  %4899 = vst.msk [vmem:[%s3 + $0x350] sm:$0xff] %vm4792, %v4754
  %4900 = vst.msk [vmem:[%s3 + $0x358] sm:$0xff] %vm4792, %v4755
  %4901 = vst.msk [vmem:[%s3 + $0x360] sm:$0xff] %vm4792, %v4756
  %4902 = vst.msk [vmem:[%s3 + $0x368] sm:$0xff] %vm4792, %v4757
  %4903 = vst.msk [vmem:[%s3 + $0x370] sm:$0xff] %vm4792, %v4758
  %4904 = vst.msk [vmem:[%s3 + $0x378] sm:$0xff] %vm4792, %v4759
  %4905 = vst.msk [vmem:[%s3 + $0x380] sm:$0xff] %vm4792, %v4760
  %4906 = vst.msk [vmem:[%s3 + $0x388] sm:$0xff] %vm4792, %v4761
  %4907 = vst.msk [vmem:[%s3 + $0x390] sm:$0xff] %vm4792, %v4762
  %4908 = vst.msk [vmem:[%s3 + $0x398] sm:$0xff] %vm4792, %v4763
  %4909 = vst.msk [vmem:[%s3 + $0x3a0] sm:$0xff] %vm4792, %v4764
  %4910 = vst.msk [vmem:[%s3 + $0x3a8] sm:$0xff] %vm4792, %v4765
  %4911 = vst.msk [vmem:[%s3 + $0x3b0] sm:$0xff] %vm4792, %v4766
  %4912 = vst.msk [vmem:[%s3 + $0x3b8] sm:$0xff] %vm4792, %v4767
  %4913 = vst.msk [vmem:[%s3 + $0x3c0] sm:$0xff] %vm4792, %v4768
  %4914 = vst.msk [vmem:[%s3 + $0x3c8] sm:$0xff] %vm4792, %v4769
  %4915 = vst.msk [vmem:[%s3 + $0x3d0] sm:$0xff] %vm4792, %v4770
  %4916 = vst.msk [vmem:[%s3 + $0x3d8] sm:$0xff] %vm4792, %v4771
  %4917 = vst.msk [vmem:[%s3 + $0x3e0] sm:$0xff] %vm4792, %v4772
  %4918 = vst.msk [vmem:[%s3 + $0x3e8] sm:$0xff] %vm4792, %v4773
  %4919 = vst.msk [vmem:[%s3 + $0x3f0] sm:$0xff] %vm4792, %v4774
  %4920 = vst.msk [vmem:[%s3 + $0x3f8] sm:$0xff] %vm4792, %v4775
  %4921 = vst.msk [vmem:[%s3 + $0x400] sm:$0xff] %vm4792, %v4776
  %4922 = vst.msk [vmem:[%s3 + $0x408] sm:$0xff] %vm4792, %v4777
  %4923 = vst.msk [vmem:[%s3 + $0x410] sm:$0xff] %vm4792, %v4778
  %4924 = vst.msk [vmem:[%s3 + $0x418] sm:$0xff] %vm4792, %v4779
  %4925 = vst.msk [vmem:[%s3 + $0x420] sm:$0xff] %vm4792, %v4780
  %4926 = vst.msk [vmem:[%s3 + $0x428] sm:$0xff] %vm4792, %v4781
  %4927 = vst.msk [vmem:[%s3 + $0x430] sm:$0xff] %vm4792, %v4782
  %4928 = vst.msk [vmem:[%s3 + $0x438] sm:$0xff] %vm4792, %v4783
  %4929 = vst.msk [vmem:[%s3 + $0x440] sm:$0xff] %vm4792, %v4784
  %4930 = vst.msk [vmem:[%s3 + $0x448] sm:$0xff] %vm4792, %v4785
  %4931 = vst.msk [vmem:[%s3 + $0x450] sm:$0xff] %vm4792, %v4786
  %4932 = vst.msk [vmem:[%s3 + $0x458] sm:$0xff] %vm4792, %v4787
  %4933 = vst.msk [vmem:[%s3 + $0x460] sm:$0xff] %vm4792, %v4788
  %4934 = vst.msk [vmem:[%s3 + $0x468] sm:$0xff] %vm4792, %v4789
  %4935 = vst.msk [vmem:[%s3 + $0x470] sm:$0xff] %vm4792, %v4790
  %4936 = vst.msk [vmem:[%s3 + $0x478] sm:$0xff] %vm4792, %v4791
  // Predicated region
  $region14: #{actor_forward.2} parent=0 // pred_check
    _
  $region15: #{actor_forward.2} parent=0 // pred_check_branch
    %4938 = sbr.rel (0) target = $region17
  $region16: #{actor_forward.2} parent=0 // pred_region
    _
  $region17: #{actor_forward.2} parent=0 // pred_fallthru
    _
  // Predicated region
  $region18: #{actor_forward.2} parent=0 // pred_check
    _
  $region19: #{actor_forward.2} parent=0 // pred_check_branch
    %4940 = sbr.rel (0) target = $region21
  $region20: #{actor_forward.2} parent=0 // pred_region
    _
  $region21: #{actor_forward.2} parent=0 // pred_fallthru
    _

// kernel: actor_forward.3
$region0: #{actor_forward.3}
  #allocation0 [shape = 'u32[]', space=smem, size = 0x4, offset = 0x4, fixed_abs, tag = 'smem constant byte address 0x4 - core index']
  #allocation1 [shape = 'u32[72,128]{1,0:T(1,128)}', space=vmem, size = 0x9000, scoped, tag = 'internal scratch']
  %s0 = inlined_call_operand.vmem [shape: f32[288,144], index: 0, kind: input, shape index: {}]
  %s1 = inlined_call_operand.vmem [shape: f32[144,32], index: 1, kind: input, shape index: {}]
  %s2 = inlined_call_operand.vmem [shape: f32[288,128], index: 2, kind: input, shape index: {}]
  %s3 = inlined_call_operand.vmem [shape: f32[32,32], index: 3, kind: input, shape index: {}]
  %s4 = inlined_call_operand.vmem [shape: f32[8,32], index: 4, kind: input, shape index: {}]
  %s5 = inlined_call_operand.vmem [shape: f32[65,128], index: 5, kind: input, shape index: {}]
  %s6 = inlined_call_operand.vmem [shape: f32[33,20], index: 6, kind: input, shape index: {}]
  %s7 = inlined_call_operand.vmem [shape: f32[2,32], index: 7, kind: input, shape index: {}, may-alias: {7,8}]
  %s8 = inlined_call_operand.vmem [shape: f32[2,32], index: 8, kind: input, shape index: {}, may-alias: {7,8}]
  %s9 = inlined_call_operand.vmem [shape: f32[2,128], index: 9, kind: output, shape index: {}]
  %s10 = sld [smem:[#allocation0]]
  $region46: #{actor_forward.3} parent=0
    _
  %s12 = ssub.s32 1, %s10
  %s13 = scalar_select 0, %s12, %s10
  // Predicated region
  $region2: #{actor_forward.3} parent=0 // pred_check
    _
  $region3: #{actor_forward.3} parent=0 // pred_check_branch
    %15 = sbr.rel (0) target = $region5
  $region4: #{actor_forward.3} parent=0 // pred_region
    _
  $region5: #{actor_forward.3} parent=0 // pred_fallthru
    _
  // Predicated region
  $region6: #{actor_forward.3} parent=0 // pred_check
    _
  $region7: #{actor_forward.3} parent=0 // pred_check_branch
    %17 = sbr.rel (0) target = $region9
  $region8: #{actor_forward.3} parent=0 // pred_region
    _
  $region9: #{actor_forward.3} parent=0 // pred_fallthru
    _
  // Predicated region
  $region10: #{actor_forward.3} parent=0 // pred_check
    _
  $region11: #{actor_forward.3} parent=0 // pred_check_branch
    %19 = sbr.rel (0) target = $region13
  $region12: #{actor_forward.3} parent=0 // pred_region
    _
  $region13: #{actor_forward.3} parent=0 // pred_fallthru
    _
  // Predicated region
  $region14: #{actor_forward.3} parent=0 // pred_check
    _
  $region15: #{actor_forward.3} parent=0 // pred_check_branch
    %21 = sbr.rel (0) target = $region17
  $region16: #{actor_forward.3} parent=0 // pred_region
    _
  $region17: #{actor_forward.3} parent=0 // pred_fallthru
    _
  // Predicated region
  $region18: #{actor_forward.3} parent=0 // pred_check
    _
  $region19: #{actor_forward.3} parent=0 // pred_check_branch
    %23 = sbr.rel (0) target = $region21
  $region20: #{actor_forward.3} parent=0 // pred_region
    _
  $region21: #{actor_forward.3} parent=0 // pred_fallthru
    _
  // Predicated region
  $region22: #{actor_forward.3} parent=0 // pred_check
    _
  $region23: #{actor_forward.3} parent=0 // pred_check_branch
    %25 = sbr.rel (0) target = $region25
  $region24: #{actor_forward.3} parent=0 // pred_region
    _
  $region25: #{actor_forward.3} parent=0 // pred_fallthru
    _
  // Predicated region
  $region26: #{actor_forward.3} parent=0 // pred_check
    _
  $region27: #{actor_forward.3} parent=0 // pred_check_branch
    %27 = sbr.rel (0) target = $region29
  $region28: #{actor_forward.3} parent=0 // pred_region
    _
  $region29: #{actor_forward.3} parent=0 // pred_fallthru
    _
  // Predicated region
  $region30: #{actor_forward.3} parent=0 // pred_check
    _
  $region31: #{actor_forward.3} parent=0 // pred_check_branch
    %29 = sbr.rel (0) target = $region33
  $region32: #{actor_forward.3} parent=0 // pred_region
    _
  $region33: #{actor_forward.3} parent=0 // pred_fallthru
    _
  // Predicated region
  $region34: #{actor_forward.3} parent=0 // pred_check
    _
  $region35: #{actor_forward.3} parent=0 // pred_check_branch
    %31 = sbr.rel (0) target = $region37
  $region36: #{actor_forward.3} parent=0 // pred_region
    _
  $region37: #{actor_forward.3} parent=0 // pred_fallthru
    _
  %v32 = vld [vmem:[%s0] sm:$0xff]
  %v33 = vld [vmem:[%s0 + $0x8] sm:$0xff]
  %v34 = vld [vmem:[%s0 + $0x10] sm:$0xff]
  %v35 = vld [vmem:[%s0 + $0x18] sm:$0xff]
  %v36 = vld [vmem:[%s0 + $0x20] sm:$0xff]
  %v37 = vld [vmem:[%s0 + $0x28] sm:$0xff]
  %v38 = vld [vmem:[%s0 + $0x30] sm:$0xff]
  %v39 = vld [vmem:[%s0 + $0x38] sm:$0xff]
  %v40 = vld [vmem:[%s0 + $0x40] sm:$0xff]
  %v41 = vld [vmem:[%s0 + $0x48] sm:$0xff]
  %v42 = vld [vmem:[%s0 + $0x50] sm:$0xff]
  %v43 = vld [vmem:[%s0 + $0x58] sm:$0xff]
  %v44 = vld [vmem:[%s0 + $0x60] sm:$0xff]
  %v45 = vld [vmem:[%s0 + $0x68] sm:$0xff]
  %v46 = vld [vmem:[%s0 + $0x70] sm:$0xff]
  %v47 = vld [vmem:[%s0 + $0x78] sm:$0xff]
  %v48 = vld [vmem:[%s0 + $0x80] sm:$0xff]
  %v49 = vld [vmem:[%s0 + $0x88] sm:$0xff]
  %v50 = vld [vmem:[%s0 + $0x90] sm:$0xff]
  %v51 = vld [vmem:[%s0 + $0x98] sm:$0xff]
  %v52 = vld [vmem:[%s0 + $0xa0] sm:$0xff]
  %v53 = vld [vmem:[%s0 + $0xa8] sm:$0xff]
  %v54 = vld [vmem:[%s0 + $0xb0] sm:$0xff]
  %v55 = vld [vmem:[%s0 + $0xb8] sm:$0xff]
  %v56 = vld [vmem:[%s0 + $0xc0] sm:$0xff]
  %v57 = vld [vmem:[%s0 + $0xc8] sm:$0xff]
  %v58 = vld [vmem:[%s0 + $0xd0] sm:$0xff]
  %v59 = vld [vmem:[%s0 + $0xd8] sm:$0xff]
  %v60 = vld [vmem:[%s0 + $0xe0] sm:$0xff]
  %v61 = vld [vmem:[%s0 + $0xe8] sm:$0xff]
  %v62 = vld [vmem:[%s0 + $0xf0] sm:$0xff]
  %v63 = vld [vmem:[%s0 + $0xf8] sm:$0xff]
  %v64 = vld [vmem:[%s0 + $0x100] sm:$0xff]
  %v65 = vld [vmem:[%s0 + $0x108] sm:$0xff]
  %v66 = vld [vmem:[%s0 + $0x110] sm:$0xff]
  %v67 = vld [vmem:[%s0 + $0x118] sm:$0xff]
  %v68 = vld [vmem:[%s0 + $0x120] sm:$0xff]
  %v69 = vld [vmem:[%s0 + $0x128] sm:$0xff]
  %v70 = vld [vmem:[%s0 + $0x130] sm:$0xff]
  %v71 = vld [vmem:[%s0 + $0x138] sm:$0xff]
  %v72 = vld [vmem:[%s0 + $0x140] sm:$0xff]
  %v73 = vld [vmem:[%s0 + $0x148] sm:$0xff]
  %v74 = vld [vmem:[%s0 + $0x150] sm:$0xff]
  %v75 = vld [vmem:[%s0 + $0x158] sm:$0xff]
  %v76 = vld [vmem:[%s0 + $0x160] sm:$0xff]
  %v77 = vld [vmem:[%s0 + $0x168] sm:$0xff]
  %v78 = vld [vmem:[%s0 + $0x170] sm:$0xff]
  %v79 = vld [vmem:[%s0 + $0x178] sm:$0xff]
  %v80 = vld [vmem:[%s0 + $0x180] sm:$0xff]
  %v81 = vld [vmem:[%s0 + $0x188] sm:$0xff]
  %v82 = vld [vmem:[%s0 + $0x190] sm:$0xff]
  %v83 = vld [vmem:[%s0 + $0x198] sm:$0xff]
  %v84 = vld [vmem:[%s0 + $0x1a0] sm:$0xff]
  %v85 = vld [vmem:[%s0 + $0x1a8] sm:$0xff]
  %v86 = vld [vmem:[%s0 + $0x1b0] sm:$0xff]
  %v87 = vld [vmem:[%s0 + $0x1b8] sm:$0xff]
  %v88 = vld [vmem:[%s0 + $0x1c0] sm:$0xff]
  %v89 = vld [vmem:[%s0 + $0x1c8] sm:$0xff]
  %v90 = vld [vmem:[%s0 + $0x1d0] sm:$0xff]
  %v91 = vld [vmem:[%s0 + $0x1d8] sm:$0xff]
  %v92 = vld [vmem:[%s0 + $0x1e0] sm:$0xff]
  %v93 = vld [vmem:[%s0 + $0x1e8] sm:$0xff]
  %v94 = vld [vmem:[%s0 + $0x1f0] sm:$0xff]
  %v95 = vld [vmem:[%s0 + $0x1f8] sm:$0xff]
  %v96 = vld [vmem:[%s0 + $0x200] sm:$0xff]
  %v97 = vld [vmem:[%s0 + $0x208] sm:$0xff]
  %v98 = vld [vmem:[%s0 + $0x210] sm:$0xff]
  %v99 = vld [vmem:[%s0 + $0x218] sm:$0xff]
  %v100 = vld [vmem:[%s0 + $0x220] sm:$0xff]
  %v101 = vld [vmem:[%s0 + $0x228] sm:$0xff]
  %v102 = vld [vmem:[%s0 + $0x230] sm:$0xff]
  %v103 = vld [vmem:[%s0 + $0x238] sm:$0xff]
  %v104 = vld [vmem:[%s1] sm:$0xff]
  %v105 = vld [vmem:[%s1 + $0x8] sm:$0xff]
  %v106 = vld [vmem:[%s1 + $0x10] sm:$0xff]
  %v107 = vld [vmem:[%s1 + $0x18] sm:$0xff]
  %v108 = vld [vmem:[%s1 + $0x20] sm:$0xff]
  %v109 = vld [vmem:[%s1 + $0x28] sm:$0xff]
  %v110 = vld [vmem:[%s1 + $0x30] sm:$0xff]
  %v111 = vld [vmem:[%s1 + $0x38] sm:$0xff]
  %v112 = vld [vmem:[%s1 + $0x40] sm:$0xff]
  %v113 = vld [vmem:[%s1 + $0x48] sm:$0xff]
  %v114 = vld [vmem:[%s1 + $0x50] sm:$0xff]
  %v115 = vld [vmem:[%s1 + $0x58] sm:$0xff]
  %v116 = vld [vmem:[%s1 + $0x60] sm:$0xff]
  %v117 = vld [vmem:[%s1 + $0x68] sm:$0xff]
  %v118 = vld [vmem:[%s1 + $0x70] sm:$0xff]
  %v119 = vld [vmem:[%s1 + $0x78] sm:$0xff]
  %v120 = vld [vmem:[%s1 + $0x80] sm:$0xff]
  %v121 = vld [vmem:[%s1 + $0x88] sm:$0xff]
  %vm122 = vcmask 130048
  %v124 = vsel %vm122, %v33, 0
  %v127 = vsel %vm122, %v35, 0
  %v130 = vsel %vm122, %v37, 0
  %v133 = vsel %vm122, %v39, 0
  %v136 = vsel %vm122, %v41, 0
  %v139 = vsel %vm122, %v43, 0
  %v142 = vsel %vm122, %v45, 0
  %v145 = vsel %vm122, %v47, 0
  %v148 = vsel %vm122, %v49, 0
  %v151 = vsel %vm122, %v51, 0
  %v154 = vsel %vm122, %v53, 0
  %v157 = vsel %vm122, %v55, 0
  %v160 = vsel %vm122, %v57, 0
  %v163 = vsel %vm122, %v59, 0
  %v166 = vsel %vm122, %v61, 0
  %v169 = vsel %vm122, %v63, 0
  %v172 = vsel %vm122, %v65, 0
  %v175 = vsel %vm122, %v67, 0
  %v178 = vsel %vm122, %v69, 0
  %v181 = vsel %vm122, %v71, 0
  %v184 = vsel %vm122, %v73, 0
  %v187 = vsel %vm122, %v75, 0
  %v190 = vsel %vm122, %v77, 0
  %v193 = vsel %vm122, %v79, 0
  %v196 = vsel %vm122, %v81, 0
  %v199 = vsel %vm122, %v83, 0
  %v202 = vsel %vm122, %v85, 0
  %v205 = vsel %vm122, %v87, 0
  %v208 = vsel %vm122, %v89, 0
  %v211 = vsel %vm122, %v91, 0
  %v214 = vsel %vm122, %v93, 0
  %v217 = vsel %vm122, %v95, 0
  %v220 = vsel %vm122, %v97, 0
  %v223 = vsel %vm122, %v99, 0
  %v226 = vsel %vm122, %v101, 0
  %v229 = vsel %vm122, %v103, 0
  %231 = vmatpush.msra.mxu0 %v119
  %232 = vmatpush.msra.mxu0 %v118
  %233 = vmatpush.msra.mxu0 %v117
  %234 = vmatpush.msra.mxu0 %v116
  %235 = vmatpush.msra.mxu0 %v115
  %236 = vmatpush.msra.mxu0 %v114
  %237 = vmatpush.msra.mxu0 %v113
  %238 = vmatpush.msra.mxu0 %v112
  %239 = vmatpush.msra.mxu0 %v111
  %240 = vmatpush.msra.mxu0 %v110
  %241 = vmatpush.msra.mxu0 %v109
  %242 = vmatpush.msra.mxu0 %v108
  %243 = vmatpush.msra.mxu0 %v107
  %244 = vmatpush.msra.mxu0 %v106
  %245 = vmatpush.msra.mxu0 %v105
  %246 = vmatpush.msra.mxu0 %v104
  %247 = vmatmul.f32.gmra.mxu0 %v32
  %v248 = vpop.f32.mrf.mxu0
  %v249 = vadd.f32 0.0, %v248
  %250 = vmatmul.f32.gmra.mxu0 %v34
  %v251 = vpop.f32.mrf.mxu0
  %v252 = vadd.f32 0.0, %v251
  %253 = vmatmul.f32.gmra.mxu0 %v36
  %v254 = vpop.f32.mrf.mxu0
  %v255 = vadd.f32 0.0, %v254
  %256 = vmatmul.f32.gmra.mxu0 %v38
  %v257 = vpop.f32.mrf.mxu0
  %v258 = vadd.f32 0.0, %v257
  %259 = vmatmul.f32.gmra.mxu0 %v40
  %v260 = vpop.f32.mrf.mxu0
  %v261 = vadd.f32 0.0, %v260
  %262 = vmatmul.f32.gmra.mxu0 %v42
  %v263 = vpop.f32.mrf.mxu0
  %v264 = vadd.f32 0.0, %v263
  %265 = vmatmul.f32.gmra.mxu0 %v44
  %v266 = vpop.f32.mrf.mxu0
  %v267 = vadd.f32 0.0, %v266
  %268 = vmatmul.f32.gmra.mxu0 %v46
  %v269 = vpop.f32.mrf.mxu0
  %v270 = vadd.f32 0.0, %v269
  %271 = vmatmul.f32.gmra.mxu0 %v48
  %v272 = vpop.f32.mrf.mxu0
  %v273 = vadd.f32 0.0, %v272
  %274 = vmatmul.f32.gmra.mxu0 %v50
  %v275 = vpop.f32.mrf.mxu0
  %v276 = vadd.f32 0.0, %v275
  %277 = vmatmul.f32.gmra.mxu0 %v52
  %v278 = vpop.f32.mrf.mxu0
  %v279 = vadd.f32 0.0, %v278
  %280 = vmatmul.f32.gmra.mxu0 %v54
  %v281 = vpop.f32.mrf.mxu0
  %v282 = vadd.f32 0.0, %v281
  %283 = vmatmul.f32.gmra.mxu0 %v56
  %v284 = vpop.f32.mrf.mxu0
  %v285 = vadd.f32 0.0, %v284
  %286 = vmatmul.f32.gmra.mxu0 %v58
  %v287 = vpop.f32.mrf.mxu0
  %v288 = vadd.f32 0.0, %v287
  %289 = vmatmul.f32.gmra.mxu0 %v60
  %v290 = vpop.f32.mrf.mxu0
  %v291 = vadd.f32 0.0, %v290
  %292 = vmatmul.f32.gmra.mxu0 %v62
  %v293 = vpop.f32.mrf.mxu0
  %v294 = vadd.f32 0.0, %v293
  %295 = vmatmul.f32.gmra.mxu0 %v64
  %v296 = vpop.f32.mrf.mxu0
  %v297 = vadd.f32 0.0, %v296
  %298 = vmatmul.f32.gmra.mxu0 %v66
  %v299 = vpop.f32.mrf.mxu0
  %v300 = vadd.f32 0.0, %v299
  %301 = vmatmul.f32.gmra.mxu0 %v68
  %v302 = vpop.f32.mrf.mxu0
  %v303 = vadd.f32 0.0, %v302
  %304 = vmatmul.f32.gmra.mxu0 %v70
  %v305 = vpop.f32.mrf.mxu0
  %v306 = vadd.f32 0.0, %v305
  %307 = vmatmul.f32.gmra.mxu0 %v72
  %v308 = vpop.f32.mrf.mxu0
  %v309 = vadd.f32 0.0, %v308
  %310 = vmatmul.f32.gmra.mxu0 %v74
  %v311 = vpop.f32.mrf.mxu0
  %v312 = vadd.f32 0.0, %v311
  %313 = vmatmul.f32.gmra.mxu0 %v76
  %v314 = vpop.f32.mrf.mxu0
  %v315 = vadd.f32 0.0, %v314
  %316 = vmatmul.f32.gmra.mxu0 %v78
  %v317 = vpop.f32.mrf.mxu0
  %v318 = vadd.f32 0.0, %v317
  %319 = vmatmul.f32.gmra.mxu0 %v80
  %v320 = vpop.f32.mrf.mxu0
  %v321 = vadd.f32 0.0, %v320
  %322 = vmatmul.f32.gmra.mxu0 %v82
  %v323 = vpop.f32.mrf.mxu0
  %v324 = vadd.f32 0.0, %v323
  %325 = vmatmul.f32.gmra.mxu0 %v84
  %v326 = vpop.f32.mrf.mxu0
  %v327 = vadd.f32 0.0, %v326
  %328 = vmatmul.f32.gmra.mxu0 %v86
  %v329 = vpop.f32.mrf.mxu0
  %v330 = vadd.f32 0.0, %v329
  %331 = vmatmul.f32.gmra.mxu0 %v88
  %v332 = vpop.f32.mrf.mxu0
  %v333 = vadd.f32 0.0, %v332
  %334 = vmatmul.f32.gmra.mxu0 %v90
  %v335 = vpop.f32.mrf.mxu0
  %v336 = vadd.f32 0.0, %v335
  %337 = vmatmul.f32.gmra.mxu0 %v92
  %v338 = vpop.f32.mrf.mxu0
  %v339 = vadd.f32 0.0, %v338
  %340 = vmatmul.f32.gmra.mxu0 %v94
  %v341 = vpop.f32.mrf.mxu0
  %v342 = vadd.f32 0.0, %v341
  %343 = vmatmul.f32.gmra.mxu0 %v96
  %v344 = vpop.f32.mrf.mxu0
  %v345 = vadd.f32 0.0, %v344
  %346 = vmatmul.f32.gmra.mxu0 %v98
  %v347 = vpop.f32.mrf.mxu0
  %v348 = vadd.f32 0.0, %v347
  %349 = vmatmul.f32.gmra.mxu0 %v100
  %v350 = vpop.f32.mrf.mxu0
  %v351 = vadd.f32 0.0, %v350
  %352 = vmatmul.f32.gmra.mxu0 %v102
  %v353 = vpop.f32.mrf.mxu0
  %v354 = vadd.f32 0.0, %v353
  %355 = vdwg.mxu0
  %356 = vmatpush.msra.mxu0 0.0
  %357 = vmatpush.msra.mxu0 0.0
  %358 = vmatpush.msra.mxu0 0.0
  %359 = vmatpush.msra.mxu0 0.0
  %360 = vmatpush.msra.mxu0 0.0
  %361 = vmatpush.msra.mxu0 0.0
  %362 = vmatpush.msra.mxu0 0.0
  %363 = vmatpush.msra.mxu0 0.0
  %364 = vmatpush.msra.mxu0 0.0
  %365 = vmatpush.msra.mxu0 0.0
  %366 = vmatpush.msra.mxu0 0.0
  %367 = vmatpush.msra.mxu0 0.0
  %368 = vmatpush.msra.mxu0 0.0
  %369 = vmatpush.msra.mxu0 0.0
  %370 = vmatpush.msra.mxu0 %v121
  %371 = vmatpush.msra.mxu0 %v120
  %372 = vmatmul.f32.gmra.mxu0 %v124
  %v373 = vpop.f32.mrf.mxu0
  %v374 = vadd.f32 %v249, %v373
  %375 = vmatmul.f32.gmra.mxu0 %v127
  %v376 = vpop.f32.mrf.mxu0
  %v377 = vadd.f32 %v252, %v376
  %378 = vmatmul.f32.gmra.mxu0 %v130
  %v379 = vpop.f32.mrf.mxu0
  %v380 = vadd.f32 %v255, %v379
  %381 = vmatmul.f32.gmra.mxu0 %v133
  %v382 = vpop.f32.mrf.mxu0
  %v383 = vadd.f32 %v258, %v382
  %384 = vmatmul.f32.gmra.mxu0 %v136
  %v385 = vpop.f32.mrf.mxu0
  %v386 = vadd.f32 %v261, %v385
  %387 = vmatmul.f32.gmra.mxu0 %v139
  %v388 = vpop.f32.mrf.mxu0
  %v389 = vadd.f32 %v264, %v388
  %390 = vmatmul.f32.gmra.mxu0 %v142
  %v391 = vpop.f32.mrf.mxu0
  %v392 = vadd.f32 %v267, %v391
  %393 = vmatmul.f32.gmra.mxu0 %v145
  %v394 = vpop.f32.mrf.mxu0
  %v395 = vadd.f32 %v270, %v394
  %396 = vmatmul.f32.gmra.mxu0 %v148
  %v397 = vpop.f32.mrf.mxu0
  %v398 = vadd.f32 %v273, %v397
  %399 = vmatmul.f32.gmra.mxu0 %v151
  %v400 = vpop.f32.mrf.mxu0
  %v401 = vadd.f32 %v276, %v400
  %402 = vmatmul.f32.gmra.mxu0 %v154
  %v403 = vpop.f32.mrf.mxu0
  %v404 = vadd.f32 %v279, %v403
  %405 = vmatmul.f32.gmra.mxu0 %v157
  %v406 = vpop.f32.mrf.mxu0
  %v407 = vadd.f32 %v282, %v406
  %408 = vmatmul.f32.gmra.mxu0 %v160
  %v409 = vpop.f32.mrf.mxu0
  %v410 = vadd.f32 %v285, %v409
  %411 = vmatmul.f32.gmra.mxu0 %v163
  %v412 = vpop.f32.mrf.mxu0
  %v413 = vadd.f32 %v288, %v412
  %414 = vmatmul.f32.gmra.mxu0 %v166
  %v415 = vpop.f32.mrf.mxu0
  %v416 = vadd.f32 %v291, %v415
  %417 = vmatmul.f32.gmra.mxu0 %v169
  %v418 = vpop.f32.mrf.mxu0
  %v419 = vadd.f32 %v294, %v418
  %420 = vmatmul.f32.gmra.mxu0 %v172
  %v421 = vpop.f32.mrf.mxu0
  %v422 = vadd.f32 %v297, %v421
  %423 = vmatmul.f32.gmra.mxu0 %v175
  %v424 = vpop.f32.mrf.mxu0
  %v425 = vadd.f32 %v300, %v424
  %426 = vmatmul.f32.gmra.mxu0 %v178
  %v427 = vpop.f32.mrf.mxu0
  %v428 = vadd.f32 %v303, %v427
  %429 = vmatmul.f32.gmra.mxu0 %v181
  %v430 = vpop.f32.mrf.mxu0
  %v431 = vadd.f32 %v306, %v430
  %432 = vmatmul.f32.gmra.mxu0 %v184
  %v433 = vpop.f32.mrf.mxu0
  %v434 = vadd.f32 %v309, %v433
  %435 = vmatmul.f32.gmra.mxu0 %v187
  %v436 = vpop.f32.mrf.mxu0
  %v437 = vadd.f32 %v312, %v436
  %438 = vmatmul.f32.gmra.mxu0 %v190
  %v439 = vpop.f32.mrf.mxu0
  %v440 = vadd.f32 %v315, %v439
  %441 = vmatmul.f32.gmra.mxu0 %v193
  %v442 = vpop.f32.mrf.mxu0
  %v443 = vadd.f32 %v318, %v442
  %444 = vmatmul.f32.gmra.mxu0 %v196
  %v445 = vpop.f32.mrf.mxu0
  %v446 = vadd.f32 %v321, %v445
  %447 = vmatmul.f32.gmra.mxu0 %v199
  %v448 = vpop.f32.mrf.mxu0
  %v449 = vadd.f32 %v324, %v448
  %450 = vmatmul.f32.gmra.mxu0 %v202
  %v451 = vpop.f32.mrf.mxu0
  %v452 = vadd.f32 %v327, %v451
  %453 = vmatmul.f32.gmra.mxu0 %v205
  %v454 = vpop.f32.mrf.mxu0
  %v455 = vadd.f32 %v330, %v454
  %456 = vmatmul.f32.gmra.mxu0 %v208
  %v457 = vpop.f32.mrf.mxu0
  %v458 = vadd.f32 %v333, %v457
  %459 = vmatmul.f32.gmra.mxu0 %v211
  %v460 = vpop.f32.mrf.mxu0
  %v461 = vadd.f32 %v336, %v460
  %462 = vmatmul.f32.gmra.mxu0 %v214
  %v463 = vpop.f32.mrf.mxu0
  %v464 = vadd.f32 %v339, %v463
  %465 = vmatmul.f32.gmra.mxu0 %v217
  %v466 = vpop.f32.mrf.mxu0
  %v467 = vadd.f32 %v342, %v466
  %468 = vmatmul.f32.gmra.mxu0 %v220
  %v469 = vpop.f32.mrf.mxu0
  %v470 = vadd.f32 %v345, %v469
  %471 = vmatmul.f32.gmra.mxu0 %v223
  %v472 = vpop.f32.mrf.mxu0
  %v473 = vadd.f32 %v348, %v472
  %474 = vmatmul.f32.gmra.mxu0 %v226
  %v475 = vpop.f32.mrf.mxu0
  %v476 = vadd.f32 %v351, %v475
  %477 = vmatmul.f32.gmra.mxu0 %v229
  %v478 = vpop.f32.mrf.mxu0
  %v479 = vadd.f32 %v354, %v478
  %480 = vdwg.mxu0
  %v481 = vmax.f32 %v374, %v401
  %v482 = vmax.f32 %v377, %v404
  %v483 = vmax.f32 %v380, %v407
  %v484 = vmax.f32 %v383, %v410
  %v485 = vmax.f32 %v386, %v413
  %v486 = vmax.f32 %v389, %v416
  %v487 = vmax.f32 %v392, %v419
  %v488 = vmax.f32 %v395, %v422
  %v489 = vmax.f32 %v398, %v425
  %v490 = vmax.f32 %v428, %v455
  %v491 = vmax.f32 %v431, %v458
  %v492 = vmax.f32 %v434, %v461
  %v493 = vmax.f32 %v437, %v464
  %v494 = vmax.f32 %v440, %v467
  %v495 = vmax.f32 %v443, %v470
  %v496 = vmax.f32 %v446, %v473
  %v497 = vmax.f32 %v449, %v476
  %v498 = vmax.f32 %v452, %v479
  %v499 = vmax.f32 %v481, %v490
  %v500 = vmax.f32 %v482, %v491
  %v501 = vmax.f32 %v483, %v492
  %v502 = vmax.f32 %v484, %v493
  %v503 = vmax.f32 %v485, %v494
  %v504 = vmax.f32 %v486, %v495
  %v505 = vmax.f32 %v487, %v496
  %v506 = vmax.f32 %v488, %v497
  %v507 = vmax.f32 %v489, %v498
  %v508 = vld [vmem:[%s4] sm:$0x1]
  %v509 = vperm.slane %v508, 0
  %v510 = vadd.f32 %v499, %v509
  %v511 = vadd.f32 %v500, %v509
  %v512 = vadd.f32 %v501, %v509
  %v513 = vadd.f32 %v502, %v509
  %v514 = vadd.f32 %v503, %v509
  %v515 = vadd.f32 %v504, %v509
  %v516 = vadd.f32 %v505, %v509
  %v517 = vadd.f32 %v506, %v509
  %v518 = vadd.f32 %v507, %v509
  %v519 = vmax.f32 %v510, 0.0
  %v520 = vmax.f32 %v511, 0.0
  %v521 = vmax.f32 %v512, 0.0
  %v522 = vmax.f32 %v513, 0.0
  %v523 = vmax.f32 %v514, 0.0
  %v524 = vmax.f32 %v515, 0.0
  %v525 = vmax.f32 %v516, 0.0
  %v526 = vmax.f32 %v517, 0.0
  %v527 = vmax.f32 %v518, 0.0
  %529 = vrot.lane.b32.xlu0 %v520, 32
  %v530 = vpop.permute.xlu0 %529
  %533 = vrot.lane.b32.xlu0 %v521, 64
  %v534 = vpop.permute.xlu0 %533
  %537 = vrot.lane.b32.xlu0 %v522, 96
  %v538 = vpop.permute.xlu0 %537
  %541 = vrot.lane.b32.xlu0 %v524, 32
  %v542 = vpop.permute.xlu0 %541
  %545 = vrot.lane.b32.xlu0 %v525, 64
  %v546 = vpop.permute.xlu0 %545
  %549 = vrot.lane.b32.xlu0 %v526, 96
  %v550 = vpop.permute.xlu0 %549
  %vm552 = vcmask 261120
  %v553 = vsel %vm552, %v519, %v530
  %vm554 = vcmask 523264
  %v555 = vsel %vm554, %v553, %v534
  %vm556 = vcmask 785408
  %v557 = vsel %vm556, %v555, %v538
  %v558 = vsel %vm552, %v523, %v542
  %v559 = vsel %vm554, %v558, %v546
  %v560 = vsel %vm556, %v559, %v550
  %v561 = vld [vmem:[%s2] sm:$0xff]
  %v562 = vld [vmem:[%s2 + $0x8] sm:$0xff]
  %v563 = vld [vmem:[%s2 + $0x10] sm:$0xff]
  %v564 = vld [vmem:[%s2 + $0x18] sm:$0xff]
  %v565 = vld [vmem:[%s2 + $0x20] sm:$0xff]
  %v566 = vld [vmem:[%s2 + $0x28] sm:$0xff]
  %v567 = vld [vmem:[%s2 + $0x30] sm:$0xff]
  %v568 = vld [vmem:[%s2 + $0x38] sm:$0xff]
  %v569 = vld [vmem:[%s2 + $0x40] sm:$0xff]
  %v570 = vld [vmem:[%s2 + $0x48] sm:$0xff]
  %v571 = vld [vmem:[%s2 + $0x50] sm:$0xff]
  %v572 = vld [vmem:[%s2 + $0x58] sm:$0xff]
  %v573 = vld [vmem:[%s2 + $0x60] sm:$0xff]
  %v574 = vld [vmem:[%s2 + $0x68] sm:$0xff]
  %v575 = vld [vmem:[%s2 + $0x70] sm:$0xff]
  %v576 = vld [vmem:[%s2 + $0x78] sm:$0xff]
  %v577 = vld [vmem:[%s2 + $0x80] sm:$0xff]
  %v578 = vld [vmem:[%s2 + $0x88] sm:$0xff]
  %v579 = vld [vmem:[%s2 + $0x90] sm:$0xff]
  %v580 = vld [vmem:[%s2 + $0x98] sm:$0xff]
  %v581 = vld [vmem:[%s2 + $0xa0] sm:$0xff]
  %v582 = vld [vmem:[%s2 + $0xa8] sm:$0xff]
  %v583 = vld [vmem:[%s2 + $0xb0] sm:$0xff]
  %v584 = vld [vmem:[%s2 + $0xb8] sm:$0xff]
  %v585 = vld [vmem:[%s2 + $0xc0] sm:$0xff]
  %v586 = vld [vmem:[%s2 + $0xc8] sm:$0xff]
  %v587 = vld [vmem:[%s2 + $0xd0] sm:$0xff]
  %v588 = vld [vmem:[%s2 + $0xd8] sm:$0xff]
  %v589 = vld [vmem:[%s2 + $0xe0] sm:$0xff]
  %v590 = vld [vmem:[%s2 + $0xe8] sm:$0xff]
  %v591 = vld [vmem:[%s2 + $0xf0] sm:$0xff]
  %v592 = vld [vmem:[%s2 + $0xf8] sm:$0xff]
  %v593 = vld [vmem:[%s2 + $0x100] sm:$0xff]
  %v594 = vld [vmem:[%s2 + $0x108] sm:$0xff]
  %v595 = vld [vmem:[%s2 + $0x110] sm:$0xff]
  %v596 = vld [vmem:[%s2 + $0x118] sm:$0xff]
  %v598 = vsel %vm552, %v527, 0
  %600 = vmatpush.msra.mxu0 %v576
  %601 = vmatpush.msra.mxu0 %v575
  %602 = vmatpush.msra.mxu0 %v574
  %603 = vmatpush.msra.mxu0 %v573
  %604 = vmatpush.msra.mxu0 %v572
  %605 = vmatpush.msra.mxu0 %v571
  %606 = vmatpush.msra.mxu0 %v570
  %607 = vmatpush.msra.mxu0 %v569
  %608 = vmatpush.msra.mxu0 %v568
  %609 = vmatpush.msra.mxu0 %v567
  %610 = vmatpush.msra.mxu0 %v566
  %611 = vmatpush.msra.mxu0 %v565
  %612 = vmatpush.msra.mxu0 %v564
  %613 = vmatpush.msra.mxu0 %v563
  %614 = vmatpush.msra.mxu0 %v562
  %615 = vmatpush.msra.mxu0 %v561
  %616 = vmatmul.f32.gmra.mxu0 %v557
  %v617 = vpop.f32.mrf.mxu0
  %v618 = vadd.f32 0.0, %v617
  %619 = vdwg.mxu0
  %620 = vmatpush.msra.mxu0 %v592
  %621 = vmatpush.msra.mxu0 %v591
  %622 = vmatpush.msra.mxu0 %v590
  %623 = vmatpush.msra.mxu0 %v589
  %624 = vmatpush.msra.mxu0 %v588
  %625 = vmatpush.msra.mxu0 %v587
  %626 = vmatpush.msra.mxu0 %v586
  %627 = vmatpush.msra.mxu0 %v585
  %628 = vmatpush.msra.mxu0 %v584
  %629 = vmatpush.msra.mxu0 %v583
  %630 = vmatpush.msra.mxu0 %v582
  %631 = vmatpush.msra.mxu0 %v581
  %632 = vmatpush.msra.mxu0 %v580
  %633 = vmatpush.msra.mxu0 %v579
  %634 = vmatpush.msra.mxu0 %v578
  %635 = vmatpush.msra.mxu0 %v577
  %636 = vmatmul.f32.gmra.mxu0 %v560
  %v637 = vpop.f32.mrf.mxu0
  %v638 = vadd.f32 %v618, %v637
  %639 = vdwg.mxu0
  %640 = vmatpush.msra.mxu0 0.0
  %641 = vmatpush.msra.mxu0 0.0
  %642 = vmatpush.msra.mxu0 0.0
  %643 = vmatpush.msra.mxu0 0.0
  %644 = vmatpush.msra.mxu0 0.0
  %645 = vmatpush.msra.mxu0 0.0
  %646 = vmatpush.msra.mxu0 0.0
  %647 = vmatpush.msra.mxu0 0.0
  %648 = vmatpush.msra.mxu0 0.0
  %649 = vmatpush.msra.mxu0 0.0
  %650 = vmatpush.msra.mxu0 0.0
  %651 = vmatpush.msra.mxu0 0.0
  %652 = vmatpush.msra.mxu0 %v596
  %653 = vmatpush.msra.mxu0 %v595
  %654 = vmatpush.msra.mxu0 %v594
  %655 = vmatpush.msra.mxu0 %v593
  %656 = vmatmul.f32.gmra.mxu0 %v598
  %v657 = vpop.f32.mrf.mxu0
  %v658 = vadd.f32 %v638, %v657
  %659 = vdwg.mxu0
  %661 = vrot.lane.b32.xlu0 %v658, 96
  %v662 = vpop.permute.xlu0 %661
  %v664 = vmax.f32 %v658, %v662
  %666 = vrot.lane.b32.xlu0 %v664, 64
  %v667 = vpop.permute.xlu0 %666
  %v669 = vmax.f32 %v664, %v667
  %v670 = vld [vmem:[%s4 + $0x1] sm:$0x1]
  %v671 = vperm.slane %v670, 0
  %v672 = vadd.f32 %v669, %v671
  %v673 = vmax.f32 %v672, 0.0
  %v674 = vld [vmem:[%s3] sm:$0xff]
  %v675 = vld [vmem:[%s3 + $0x8] sm:$0xff]
  %v676 = vld [vmem:[%s3 + $0x10] sm:$0xff]
  %v677 = vld [vmem:[%s3 + $0x18] sm:$0xff]
  %v678 = vld [vmem:[%s4 + $0x2] sm:$0x1]
  %v679 = vperm.slane %v678, 0
  %v681 = vsel %vm552, %v673, 0
  %683 = vmatpush.msra.mxu0 0.0
  %684 = vmatpush.msra.mxu0 0.0
  %685 = vmatpush.msra.mxu0 0.0
  %686 = vmatpush.msra.mxu0 0.0
  %687 = vmatpush.msra.mxu0 0.0
  %688 = vmatpush.msra.mxu0 0.0
  %689 = vmatpush.msra.mxu0 0.0
  %690 = vmatpush.msra.mxu0 0.0
  %691 = vmatpush.msra.mxu0 0.0
  %692 = vmatpush.msra.mxu0 0.0
  %693 = vmatpush.msra.mxu0 0.0
  %694 = vmatpush.msra.mxu0 0.0
  %695 = vmatpush.msra.mxu0 %v677
  %696 = vmatpush.msra.mxu0 %v676
  %697 = vmatpush.msra.mxu0 %v675
  %698 = vmatpush.msra.mxu0 %v674
  %699 = vmatmul.f32.gmra.mxu0 %v681
  %v700 = vpop.f32.mrf.mxu0
  %v701 = vadd.f32 %v679, %v700
  %702 = vdwg.mxu0
  %v703 = vsel %vm552, %v701, 0.0
  %704 = vadd.xlane.f32.xlu0 %v703
  %v705 = vpop.xlane.xlu0 %704
  %v706 = vrcp.pop 32.0
  %v707 = vmul.f32 32.0, %v706
  %v708 = vsub.f32 1.0, %v707
  %v709 = vmul.f32 %v706, %v708
  %v710 = vadd.f32 %v706, %v709
  %vm711 = vweird.f32 %v706
  %v712 = vsel %vm711, %v706, %v710
  %v713 = vmul.f32 %v705, %v712
  %v714 = vsub.f32 %v701, %v713
  %v715 = vmul.f32 %v714, %v714
  %v716 = vsel %vm552, %v715, 0.0
  %717 = vadd.xlane.f32.xlu0 %v716
  %v718 = vpop.xlane.xlu0 %717
  %v719 = vmul.f32 %v718, %v712
  %v720 = vadd.f32 %v719, 1e-05
  %v721 = vrsqrt.pop %v720
  %v722 = vmul.f32 %v721, %v720
  %v723 = vmul.f32 %v722, %v721
  %v724 = vmul.f32 0.5, %v723
  %v725 = vsub.f32 1.5, %v724
  %v726 = vmul.f32 %v721, %v725
  %vm727 = vweird.f32 %v720
  %vm728 = vweird.f32 %v721
  %vm729 = vmor %vm727, %vm728
  %v730 = vsel %vm729, %v721, %v726
  %v731 = vmul.f32 %v714, %v730
  %v732 = vld [vmem:[%s4 + $0x3] sm:$0x1]
  %v733 = vperm.slane %v732, 0
  %v734 = vmul.f32 %v731, %v733
  %v735 = vld [vmem:[%s4 + $0x4] sm:$0x1]
  %v736 = vperm.slane %v735, 0
  %v737 = vadd.f32 %v734, %v736
  %v738 = vld [vmem:[%s5] sm:$0xff]
  %v739 = vld [vmem:[%s5 + $0x8] sm:$0xff]
  %v740 = vld [vmem:[%s5 + $0x10] sm:$0xff]
  %v741 = vld [vmem:[%s5 + $0x18] sm:$0xff]
  %v742 = vld [vmem:[%s5 + $0x40] sm:$0x1]
  %v743 = vperm.slane %v742, 0
  %v745 = vsel %vm552, %v737, 0
  %747 = vmatpush.msra.mxu0 0.0
  %748 = vmatpush.msra.mxu0 0.0
  %749 = vmatpush.msra.mxu0 0.0
  %750 = vmatpush.msra.mxu0 0.0
  %751 = vmatpush.msra.mxu0 0.0
  %752 = vmatpush.msra.mxu0 0.0
  %753 = vmatpush.msra.mxu0 0.0
  %754 = vmatpush.msra.mxu0 0.0
  %755 = vmatpush.msra.mxu0 0.0
  %756 = vmatpush.msra.mxu0 0.0
  %757 = vmatpush.msra.mxu0 0.0
  %758 = vmatpush.msra.mxu0 0.0
  %759 = vmatpush.msra.mxu0 %v741
  %760 = vmatpush.msra.mxu0 %v740
  %761 = vmatpush.msra.mxu0 %v739
  %762 = vmatpush.msra.mxu0 %v738
  %763 = vmatmul.f32.gmra.mxu0 %v745
  %v764 = vpop.f32.mrf.mxu0
  %v765 = vadd.f32 %v743, %v764
  %766 = vdwg.mxu0
  %v767 = vld [vmem:[%s5 + $0x20] sm:$0xff]
  %v768 = vld [vmem:[%s5 + $0x28] sm:$0xff]
  %v769 = vld [vmem:[%s5 + $0x30] sm:$0xff]
  %v770 = vld [vmem:[%s5 + $0x38] sm:$0xff]
  %v771 = vld [vmem:[%s7] sm:$0x3]
  %v772 = vld [vmem:[%s8] sm:$0x3]
  %v774 = vsel %vm552, %v771, 0
  %776 = vmatpush.msra.mxu0 0.0
  %777 = vmatpush.msra.mxu0 0.0
  %778 = vmatpush.msra.mxu0 0.0
  %779 = vmatpush.msra.mxu0 0.0
  %780 = vmatpush.msra.mxu0 0.0
  %781 = vmatpush.msra.mxu0 0.0
  %782 = vmatpush.msra.mxu0 0.0
  %783 = vmatpush.msra.mxu0 0.0
  %784 = vmatpush.msra.mxu0 0.0
  %785 = vmatpush.msra.mxu0 0.0
  %786 = vmatpush.msra.mxu0 0.0
  %787 = vmatpush.msra.mxu0 0.0
  %788 = vmatpush.msra.mxu0 %v770
  %789 = vmatpush.msra.mxu0 %v769
  %790 = vmatpush.msra.mxu0 %v768
  %791 = vmatpush.msra.mxu0 %v767
  %792 = vmatmul.f32.gmra.mxu0 %v774
  %v793 = vpop.f32.mrf.mxu0
  %v794 = vadd.f32 0.0, %v793
  %795 = vdwg.mxu0
  %v796 = vadd.f32 %v765, %v794
  %v797 = vxor.u32 %v796, 2147483648
  %v798 = vmul.f32 %v797, 1.442695
  %v799 = vpow.pop %v798
  %v800 = vadd.f32 %v799, 1.0
  %v801 = vrcp.pop %v800
  %v802 = vmul.f32 %v800, %v801
  %v803 = vsub.f32 1.0, %v802
  %v804 = vmul.f32 %v801, %v803
  %v805 = vadd.f32 %v801, %v804
  %vm806 = vweird.f32 %v800
  %vm807 = vweird.f32 %v801
  %vm808 = vmor %vm806, %vm807
  %v809 = vsel %vm808, %v801, %v805
  %v810 = vand.u32 2147483647, %v800
  %vm811 = vcmp.eq.f32.partialorder %v810, 8.507059e+37
  %v812 = vand.u32 %v800, 2147483648
  %v813 = vor.u32 1.1754944e-38, %v812
  %v814 = vsel %vm811, %v813, %v809
  %v815 = vmul.f32 1.0, %v814
  %v816 = vtanh.pop %v796
  %818 = vrot.lane.b32.xlu0 %v772, 32
  %v819 = vpop.permute.xlu0 %818
  %v821 = vmul.f32 %v815, %v819
  %823 = vrot.lane.b32.xlu0 %v816, 64
  %v824 = vpop.permute.xlu0 %823
  %v826 = vmul.f32 %v815, %v824
  %828 = vrot.lane.b32.xlu0 %v826, 32
  %v829 = vpop.permute.xlu0 %828
  %v831 = vadd.f32 %v821, %v829
  %v832 = vtanh.pop %v831
  %834 = vrot.lane.b32.xlu0 %v832, 64
  %v835 = vpop.permute.xlu0 %834
  %v837 = vmul.f32 %v815, %v835
  %839 = vrot.lane.b32.xlu0 %v837, 32
  %v840 = vpop.permute.xlu0 %839
  %v841 = vsel %vm552, %v840, 0
  %843 = vmatpush.msra.mxu0 0.0
  %844 = vmatpush.msra.mxu0 0.0
  %845 = vmatpush.msra.mxu0 0.0
  %846 = vmatpush.msra.mxu0 0.0
  %847 = vmatpush.msra.mxu0 0.0
  %848 = vmatpush.msra.mxu0 0.0
  %849 = vmatpush.msra.mxu0 0.0
  %850 = vmatpush.msra.mxu0 0.0
  %851 = vmatpush.msra.mxu0 0.0
  %852 = vmatpush.msra.mxu0 0.0
  %853 = vmatpush.msra.mxu0 0.0
  %854 = vmatpush.msra.mxu0 0.0
  %855 = vmatpush.msra.mxu0 %v770
  %856 = vmatpush.msra.mxu0 %v769
  %857 = vmatpush.msra.mxu0 %v768
  %858 = vmatpush.msra.mxu0 %v767
  %859 = vmatmul.f32.gmra.mxu0 %v841
  %v860 = vpop.f32.mrf.mxu0
  %v861 = vadd.f32 0.0, %v860
  %862 = vdwg.mxu0
  %v864 = vrot.slane %v861, 6
  %v866 = vadd.f32 %v765, %v864
  %v867 = vxor.u32 %v866, 2147483648
  %v868 = vmul.f32 %v867, 1.442695
  %v869 = vpow.pop %v868
  %v870 = vadd.f32 %v869, 1.0
  %v871 = vrcp.pop %v870
  %v872 = vmul.f32 %v870, %v871
  %v873 = vsub.f32 1.0, %v872
  %v874 = vmul.f32 %v871, %v873
  %v875 = vadd.f32 %v871, %v874
  %vm876 = vweird.f32 %v870
  %vm877 = vweird.f32 %v871
  %vm878 = vmor %vm876, %vm877
  %v879 = vsel %vm878, %v871, %v875
  %v880 = vand.u32 2147483647, %v870
  %vm881 = vcmp.eq.f32.partialorder %v880, 8.507059e+37
  %v882 = vand.u32 %v870, 2147483648
  %v883 = vor.u32 1.1754944e-38, %v882
  %v884 = vsel %vm881, %v883, %v879
  %v885 = vmul.f32 1.0, %v884
  %v886 = vtanh.pop %v866
  %v888 = vrot.slane %v831, 6
  %v890 = vmul.f32 %v885, %v888
  %892 = vrot.lane.b32.xlu0 %v886, 64
  %v893 = vpop.permute.xlu0 %892
  %v895 = vmul.f32 %v885, %v893
  %897 = vrot.lane.b32.xlu0 %v895, 32
  %v898 = vpop.permute.xlu0 %897
  %v900 = vadd.f32 %v890, %v898
  %v901 = vtanh.pop %v900
  %903 = vrot.lane.b32.xlu0 %v901, 64
  %v904 = vpop.permute.xlu0 %903
  %v906 = vmul.f32 %v885, %v904
  %v908 = vrot.slane %v906, 2
  %909 = vrot.lane.b32.xlu0 %v908, 32
  %v910 = vpop.permute.xlu0 %909
  %v911 = vsel %vm552, %v910, 0
  %913 = vmatpush.msra.mxu0 0.0
  %914 = vmatpush.msra.mxu0 0.0
  %915 = vmatpush.msra.mxu0 0.0
  %916 = vmatpush.msra.mxu0 0.0
  %917 = vmatpush.msra.mxu0 0.0
  %918 = vmatpush.msra.mxu0 0.0
  %919 = vmatpush.msra.mxu0 0.0
  %920 = vmatpush.msra.mxu0 0.0
  %921 = vmatpush.msra.mxu0 0.0
  %922 = vmatpush.msra.mxu0 0.0
  %923 = vmatpush.msra.mxu0 0.0
  %924 = vmatpush.msra.mxu0 0.0
  %925 = vmatpush.msra.mxu0 %v770
  %926 = vmatpush.msra.mxu0 %v769
  %927 = vmatpush.msra.mxu0 %v768
  %928 = vmatpush.msra.mxu0 %v767
  %929 = vmatmul.f32.gmra.mxu0 %v911
  %v930 = vpop.f32.mrf.mxu0
  %v931 = vadd.f32 0.0, %v930
  %932 = vdwg.mxu0
  %v934 = vrot.slane %v931, 4
  %v936 = vadd.f32 %v765, %v934
  %v937 = vxor.u32 %v936, 2147483648
  %v938 = vmul.f32 %v937, 1.442695
  %v939 = vpow.pop %v938
  %v940 = vadd.f32 %v939, 1.0
  %v941 = vrcp.pop %v940
  %v942 = vmul.f32 %v940, %v941
  %v943 = vsub.f32 1.0, %v942
  %v944 = vmul.f32 %v941, %v943
  %v945 = vadd.f32 %v941, %v944
  %vm946 = vweird.f32 %v940
  %vm947 = vweird.f32 %v941
  %vm948 = vmor %vm946, %vm947
  %v949 = vsel %vm948, %v941, %v945
  %v950 = vand.u32 2147483647, %v940
  %vm951 = vcmp.eq.f32.partialorder %v950, 8.507059e+37
  %v952 = vand.u32 %v940, 2147483648
  %v953 = vor.u32 1.1754944e-38, %v952
  %v954 = vsel %vm951, %v953, %v949
  %v955 = vmul.f32 1.0, %v954
  %v956 = vtanh.pop %v936
  %v958 = vrot.slane %v900, 6
  %v960 = vmul.f32 %v955, %v958
  %962 = vrot.lane.b32.xlu0 %v956, 64
  %v963 = vpop.permute.xlu0 %962
  %v965 = vmul.f32 %v955, %v963
  %967 = vrot.lane.b32.xlu0 %v965, 32
  %v968 = vpop.permute.xlu0 %967
  %v970 = vadd.f32 %v960, %v968
  %v971 = vtanh.pop %v970
  %973 = vrot.lane.b32.xlu0 %v971, 64
  %v974 = vpop.permute.xlu0 %973
  %v976 = vmul.f32 %v955, %v974
  %v978 = vrot.slane %v976, 4
  %979 = vrot.lane.b32.xlu0 %v978, 32
  %v980 = vpop.permute.xlu0 %979
  %v981 = vsel %vm552, %v980, 0
  %983 = vmatpush.msra.mxu0 0.0
  %984 = vmatpush.msra.mxu0 0.0
  %985 = vmatpush.msra.mxu0 0.0
  %986 = vmatpush.msra.mxu0 0.0
  %987 = vmatpush.msra.mxu0 0.0
  %988 = vmatpush.msra.mxu0 0.0
  %989 = vmatpush.msra.mxu0 0.0
  %990 = vmatpush.msra.mxu0 0.0
  %991 = vmatpush.msra.mxu0 0.0
  %992 = vmatpush.msra.mxu0 0.0
  %993 = vmatpush.msra.mxu0 0.0
  %994 = vmatpush.msra.mxu0 0.0
  %995 = vmatpush.msra.mxu0 %v770
  %996 = vmatpush.msra.mxu0 %v769
  %997 = vmatpush.msra.mxu0 %v768
  %998 = vmatpush.msra.mxu0 %v767
  %999 = vmatmul.f32.gmra.mxu0 %v981
  %v1000 = vpop.f32.mrf.mxu0
  %v1001 = vadd.f32 0.0, %v1000
  %1002 = vdwg.mxu0
  %v1004 = vrot.slane %v1001, 2
  %v1006 = vadd.f32 %v765, %v1004
  %v1007 = vxor.u32 %v1006, 2147483648
  %v1008 = vmul.f32 %v1007, 1.442695
  %v1009 = vpow.pop %v1008
  %v1010 = vadd.f32 %v1009, 1.0
  %v1011 = vrcp.pop %v1010
  %v1012 = vmul.f32 %v1010, %v1011
  %v1013 = vsub.f32 1.0, %v1012
  %v1014 = vmul.f32 %v1011, %v1013
  %v1015 = vadd.f32 %v1011, %v1014
  %vm1016 = vweird.f32 %v1010
  %vm1017 = vweird.f32 %v1011
  %vm1018 = vmor %vm1016, %vm1017
  %v1019 = vsel %vm1018, %v1011, %v1015
  %v1020 = vand.u32 2147483647, %v1010
  %vm1021 = vcmp.eq.f32.partialorder %v1020, 8.507059e+37
  %v1022 = vand.u32 %v1010, 2147483648
  %v1023 = vor.u32 1.1754944e-38, %v1022
  %v1024 = vsel %vm1021, %v1023, %v1019
  %v1025 = vmul.f32 1.0, %v1024
  %v1026 = vtanh.pop %v1006
  %v1028 = vrot.slane %v970, 6
  %v1030 = vmul.f32 %v1025, %v1028
  %1032 = vrot.lane.b32.xlu0 %v1026, 64
  %v1033 = vpop.permute.xlu0 %1032
  %v1035 = vmul.f32 %v1025, %v1033
  %1037 = vrot.lane.b32.xlu0 %v1035, 32
  %v1038 = vpop.permute.xlu0 %1037
  %v1040 = vadd.f32 %v1030, %v1038
  %v1041 = vtanh.pop %v1040
  %1043 = vrot.lane.b32.xlu0 %v1041, 64
  %v1044 = vpop.permute.xlu0 %1043
  %v1046 = vmul.f32 %v1025, %v1044
  %v1047 = vld [vmem:[%s6] sm:$0xff]
  %v1048 = vld [vmem:[%s6 + $0x8] sm:$0xff]
  %v1049 = vld [vmem:[%s6 + $0x10] sm:$0xff]
  %v1050 = vld [vmem:[%s6 + $0x18] sm:$0xff]
  %v1051 = vld [vmem:[%s6 + $0x20] sm:$0x1]
  %v1052 = vperm.slane %v1051, 0
  %v1054 = vrot.slane %v1046, 6
  %1055 = vrot.lane.b32.xlu0 %v1054, 32
  %v1056 = vpop.permute.xlu0 %1055
  %v1057 = vsel %vm552, %v1056, 0
  %1059 = vmatpush.msra.mxu0 0.0
  %1060 = vmatpush.msra.mxu0 0.0
  %1061 = vmatpush.msra.mxu0 0.0
  %1062 = vmatpush.msra.mxu0 0.0
  %1063 = vmatpush.msra.mxu0 0.0
  %1064 = vmatpush.msra.mxu0 0.0
  %1065 = vmatpush.msra.mxu0 0.0
  %1066 = vmatpush.msra.mxu0 0.0
  %1067 = vmatpush.msra.mxu0 0.0
  %1068 = vmatpush.msra.mxu0 0.0
  %1069 = vmatpush.msra.mxu0 0.0
  %1070 = vmatpush.msra.mxu0 0.0
  %1071 = vmatpush.msra.mxu0 %v1050
  %1072 = vmatpush.msra.mxu0 %v1049
  %1073 = vmatpush.msra.mxu0 %v1048
  %1074 = vmatpush.msra.mxu0 %v1047
  %1075 = vmatmul.f32.gmra.mxu0 %v1057
  %v1076 = vpop.f32.mrf.mxu0
  %v1077 = vadd.f32 %v1052, %v1076
  %1078 = vdwg.mxu0
  %v1079 = vlaneseq
  %v1080 = vand.u32 %v1079, 127
  %vm1081 = vcmp.eq.s32.totalorder %v1080, 0
  %v1082 = vsel %vm1081, 0.25, 1.0
  %v1083 = vmax.f32 %v1077, -2.0
  %1085 = vrot.lane.b32.xlu0 %v1083, 110
  %v1086 = vpop.permute.xlu0 %1085
  %v1088 = vmin.f32 %v1082, %v1086
  %v1089 = vmul.f32 %v1088, 1.442695
  %v1090 = vpow.pop %v1089
  %1092 = vrot.lane.b32.xlu0 %v1090, 18
  %v1093 = vpop.permute.xlu0 %1092
  %1095 = vrot.lane.b32.xlu0 %v1054, 52
  %v1096 = vpop.permute.xlu0 %1095
  %v1099 = vrot.slane %v1040, 6
  %1100 = vrot.lane.b32.xlu0 %v1099, 20
  %v1101 = vpop.permute.xlu0 %1100
  %vm1103 = vcmask 146432
  %v1104 = vsel %vm1103, %v1077, %v1093
  %vm1105 = vcmask 162816
  %v1106 = vsel %vm1105, %v1104, %v1096
  %vm1107 = vcmask 424960
  %v1108 = vsel %vm1107, %v1106, %v1101
  %vm1109 = vcmask 687104
  %v1110 = vsel %vm1109, %v1108, 0.0
  %1111 = vst [vmem:[%s9] sm:$0x3] %v1110
  // Predicated region
  $region38: #{actor_forward.3} parent=0 // pred_check
    _
  $region39: #{actor_forward.3} parent=0 // pred_check_branch
    %1113 = sbr.rel (0) target = $region41
  $region40: #{actor_forward.3} parent=0 // pred_region
    _
  $region41: #{actor_forward.3} parent=0 // pred_fallthru
    _
  // Predicated region
  $region42: #{actor_forward.3} parent=0 // pred_check
    _
  $region43: #{actor_forward.3} parent=0 // pred_check_branch
    %1115 = sbr.rel (0) target = $region45
  $region44: #{actor_forward.3} parent=0 // pred_region
    _
  $region45: #{actor_forward.3} parent=0 // pred_fallthru
    _

</llo_original>
